<compile_context>
chip_gen: v7x
topology: tpu7x:2x2x1
jax: 0.10.0
libtpu: 0.0.40
codegen_flags: <defaults>
</compile_context>

<pallas_src>
import numpy as np

import jax
import jax.numpy as jnp
from jax import lax
from jax.experimental import pallas as pl
from jax.experimental.pallas import tpu as pltpu

C_PAD = 128  # lane-dense channel count for all intermediates and the output


def _make_kernel(hout, wout, b_blk):
    m = hout * wout
    rows = b_blk * m
    wlog2 = int(np.log2(wout))

    def kernel(p1_ref, w1_ref, b1_ref, w2_ref, b2_ref, w3_ref, b3_ref, o_ref):
        # ---- conv1 + ReLU: (rows, 16) @ (16, 128) --------------------------
        a = jnp.dot(p1_ref[...], w1_ref[...],
                    preferred_element_type=jnp.float32)
        a = jnp.maximum(a + b1_ref[...], 0.0)                  # (rows, 128) f32

        # ---- per-row spatial indices (pure bitwise ops; m, wout are pow2) --
        r = lax.broadcasted_iota(jnp.int32, (rows, C_PAD), 0)
        rm = jnp.bitwise_and(r, m - 1)            # row index within its image
        hh = jnp.right_shift(rm, wlog2)           # output row (0..hout-1)
        ww = jnp.bitwise_and(rm, wout - 1)        # output col (0..wout-1)
        not_top = hh >= 1
        not_bot = hh < (hout - 1)
        not_left = ww >= 1
        not_right = ww < (wout - 1)

        def tap_mask(dh, dw):
            mk = None
            if dh == -1:
                mk = not_top
            elif dh == 1:
                mk = not_bot
            if dw == -1:
                mk = not_left if mk is None else jnp.logical_and(mk, not_left)
            elif dw == 1:
                mk = not_right if mk is None else jnp.logical_and(mk, not_right)
            return mk

        def conv3x3_relu(act, w_ref, b_ref):
            # Implicit GEMM over the 9 taps: the "same"-padded shifted windows
            # come from XLU sublane rolls + boundary selects (no im2col, no
            # shift-matrix matmuls).  The masks also kill any leakage across
            # image boundaries inside the flattened batch block.
            acc = None
            for k in range(9):
                dh, dw = k // 3 - 1, k % 3 - 1
                s = dh * wout + dw                # win[r] must read act[r + s]
                win = act if s == 0 else pltpu.roll(act, (-s) % rows, 0)
                mk = tap_mask(dh, dw)
                if mk is not None:
                    win = jnp.where(mk, win, 0.0)
                t = jnp.dot(win.astype(jnp.bfloat16), w_ref[k],
                            preferred_element_type=jnp.float32)
                acc = t if acc is None else acc + t
            return jnp.maximum(acc + b_ref[...], 0.0)

        a = conv3x3_relu(a, w2_ref, b2_ref)       # conv2 + ReLU
        a = conv3x3_relu(a, w3_ref, b3_ref)       # conv3 + ReLU
        o_ref[...] = a.astype(o_ref.dtype)

    return kernel


def _conv1_taps(x, hout, wout):
    """x: (N, H, W) single-channel input -> (N, hout*wout, 16) bf16 taps
    (K = 9 taps zero-padded to 16).  Tiny; done once in XLA."""
    n = x.shape[0]
    xp = jnp.pad(x, ((0, 0), (1, 1), (1, 1)))
    taps = []
    for i in range(3):
        for j in range(3):
            taps.append(
                xp[:, i:i + 2 * hout:2, j:j + 2 * wout:2].reshape(n, hout * wout))
    p = jnp.stack(taps, axis=-1)                           # (N, m, 9)
    p = jnp.pad(p, ((0, 0), (0, 0), (0, 7)))               # K: 9 -> 16
    return p.astype(jnp.bfloat16)


def _prep_params(params):
    """PyTorch-layout weights -> bf16, tap-major, channel-padded to 128."""
    (w1, b1), (w2, b2), (w3, b3) = params
    # conv1: (64,1,3,3) -> (9, 64) -> (16, 128)
    w1r = jnp.transpose(w1, (2, 3, 1, 0)).reshape(9, 64)
    w1p = jnp.pad(w1r, ((0, 7), (0, 64))).astype(jnp.bfloat16)
    b1p = jnp.pad(b1, (0, 64)).reshape(1, C_PAD).astype(jnp.float32)
    # conv2: (64,64,3,3) -> (9, cin, cout) -> (9, 128, 128)
    w2r = jnp.transpose(w2, (2, 3, 1, 0)).reshape(9, 64, 64)
    w2p = jnp.pad(w2r, ((0, 0), (0, 64), (0, 64))).astype(jnp.bfloat16)
    b2p = jnp.pad(b2, (0, 64)).reshape(1, C_PAD).astype(jnp.float32)
    # conv3: (128,64,3,3) -> (9, 64, 128) -> (9, 128, 128)
    w3r = jnp.transpose(w3, (2, 3, 1, 0)).reshape(9, 64, 128)
    w3p = jnp.pad(w3r, ((0, 0), (0, 64), (0, 0))).astype(jnp.bfloat16)
    b3p = b3.reshape(1, C_PAD).astype(jnp.float32)
    return w1p, b1p, w2p, b2p, w3p, b3p


def _pick_batch_block(n, m, max_rows=1024):
    """Largest per-step image count that (a) divides n, (b) keeps the row
    block <= max_rows (VMEM-safe on v7x's 32 MiB scoped default), and
    (c) leaves >= 2 grid steps when n >= 2 (feed both v7x TensorCores)."""
    best = 1
    for b in range(1, n + 1):
        if n % b:
            continue
        if b * m > max_rows:
            continue
        if n >= 2 and n // b < 2:
            continue
        best = b
    return best


@jax.jit
def cnn_forward(x_nchw, params):
    n, cin, h, w = x_nchw.shape
    assert cin == 1
    hout = (h + 2 - 3) // 2 + 1                            # conv1: k=3, s=2, p=1
    wout = (w + 2 - 3) // 2 + 1
    m = hout * wout
    assert m % 8 == 0, "sublane tiling requires hout*wout % 8 == 0"
    assert (m & (m - 1)) == 0 and (wout & (wout - 1)) == 0, (
        "in-kernel index math assumes power-of-two spatial dims (true for 16x16)")

    b_blk = _pick_batch_block(n, m)
    rows = b_blk * m
    n_blocks = n // b_blk

    p1 = _conv1_taps(x_nchw[:, 0], hout, wout).reshape(n * m, 16)  # flat rows
    w1p, b1p, w2p, b2p, w3p, b3p = _prep_params(params)

    out = pl.pallas_call(
        _make_kernel(hout, wout, b_blk),
        out_shape=jax.ShapeDtypeStruct((n * m, C_PAD), jnp.float32),
        grid_spec=pltpu.PrefetchScalarGridSpec(
            num_scalar_prefetch=0,
            grid=(n_blocks,),
            in_specs=[
                pl.BlockSpec((rows, 16), lambda b: (b, 0)),            # conv1 taps
                pl.BlockSpec((16, C_PAD), lambda b: (0, 0)),           # w1
                pl.BlockSpec((1, C_PAD), lambda b: (0, 0)),            # b1
                pl.BlockSpec((9, C_PAD, C_PAD), lambda b: (0, 0, 0)),  # w2
                pl.BlockSpec((1, C_PAD), lambda b: (0, 0)),            # b2
                pl.BlockSpec((9, C_PAD, C_PAD), lambda b: (0, 0, 0)),  # w3
                pl.BlockSpec((1, C_PAD), lambda b: (0, 0)),            # b3
            ],
            out_specs=pl.BlockSpec((rows, C_PAD), lambda b: (b, 0)),
        ),
        compiler_params=pltpu.CompilerParams(
            dimension_semantics=("parallel",)),
    )(p1, w1p, b1p, w2p, b2p, w3p, b3p)

    out = out.reshape(n, hout, wout, C_PAD)                # lane-dense NHWC
    return jnp.transpose(out, (0, 3, 1, 2))                # -> NCHW (module layout)


def init_params(key):
    """Deterministic parameter init matching the PyTorch module's shapes."""
    ks = jax.random.split(key, 6)

    def conv_param(kw_, kb_, cout, cin, k):
        fan_in = cin * k * k
        w = jax.random.normal(kw_, (cout, cin, k, k), jnp.float32) / jnp.sqrt(
            jnp.float32(fan_in))
        b = jax.random.normal(kb_, (cout,), jnp.float32) * 0.01
        return w, b

    w1, b1 = conv_param(ks[0], ks[1], 64, 1, 3)
    w2, b2 = conv_param(ks[2], ks[3], 64, 64, 3)
    w3, b3 = conv_param(ks[4], ks[5], 128, 64, 3)
    return (w1, b1), (w2, b2), (w3, b3)


def _reference_forward(x_nchw, params):
    """Pure-JAX f32 reference (lax conv) for correctness check."""
    out = x_nchw
    strides = (2, 1, 1)
    for (w, b), s in zip(params, strides):
        out = jax.lax.conv_general_dilated(
            out, w, window_strides=(s, s), padding=((1, 1), (1, 1)),
            dimension_numbers=("NCHW", "OIHW", "NCHW"))
        out = jax.nn.relu(out + b[None, :, None, None])
    return out


if __name__ == "__main__":
    key = jax.random.PRNGKey(0)
    k_params, k_x = jax.random.split(key)
    params = init_params(k_params)

    x = jax.random.normal(k_x, (2, 1, 16, 16), jnp.float32)  # NCHW, 1 in-chan

    y = jax.block_until_ready(cnn_forward(x, params))
    assert y.shape == (2, 128, 8, 8), y.shape

    y_ref = _reference_forward(x, params)
    # bf16 MXU inputs (f32 accumulation) vs f32 lax.conv reference.
    assert jnp.allclose(y, y_ref, atol=5e-2, rtol=5e-2), "mismatch vs reference"

    print("KERNEL_OK")
</pallas_src>

<mosaic_0001>
module attributes {stable_mosaic.version = 11 : i64} {
  func.func @kernel(%arg0: i32, %arg1: memref<64x16xbf16, #tpu.memory_space<vmem>>, %arg2: memref<16x128xbf16, #tpu.memory_space<vmem>>, %arg3: memref<1x128xf32, #tpu.memory_space<vmem>>, %arg4: memref<9x128x128xbf16, #tpu.memory_space<vmem>>, %arg5: memref<1x128xf32, #tpu.memory_space<vmem>>, %arg6: memref<9x128x128xbf16, #tpu.memory_space<vmem>>, %arg7: memref<1x128xf32, #tpu.memory_space<vmem>>, %arg8: memref<64x128xf32, #tpu.memory_space<vmem>>) attributes {dimension_semantics = [#tpu.dimension_semantics<parallel>], iteration_bounds = array<i64: 2>, scalar_prefetch = 0 : i64, scratch_operands = 0 : i64, tpu.core_type = #tpu.core_type<tc>, window_params = [{transform_indices = @transform_0, window_bounds = array<i64: 64, 16>}, {pipeline_mode = #tpu.pipeline_mode<synchronous>, transform_indices = @transform_1, window_bounds = array<i64: 16, 128>}, {pipeline_mode = #tpu.pipeline_mode<synchronous>, transform_indices = @transform_2, window_bounds = array<i64: 1, 128>}, {pipeline_mode = #tpu.pipeline_mode<synchronous>, transform_indices = @transform_3, window_bounds = array<i64: 9, 128, 128>}, {pipeline_mode = #tpu.pipeline_mode<synchronous>, transform_indices = @transform_4, window_bounds = array<i64: 1, 128>}, {pipeline_mode = #tpu.pipeline_mode<synchronous>, transform_indices = @transform_5, window_bounds = array<i64: 9, 128, 128>}, {pipeline_mode = #tpu.pipeline_mode<synchronous>, transform_indices = @transform_6, window_bounds = array<i64: 1, 128>}, {transform_indices = @transform_7, window_bounds = array<i64: 64, 128>}]} {
    %c0 = arith.constant 0 : index
    %c0_0 = arith.constant 0 : index
    %0 = vector.load %arg1[%c0, %c0_0] : memref<64x16xbf16, #tpu.memory_space<vmem>>, vector<64x16xbf16>
    %c0_1 = arith.constant 0 : index
    %c0_2 = arith.constant 0 : index
    %1 = vector.load %arg2[%c0_1, %c0_2] : memref<16x128xbf16, #tpu.memory_space<vmem>>, vector<16x128xbf16>
    %cst = arith.constant dense<0.000000e+00> : vector<64x128xf32>
    %2 = tpu.matmul %0, %1, %cst {dimension_numbers = #tpu.dot_dimension_numbers<[1], [0], [0], [1], [0, 0, 1, 1], [], []>} : vector<64x16xbf16>, vector<16x128xbf16>, vector<64x128xf32> -> vector<64x128xf32>
    %c0_3 = arith.constant 0 : index
    %c0_4 = arith.constant 0 : index
    %3 = vector.load %arg3[%c0_3, %c0_4] : memref<1x128xf32, #tpu.memory_space<vmem>>, vector<1x128xf32>
    %4 = vector.broadcast %3 : vector<1x128xf32> to vector<64x128xf32>
    %5 = arith.addf %2, %4 : vector<64x128xf32>
    %cst_5 = arith.constant 0.000000e+00 : f32
    %6 = vector.broadcast %cst_5 : f32 to vector<64x128xf32>
    %7 = arith.maximumf %5, %6 : vector<64x128xf32>
    %8 = tpu.iota {dimensions = array<i32: 0>} : vector<64x128xi32>
    %c63_i32 = arith.constant 63 : i32
    %9 = vector.broadcast %c63_i32 : i32 to vector<64x128xi32>
    %10 = arith.andi %8, %9 : vector<64x128xi32>
    %c3_i32 = arith.constant 3 : i32
    %11 = vector.broadcast %c3_i32 : i32 to vector<64x128xi32>
    %12 = arith.shrsi %10, %11 : vector<64x128xi32>
    %c7_i32 = arith.constant 7 : i32
    %13 = vector.broadcast %c7_i32 : i32 to vector<64x128xi32>
    %14 = arith.andi %10, %13 : vector<64x128xi32>
    %c1_i32 = arith.constant 1 : i32
    %15 = vector.broadcast %c1_i32 : i32 to vector<64x128xi32>
    %16 = arith.cmpi sge, %12, %15 : vector<64x128xi32>
    %c7_i32_6 = arith.constant 7 : i32
    %17 = vector.broadcast %c7_i32_6 : i32 to vector<64x128xi32>
    %18 = arith.cmpi slt, %12, %17 : vector<64x128xi32>
    %c1_i32_7 = arith.constant 1 : i32
    %19 = vector.broadcast %c1_i32_7 : i32 to vector<64x128xi32>
    %20 = arith.cmpi sge, %14, %19 : vector<64x128xi32>
    %c7_i32_8 = arith.constant 7 : i32
    %21 = vector.broadcast %c7_i32_8 : i32 to vector<64x128xi32>
    %22 = arith.cmpi slt, %14, %21 : vector<64x128xi32>
    %c9_i32 = arith.constant 9 : i32
    %23 = tpu.dynamic_rotate %7 by %c9_i32 dim 0 : vector<64x128xf32>, i32 -> vector<64x128xf32>
    %24 = arith.andi %16, %20 : vector<64x128xi1>
    %cst_9 = arith.constant 0.000000e+00 : f32
    %25 = vector.broadcast %cst_9 : f32 to vector<64x128xf32>
    %26 = arith.select %24, %23, %25 : vector<64x128xi1>, vector<64x128xf32>
    %27 = arith.truncf %26 : vector<64x128xf32> to vector<64x128xbf16>
    %c0_10 = arith.constant 0 : index
    %c0_11 = arith.constant 0 : index
    %c0_12 = arith.constant 0 : index
    %28 = vector.load %arg4[%c0_10, %c0_11, %c0_12] : memref<9x128x128xbf16, #tpu.memory_space<vmem>>, vector<1x128x128xbf16>
    %29 = vector.shape_cast %28 : vector<1x128x128xbf16> to vector<128x128xbf16>
    %cst_13 = arith.constant dense<0.000000e+00> : vector<64x128xf32>
    %30 = tpu.matmul %27, %29, %cst_13 {dimension_numbers = #tpu.dot_dimension_numbers<[1], [0], [0], [1], [0, 0, 1, 1], [], []>} : vector<64x128xbf16>, vector<128x128xbf16>, vector<64x128xf32> -> vector<64x128xf32>
    %c8_i32 = arith.constant 8 : i32
    %31 = tpu.dynamic_rotate %7 by %c8_i32 dim 0 : vector<64x128xf32>, i32 -> vector<64x128xf32>
    %cst_14 = arith.constant 0.000000e+00 : f32
    %32 = vector.broadcast %cst_14 : f32 to vector<64x128xf32>
    %33 = arith.select %16, %31, %32 : vector<64x128xi1>, vector<64x128xf32>
    %34 = arith.truncf %33 : vector<64x128xf32> to vector<64x128xbf16>
    %c1 = arith.constant 1 : index
    %c0_15 = arith.constant 0 : index
    %c0_16 = arith.constant 0 : index
    %35 = vector.load %arg4[%c1, %c0_15, %c0_16] : memref<9x128x128xbf16, #tpu.memory_space<vmem>>, vector<1x128x128xbf16>
    %36 = vector.shape_cast %35 : vector<1x128x128xbf16> to vector<128x128xbf16>
    %cst_17 = arith.constant dense<0.000000e+00> : vector<64x128xf32>
    %37 = tpu.matmul %34, %36, %cst_17 {dimension_numbers = #tpu.dot_dimension_numbers<[1], [0], [0], [1], [0, 0, 1, 1], [], []>} : vector<64x128xbf16>, vector<128x128xbf16>, vector<64x128xf32> -> vector<64x128xf32>
    %38 = arith.addf %30, %37 : vector<64x128xf32>
    %c7_i32_18 = arith.constant 7 : i32
    %39 = tpu.dynamic_rotate %7 by %c7_i32_18 dim 0 : vector<64x128xf32>, i32 -> vector<64x128xf32>
    %40 = arith.andi %16, %22 : vector<64x128xi1>
    %cst_19 = arith.constant 0.000000e+00 : f32
    %41 = vector.broadcast %cst_19 : f32 to vector<64x128xf32>
    %42 = arith.select %40, %39, %41 : vector<64x128xi1>, vector<64x128xf32>
    %43 = arith.truncf %42 : vector<64x128xf32> to vector<64x128xbf16>
    %c2 = arith.constant 2 : index
    %c0_20 = arith.constant 0 : index
    %c0_21 = arith.constant 0 : index
    %44 = vector.load %arg4[%c2, %c0_20, %c0_21] : memref<9x128x128xbf16, #tpu.memory_space<vmem>>, vector<1x128x128xbf16>
    %45 = vector.shape_cast %44 : vector<1x128x128xbf16> to vector<128x128xbf16>
    %cst_22 = arith.constant dense<0.000000e+00> : vector<64x128xf32>
    %46 = tpu.matmul %43, %45, %cst_22 {dimension_numbers = #tpu.dot_dimension_numbers<[1], [0], [0], [1], [0, 0, 1, 1], [], []>} : vector<64x128xbf16>, vector<128x128xbf16>, vector<64x128xf32> -> vector<64x128xf32>
    %47 = arith.addf %38, %46 : vector<64x128xf32>
    %c1_i32_23 = arith.constant 1 : i32
    %48 = tpu.dynamic_rotate %7 by %c1_i32_23 dim 0 : vector<64x128xf32>, i32 -> vector<64x128xf32>
    %cst_24 = arith.constant 0.000000e+00 : f32
    %49 = vector.broadcast %cst_24 : f32 to vector<64x128xf32>
    %50 = arith.select %20, %48, %49 : vector<64x128xi1>, vector<64x128xf32>
    %51 = arith.truncf %50 : vector<64x128xf32> to vector<64x128xbf16>
    %c3 = arith.constant 3 : index
    %c0_25 = arith.constant 0 : index
    %c0_26 = arith.constant 0 : index
    %52 = vector.load %arg4[%c3, %c0_25, %c0_26] : memref<9x128x128xbf16, #tpu.memory_space<vmem>>, vector<1x128x128xbf16>
    %53 = vector.shape_cast %52 : vector<1x128x128xbf16> to vector<128x128xbf16>
    %cst_27 = arith.constant dense<0.000000e+00> : vector<64x128xf32>
    %54 = tpu.matmul %51, %53, %cst_27 {dimension_numbers = #tpu.dot_dimension_numbers<[1], [0], [0], [1], [0, 0, 1, 1], [], []>} : vector<64x128xbf16>, vector<128x128xbf16>, vector<64x128xf32> -> vector<64x128xf32>
    %55 = arith.addf %47, %54 : vector<64x128xf32>
    %56 = arith.truncf %7 : vector<64x128xf32> to vector<64x128xbf16>
    %c4 = arith.constant 4 : index
    %c0_28 = arith.constant 0 : index
    %c0_29 = arith.constant 0 : index
    %57 = vector.load %arg4[%c4, %c0_28, %c0_29] : memref<9x128x128xbf16, #tpu.memory_space<vmem>>, vector<1x128x128xbf16>
    %58 = vector.shape_cast %57 : vector<1x128x128xbf16> to vector<128x128xbf16>
    %cst_30 = arith.constant dense<0.000000e+00> : vector<64x128xf32>
    %59 = tpu.matmul %56, %58, %cst_30 {dimension_numbers = #tpu.dot_dimension_numbers<[1], [0], [0], [1], [0, 0, 1, 1], [], []>} : vector<64x128xbf16>, vector<128x128xbf16>, vector<64x128xf32> -> vector<64x128xf32>
    %60 = arith.addf %55, %59 : vector<64x128xf32>
    %c63_i32_31 = arith.constant 63 : i32
    %61 = tpu.dynamic_rotate %7 by %c63_i32_31 dim 0 : vector<64x128xf32>, i32 -> vector<64x128xf32>
    %cst_32 = arith.constant 0.000000e+00 : f32
    %62 = vector.broadcast %cst_32 : f32 to vector<64x128xf32>
    %63 = arith.select %22, %61, %62 : vector<64x128xi1>, vector<64x128xf32>
    %64 = arith.truncf %63 : vector<64x128xf32> to vector<64x128xbf16>
    %c5 = arith.constant 5 : index
    %c0_33 = arith.constant 0 : index
    %c0_34 = arith.constant 0 : index
    %65 = vector.load %arg4[%c5, %c0_33, %c0_34] : memref<9x128x128xbf16, #tpu.memory_space<vmem>>, vector<1x128x128xbf16>
    %66 = vector.shape_cast %65 : vector<1x128x128xbf16> to vector<128x128xbf16>
    %cst_35 = arith.constant dense<0.000000e+00> : vector<64x128xf32>
    %67 = tpu.matmul %64, %66, %cst_35 {dimension_numbers = #tpu.dot_dimension_numbers<[1], [0], [0], [1], [0, 0, 1, 1], [], []>} : vector<64x128xbf16>, vector<128x128xbf16>, vector<64x128xf32> -> vector<64x128xf32>
    %68 = arith.addf %60, %67 : vector<64x128xf32>
    %c57_i32 = arith.constant 57 : i32
    %69 = tpu.dynamic_rotate %7 by %c57_i32 dim 0 : vector<64x128xf32>, i32 -> vector<64x128xf32>
    %70 = arith.andi %18, %20 : vector<64x128xi1>
    %cst_36 = arith.constant 0.000000e+00 : f32
    %71 = vector.broadcast %cst_36 : f32 to vector<64x128xf32>
    %72 = arith.select %70, %69, %71 : vector<64x128xi1>, vector<64x128xf32>
    %73 = arith.truncf %72 : vector<64x128xf32> to vector<64x128xbf16>
    %c6 = arith.constant 6 : index
    %c0_37 = arith.constant 0 : index
    %c0_38 = arith.constant 0 : index
    %74 = vector.load %arg4[%c6, %c0_37, %c0_38] : memref<9x128x128xbf16, #tpu.memory_space<vmem>>, vector<1x128x128xbf16>
    %75 = vector.shape_cast %74 : vector<1x128x128xbf16> to vector<128x128xbf16>
    %cst_39 = arith.constant dense<0.000000e+00> : vector<64x128xf32>
    %76 = tpu.matmul %73, %75, %cst_39 {dimension_numbers = #tpu.dot_dimension_numbers<[1], [0], [0], [1], [0, 0, 1, 1], [], []>} : vector<64x128xbf16>, vector<128x128xbf16>, vector<64x128xf32> -> vector<64x128xf32>
    %77 = arith.addf %68, %76 : vector<64x128xf32>
    %c56_i32 = arith.constant 56 : i32
    %78 = tpu.dynamic_rotate %7 by %c56_i32 dim 0 : vector<64x128xf32>, i32 -> vector<64x128xf32>
    %cst_40 = arith.constant 0.000000e+00 : f32
    %79 = vector.broadcast %cst_40 : f32 to vector<64x128xf32>
    %80 = arith.select %18, %78, %79 : vector<64x128xi1>, vector<64x128xf32>
    %81 = arith.truncf %80 : vector<64x128xf32> to vector<64x128xbf16>
    %c7 = arith.constant 7 : index
    %c0_41 = arith.constant 0 : index
    %c0_42 = arith.constant 0 : index
    %82 = vector.load %arg4[%c7, %c0_41, %c0_42] : memref<9x128x128xbf16, #tpu.memory_space<vmem>>, vector<1x128x128xbf16>
    %83 = vector.shape_cast %82 : vector<1x128x128xbf16> to vector<128x128xbf16>
    %cst_43 = arith.constant dense<0.000000e+00> : vector<64x128xf32>
    %84 = tpu.matmul %81, %83, %cst_43 {dimension_numbers = #tpu.dot_dimension_numbers<[1], [0], [0], [1], [0, 0, 1, 1], [], []>} : vector<64x128xbf16>, vector<128x128xbf16>, vector<64x128xf32> -> vector<64x128xf32>
    %85 = arith.addf %77, %84 : vector<64x128xf32>
    %c55_i32 = arith.constant 55 : i32
    %86 = tpu.dynamic_rotate %7 by %c55_i32 dim 0 : vector<64x128xf32>, i32 -> vector<64x128xf32>
    %87 = arith.andi %18, %22 : vector<64x128xi1>
    %cst_44 = arith.constant 0.000000e+00 : f32
    %88 = vector.broadcast %cst_44 : f32 to vector<64x128xf32>
    %89 = arith.select %87, %86, %88 : vector<64x128xi1>, vector<64x128xf32>
    %90 = arith.truncf %89 : vector<64x128xf32> to vector<64x128xbf16>
    %c8 = arith.constant 8 : index
    %c0_45 = arith.constant 0 : index
    %c0_46 = arith.constant 0 : index
    %91 = vector.load %arg4[%c8, %c0_45, %c0_46] : memref<9x128x128xbf16, #tpu.memory_space<vmem>>, vector<1x128x128xbf16>
    %92 = vector.shape_cast %91 : vector<1x128x128xbf16> to vector<128x128xbf16>
    %cst_47 = arith.constant dense<0.000000e+00> : vector<64x128xf32>
    %93 = tpu.matmul %90, %92, %cst_47 {dimension_numbers = #tpu.dot_dimension_numbers<[1], [0], [0], [1], [0, 0, 1, 1], [], []>} : vector<64x128xbf16>, vector<128x128xbf16>, vector<64x128xf32> -> vector<64x128xf32>
    %94 = arith.addf %85, %93 : vector<64x128xf32>
    %c0_48 = arith.constant 0 : index
    %c0_49 = arith.constant 0 : index
    %95 = vector.load %arg5[%c0_48, %c0_49] : memref<1x128xf32, #tpu.memory_space<vmem>>, vector<1x128xf32>
    %96 = vector.broadcast %95 : vector<1x128xf32> to vector<64x128xf32>
    %97 = arith.addf %94, %96 : vector<64x128xf32>
    %cst_50 = arith.constant 0.000000e+00 : f32
    %98 = vector.broadcast %cst_50 : f32 to vector<64x128xf32>
    %99 = arith.maximumf %97, %98 : vector<64x128xf32>
    %c9_i32_51 = arith.constant 9 : i32
    %100 = tpu.dynamic_rotate %99 by %c9_i32_51 dim 0 : vector<64x128xf32>, i32 -> vector<64x128xf32>
    %101 = arith.andi %16, %20 : vector<64x128xi1>
    %cst_52 = arith.constant 0.000000e+00 : f32
    %102 = vector.broadcast %cst_52 : f32 to vector<64x128xf32>
    %103 = arith.select %101, %100, %102 : vector<64x128xi1>, vector<64x128xf32>
    %104 = arith.truncf %103 : vector<64x128xf32> to vector<64x128xbf16>
    %c0_53 = arith.constant 0 : index
    %c0_54 = arith.constant 0 : index
    %c0_55 = arith.constant 0 : index
    %105 = vector.load %arg6[%c0_53, %c0_54, %c0_55] : memref<9x128x128xbf16, #tpu.memory_space<vmem>>, vector<1x128x128xbf16>
    %106 = vector.shape_cast %105 : vector<1x128x128xbf16> to vector<128x128xbf16>
    %cst_56 = arith.constant dense<0.000000e+00> : vector<64x128xf32>
    %107 = tpu.matmul %104, %106, %cst_56 {dimension_numbers = #tpu.dot_dimension_numbers<[1], [0], [0], [1], [0, 0, 1, 1], [], []>} : vector<64x128xbf16>, vector<128x128xbf16>, vector<64x128xf32> -> vector<64x128xf32>
    %c8_i32_57 = arith.constant 8 : i32
    %108 = tpu.dynamic_rotate %99 by %c8_i32_57 dim 0 : vector<64x128xf32>, i32 -> vector<64x128xf32>
    %cst_58 = arith.constant 0.000000e+00 : f32
    %109 = vector.broadcast %cst_58 : f32 to vector<64x128xf32>
    %110 = arith.select %16, %108, %109 : vector<64x128xi1>, vector<64x128xf32>
    %111 = arith.truncf %110 : vector<64x128xf32> to vector<64x128xbf16>
    %c1_59 = arith.constant 1 : index
    %c0_60 = arith.constant 0 : index
    %c0_61 = arith.constant 0 : index
    %112 = vector.load %arg6[%c1_59, %c0_60, %c0_61] : memref<9x128x128xbf16, #tpu.memory_space<vmem>>, vector<1x128x128xbf16>
    %113 = vector.shape_cast %112 : vector<1x128x128xbf16> to vector<128x128xbf16>
    %cst_62 = arith.constant dense<0.000000e+00> : vector<64x128xf32>
    %114 = tpu.matmul %111, %113, %cst_62 {dimension_numbers = #tpu.dot_dimension_numbers<[1], [0], [0], [1], [0, 0, 1, 1], [], []>} : vector<64x128xbf16>, vector<128x128xbf16>, vector<64x128xf32> -> vector<64x128xf32>
    %115 = arith.addf %107, %114 : vector<64x128xf32>
    %c7_i32_63 = arith.constant 7 : i32
    %116 = tpu.dynamic_rotate %99 by %c7_i32_63 dim 0 : vector<64x128xf32>, i32 -> vector<64x128xf32>
    %117 = arith.andi %16, %22 : vector<64x128xi1>
    %cst_64 = arith.constant 0.000000e+00 : f32
    %118 = vector.broadcast %cst_64 : f32 to vector<64x128xf32>
    %119 = arith.select %117, %116, %118 : vector<64x128xi1>, vector<64x128xf32>
    %120 = arith.truncf %119 : vector<64x128xf32> to vector<64x128xbf16>
    %c2_65 = arith.constant 2 : index
    %c0_66 = arith.constant 0 : index
    %c0_67 = arith.constant 0 : index
    %121 = vector.load %arg6[%c2_65, %c0_66, %c0_67] : memref<9x128x128xbf16, #tpu.memory_space<vmem>>, vector<1x128x128xbf16>
    %122 = vector.shape_cast %121 : vector<1x128x128xbf16> to vector<128x128xbf16>
    %cst_68 = arith.constant dense<0.000000e+00> : vector<64x128xf32>
    %123 = tpu.matmul %120, %122, %cst_68 {dimension_numbers = #tpu.dot_dimension_numbers<[1], [0], [0], [1], [0, 0, 1, 1], [], []>} : vector<64x128xbf16>, vector<128x128xbf16>, vector<64x128xf32> -> vector<64x128xf32>
    %124 = arith.addf %115, %123 : vector<64x128xf32>
    %c1_i32_69 = arith.constant 1 : i32
    %125 = tpu.dynamic_rotate %99 by %c1_i32_69 dim 0 : vector<64x128xf32>, i32 -> vector<64x128xf32>
    %cst_70 = arith.constant 0.000000e+00 : f32
    %126 = vector.broadcast %cst_70 : f32 to vector<64x128xf32>
    %127 = arith.select %20, %125, %126 : vector<64x128xi1>, vector<64x128xf32>
    %128 = arith.truncf %127 : vector<64x128xf32> to vector<64x128xbf16>
    %c3_71 = arith.constant 3 : index
    %c0_72 = arith.constant 0 : index
    %c0_73 = arith.constant 0 : index
    %129 = vector.load %arg6[%c3_71, %c0_72, %c0_73] : memref<9x128x128xbf16, #tpu.memory_space<vmem>>, vector<1x128x128xbf16>
    %130 = vector.shape_cast %129 : vector<1x128x128xbf16> to vector<128x128xbf16>
    %cst_74 = arith.constant dense<0.000000e+00> : vector<64x128xf32>
    %131 = tpu.matmul %128, %130, %cst_74 {dimension_numbers = #tpu.dot_dimension_numbers<[1], [0], [0], [1], [0, 0, 1, 1], [], []>} : vector<64x128xbf16>, vector<128x128xbf16>, vector<64x128xf32> -> vector<64x128xf32>
    %132 = arith.addf %124, %131 : vector<64x128xf32>
    %133 = arith.truncf %99 : vector<64x128xf32> to vector<64x128xbf16>
    %c4_75 = arith.constant 4 : index
    %c0_76 = arith.constant 0 : index
    %c0_77 = arith.constant 0 : index
    %134 = vector.load %arg6[%c4_75, %c0_76, %c0_77] : memref<9x128x128xbf16, #tpu.memory_space<vmem>>, vector<1x128x128xbf16>
    %135 = vector.shape_cast %134 : vector<1x128x128xbf16> to vector<128x128xbf16>
    %cst_78 = arith.constant dense<0.000000e+00> : vector<64x128xf32>
    %136 = tpu.matmul %133, %135, %cst_78 {dimension_numbers = #tpu.dot_dimension_numbers<[1], [0], [0], [1], [0, 0, 1, 1], [], []>} : vector<64x128xbf16>, vector<128x128xbf16>, vector<64x128xf32> -> vector<64x128xf32>
    %137 = arith.addf %132, %136 : vector<64x128xf32>
    %c63_i32_79 = arith.constant 63 : i32
    %138 = tpu.dynamic_rotate %99 by %c63_i32_79 dim 0 : vector<64x128xf32>, i32 -> vector<64x128xf32>
    %cst_80 = arith.constant 0.000000e+00 : f32
    %139 = vector.broadcast %cst_80 : f32 to vector<64x128xf32>
    %140 = arith.select %22, %138, %139 : vector<64x128xi1>, vector<64x128xf32>
    %141 = arith.truncf %140 : vector<64x128xf32> to vector<64x128xbf16>
    %c5_81 = arith.constant 5 : index
    %c0_82 = arith.constant 0 : index
    %c0_83 = arith.constant 0 : index
    %142 = vector.load %arg6[%c5_81, %c0_82, %c0_83] : memref<9x128x128xbf16, #tpu.memory_space<vmem>>, vector<1x128x128xbf16>
    %143 = vector.shape_cast %142 : vector<1x128x128xbf16> to vector<128x128xbf16>
    %cst_84 = arith.constant dense<0.000000e+00> : vector<64x128xf32>
    %144 = tpu.matmul %141, %143, %cst_84 {dimension_numbers = #tpu.dot_dimension_numbers<[1], [0], [0], [1], [0, 0, 1, 1], [], []>} : vector<64x128xbf16>, vector<128x128xbf16>, vector<64x128xf32> -> vector<64x128xf32>
    %145 = arith.addf %137, %144 : vector<64x128xf32>
    %c57_i32_85 = arith.constant 57 : i32
    %146 = tpu.dynamic_rotate %99 by %c57_i32_85 dim 0 : vector<64x128xf32>, i32 -> vector<64x128xf32>
    %147 = arith.andi %18, %20 : vector<64x128xi1>
    %cst_86 = arith.constant 0.000000e+00 : f32
    %148 = vector.broadcast %cst_86 : f32 to vector<64x128xf32>
    %149 = arith.select %147, %146, %148 : vector<64x128xi1>, vector<64x128xf32>
    %150 = arith.truncf %149 : vector<64x128xf32> to vector<64x128xbf16>
    %c6_87 = arith.constant 6 : index
    %c0_88 = arith.constant 0 : index
    %c0_89 = arith.constant 0 : index
    %151 = vector.load %arg6[%c6_87, %c0_88, %c0_89] : memref<9x128x128xbf16, #tpu.memory_space<vmem>>, vector<1x128x128xbf16>
    %152 = vector.shape_cast %151 : vector<1x128x128xbf16> to vector<128x128xbf16>
    %cst_90 = arith.constant dense<0.000000e+00> : vector<64x128xf32>
    %153 = tpu.matmul %150, %152, %cst_90 {dimension_numbers = #tpu.dot_dimension_numbers<[1], [0], [0], [1], [0, 0, 1, 1], [], []>} : vector<64x128xbf16>, vector<128x128xbf16>, vector<64x128xf32> -> vector<64x128xf32>
    %154 = arith.addf %145, %153 : vector<64x128xf32>
    %c56_i32_91 = arith.constant 56 : i32
    %155 = tpu.dynamic_rotate %99 by %c56_i32_91 dim 0 : vector<64x128xf32>, i32 -> vector<64x128xf32>
    %cst_92 = arith.constant 0.000000e+00 : f32
    %156 = vector.broadcast %cst_92 : f32 to vector<64x128xf32>
    %157 = arith.select %18, %155, %156 : vector<64x128xi1>, vector<64x128xf32>
    %158 = arith.truncf %157 : vector<64x128xf32> to vector<64x128xbf16>
    %c7_93 = arith.constant 7 : index
    %c0_94 = arith.constant 0 : index
    %c0_95 = arith.constant 0 : index
    %159 = vector.load %arg6[%c7_93, %c0_94, %c0_95] : memref<9x128x128xbf16, #tpu.memory_space<vmem>>, vector<1x128x128xbf16>
    %160 = vector.shape_cast %159 : vector<1x128x128xbf16> to vector<128x128xbf16>
    %cst_96 = arith.constant dense<0.000000e+00> : vector<64x128xf32>
    %161 = tpu.matmul %158, %160, %cst_96 {dimension_numbers = #tpu.dot_dimension_numbers<[1], [0], [0], [1], [0, 0, 1, 1], [], []>} : vector<64x128xbf16>, vector<128x128xbf16>, vector<64x128xf32> -> vector<64x128xf32>
    %162 = arith.addf %154, %161 : vector<64x128xf32>
    %c55_i32_97 = arith.constant 55 : i32
    %163 = tpu.dynamic_rotate %99 by %c55_i32_97 dim 0 : vector<64x128xf32>, i32 -> vector<64x128xf32>
    %164 = arith.andi %18, %22 : vector<64x128xi1>
    %cst_98 = arith.constant 0.000000e+00 : f32
    %165 = vector.broadcast %cst_98 : f32 to vector<64x128xf32>
    %166 = arith.select %164, %163, %165 : vector<64x128xi1>, vector<64x128xf32>
    %167 = arith.truncf %166 : vector<64x128xf32> to vector<64x128xbf16>
    %c8_99 = arith.constant 8 : index
    %c0_100 = arith.constant 0 : index
    %c0_101 = arith.constant 0 : index
    %168 = vector.load %arg6[%c8_99, %c0_100, %c0_101] : memref<9x128x128xbf16, #tpu.memory_space<vmem>>, vector<1x128x128xbf16>
    %169 = vector.shape_cast %168 : vector<1x128x128xbf16> to vector<128x128xbf16>
    %cst_102 = arith.constant dense<0.000000e+00> : vector<64x128xf32>
    %170 = tpu.matmul %167, %169, %cst_102 {dimension_numbers = #tpu.dot_dimension_numbers<[1], [0], [0], [1], [0, 0, 1, 1], [], []>} : vector<64x128xbf16>, vector<128x128xbf16>, vector<64x128xf32> -> vector<64x128xf32>
    %171 = arith.addf %162, %170 : vector<64x128xf32>
    %c0_103 = arith.constant 0 : index
    %c0_104 = arith.constant 0 : index
    %172 = vector.load %arg7[%c0_103, %c0_104] : memref<1x128xf32, #tpu.memory_space<vmem>>, vector<1x128xf32>
    %173 = vector.broadcast %172 : vector<1x128xf32> to vector<64x128xf32>
    %174 = arith.addf %171, %173 : vector<64x128xf32>
    %cst_105 = arith.constant 0.000000e+00 : f32
    %175 = vector.broadcast %cst_105 : f32 to vector<64x128xf32>
    %176 = arith.maximumf %174, %175 : vector<64x128xf32>
    %c0_106 = arith.constant 0 : index
    %c0_107 = arith.constant 0 : index
    %177 = vector.load %arg8[%c0_106, %c0_107] : memref<64x128xf32, #tpu.memory_space<vmem>>, vector<64x128xf32>
    tpu.vector_store %arg8[%c0_106, %c0_107], %176 {strides = array<i32>} : memref<64x128xf32, #tpu.memory_space<vmem>>, vector<64x128xf32>,
    return
  }
  func.func @transform_0(%arg0: i32) -> (i32, i32) {
    %c0_i32 = arith.constant 0 : i32
    %c0_i32_0 = arith.constant 0 : i32
    return %arg0, %c0_i32 : i32, i32
  }
  func.func @transform_1(%arg0: i32) -> (i32, i32) {
    %c0_i32 = arith.constant 0 : i32
    %c0_i32_0 = arith.constant 0 : i32
    %c0_i32_1 = arith.constant 0 : i32
    return %c0_i32, %c0_i32_0 : i32, i32
  }
  func.func @transform_2(%arg0: i32) -> (i32, i32) {
    %c0_i32 = arith.constant 0 : i32
    %c0_i32_0 = arith.constant 0 : i32
    %c0_i32_1 = arith.constant 0 : i32
    return %c0_i32, %c0_i32_0 : i32, i32
  }
  func.func @transform_3(%arg0: i32) -> (i32, i32, i32) {
    %c0_i32 = arith.constant 0 : i32
    %c0_i32_0 = arith.constant 0 : i32
    %c0_i32_1 = arith.constant 0 : i32
    %c0_i32_2 = arith.constant 0 : i32
    return %c0_i32, %c0_i32_0, %c0_i32_1 : i32, i32, i32
  }
  func.func @transform_4(%arg0: i32) -> (i32, i32) {
    %c0_i32 = arith.constant 0 : i32
    %c0_i32_0 = arith.constant 0 : i32
    %c0_i32_1 = arith.constant 0 : i32
    return %c0_i32, %c0_i32_0 : i32, i32
  }
  func.func @transform_5(%arg0: i32) -> (i32, i32, i32) {
    %c0_i32 = arith.constant 0 : i32
    %c0_i32_0 = arith.constant 0 : i32
    %c0_i32_1 = arith.constant 0 : i32
    %c0_i32_2 = arith.constant 0 : i32
    return %c0_i32, %c0_i32_0, %c0_i32_1 : i32, i32, i32
  }
  func.func @transform_6(%arg0: i32) -> (i32, i32) {
    %c0_i32 = arith.constant 0 : i32
    %c0_i32_0 = arith.constant 0 : i32
    %c0_i32_1 = arith.constant 0 : i32
    return %c0_i32, %c0_i32_0 : i32, i32
  }
  func.func @transform_7(%arg0: i32) -> (i32, i32) {
    %c0_i32 = arith.constant 0 : i32
    %c0_i32_0 = arith.constant 0 : i32
    return %arg0, %c0_i32 : i32, i32
  }
}

</mosaic_0001>

<llo_original>
// kernel: cnn_forward.1
$region0: #{cnn_forward.1}
  #allocation0 [shape = 'u32[]', space=smem, size = 0x4, offset = 0x4, fixed_abs, tag = 'smem constant byte address 0x4 - core index']
  #allocation1 [shape = 'u32[144,128]{1,0:T(1,128)}', space=vmem, size = 0x12000, scoped, tag = 'internal scratch']
  %s0 = inlined_call_operand.vmem [shape: bf16[128,16], index: 0, kind: input, shape index: {}]
  %s1 = inlined_call_operand.vmem [shape: bf16[16,128], index: 1, kind: input, shape index: {}]
  %s2 = inlined_call_operand.vmem [shape: f32[1,128], index: 2, kind: input, shape index: {}]
  %s3 = inlined_call_operand.vmem [shape: bf16[9,128,128], index: 3, kind: input, shape index: {}]
  %s4 = inlined_call_operand.vmem [shape: f32[1,128], index: 4, kind: input, shape index: {}]
  %s5 = inlined_call_operand.vmem [shape: bf16[9,128,128], index: 5, kind: input, shape index: {}]
  %s6 = inlined_call_operand.vmem [shape: f32[1,128], index: 6, kind: input, shape index: {}]
  %s7 = inlined_call_operand.hbm [shape: f32[128,128], index: 7, kind: output, shape index: {}]
  %s8 = sld [smem:[#allocation0]]
  $region61: #{cnn_forward.1} parent=0
    _
  %s10 = ssub.s32 1, %s8
  %s11 = scalar_select 0, %s10, %s8
  $region1: #{cnn_forward.1} parent=0
    #allocation2 [shape = 'u8[65536]{0}', space=vmem, size = 0x10000, scoped, tag = 'output window, operand 0']
    #allocation3 [shape = 's32[2]{0}', space=sflag, size = 0x8, scoped, tag = 'scoped memory for cnn_forward.1']
    %12 = vsyncpa [#allocation3], 0
    %s13 = scalar_lea.sflag [#allocation3], 1
    %14 = vsyncpa %s13, 0
    loop: start=0, step=1, limit=4
    $region2: #{cnn_forward.1} parent=1 // loop_pre_header
      _
    $region3: #{cnn_forward.1} parent=1 // loop_header
      %s16 = sphi 0, %s20
      %p17 = scmp.ge.s32.totalorder %s16, 4
      %s26 = sphi 0, %s28
      %s29 = sphi 0, %s26
      %s30 = sphi 0, %s29
      %s46 = sphi 0, %s30
      %s50 = sphi 0, %s50
      %s52 = sphi 0, %s50
      %s53 = sphi 0, %s52
      %s67 = sphi 0, %s53
      %s71 = sphi 0, %s71
      %s73 = sphi 0, %s71
      %s74 = sphi 0, %s73
      %s88 = sphi 0, %s74
      %s92 = sphi 0, %s92
      %s94 = sphi 0, %s92
      %s95 = sphi 0, %s94
      %s109 = sphi 0, %s95
      %s113 = sphi 0, %s113
      %s115 = sphi 0, %s113
      %s116 = sphi 0, %s115
      %s130 = sphi 0, %s116
      %s134 = sphi 0, %s134
      %s136 = sphi 0, %s134
      %s137 = sphi 0, %s136
      %s151 = sphi 0, %s137
      %s155 = sphi 0, %s155
      %s157 = sphi 0, %s155
      %s158 = sphi 0, %s157
      %s172 = sphi 0, %s158
      %s178 = sphi 0, %s180
      %s181 = sphi 0, %s178
      %s182 = sphi 0, %s181
      %s198 = sphi 0, %s182
    $region4: #{cnn_forward.1} parent=1 // loop_header_branch
      %19 = sbr.rel (%p17) target = $region8
    $region5: #{cnn_forward.1} parent=1 // loop_body
      %s21 = ssub.s32 %s16, 1
      %s22 = ssub.s32 %s16, 2
      %s23 = sadd.s32 %s16, 1
      %s24 = ssub.s32 %s16, %s23
      %p25 = scmp.eq.s32.totalorder %s24, 0
      %s27 = sadd.s32 %s26, 1
      %s28 = scalar_select %p25, %s26, %s27
      %p31 = pneg %p25
      %p32 = scmp.eq.s32.totalorder %s16, 1
      %p33 = por %p31, %p32
      %p34 = scmp.ne.s32.totalorder %s26, %s29
      %p35 = scmp.eq.s32.totalorder %s16, 0
      %p36 = por %p34, %p35
      %p37 = scmp.ne.s32.totalorder %s26, %s29
      %p38 = scmp.eq.s32.totalorder %s21, 1
      %p39 = por %p37, %p38
      %p40 = scmp.ne.s32.totalorder %s29, %s30
      %p41 = scmp.eq.s32.totalorder %s21, 0
      %p42 = por %p40, %p41
      %p43 = scmp.ne.s32.totalorder %s29, %s30
      %p44 = scmp.eq.s32.totalorder %s22, 1
      %p45 = por %p43, %p44
      %p47 = scmp.ne.s32.totalorder %s30, %s46
      %p48 = scmp.eq.s32.totalorder %s22, 0
      %p49 = por %p47, %p48
      %s51 = sadd.s32 %s50, 1
      %p54 = scmp.eq.s32.totalorder %s16, 1
      %p55 = scmp.ne.s32.totalorder %s50, %s52
      %p56 = scmp.eq.s32.totalorder %s16, 0
      %p57 = por %p55, %p56
      %p58 = scmp.ne.s32.totalorder %s50, %s52
      %p59 = scmp.eq.s32.totalorder %s21, 1
      %p60 = por %p58, %p59
      %p61 = scmp.ne.s32.totalorder %s52, %s53
      %p62 = scmp.eq.s32.totalorder %s21, 0
      %p63 = por %p61, %p62
      %p64 = scmp.ne.s32.totalorder %s52, %s53
      %p65 = scmp.eq.s32.totalorder %s22, 1
      %p66 = por %p64, %p65
      %p68 = scmp.ne.s32.totalorder %s53, %s67
      %p69 = scmp.eq.s32.totalorder %s22, 0
      %p70 = por %p68, %p69
      %s72 = sadd.s32 %s71, 1
      %p75 = scmp.eq.s32.totalorder %s16, 1
      %p76 = scmp.ne.s32.totalorder %s71, %s73
      %p77 = scmp.eq.s32.totalorder %s16, 0
      %p78 = por %p76, %p77
      %p79 = scmp.ne.s32.totalorder %s71, %s73
      %p80 = scmp.eq.s32.totalorder %s21, 1
      %p81 = por %p79, %p80
      %p82 = scmp.ne.s32.totalorder %s73, %s74
      %p83 = scmp.eq.s32.totalorder %s21, 0
      %p84 = por %p82, %p83
      %p85 = scmp.ne.s32.totalorder %s73, %s74
      %p86 = scmp.eq.s32.totalorder %s22, 1
      %p87 = por %p85, %p86
      %p89 = scmp.ne.s32.totalorder %s74, %s88
      %p90 = scmp.eq.s32.totalorder %s22, 0
      %p91 = por %p89, %p90
      %s93 = sadd.s32 %s92, 1
      %p96 = scmp.eq.s32.totalorder %s16, 1
      %p97 = scmp.ne.s32.totalorder %s92, %s94
      %p98 = scmp.eq.s32.totalorder %s16, 0
      %p99 = por %p97, %p98
      %p100 = scmp.ne.s32.totalorder %s92, %s94
      %p101 = scmp.eq.s32.totalorder %s21, 1
      %p102 = por %p100, %p101
      %p103 = scmp.ne.s32.totalorder %s94, %s95
      %p104 = scmp.eq.s32.totalorder %s21, 0
      %p105 = por %p103, %p104
      %p106 = scmp.ne.s32.totalorder %s94, %s95
      %p107 = scmp.eq.s32.totalorder %s22, 1
      %p108 = por %p106, %p107
      %p110 = scmp.ne.s32.totalorder %s95, %s109
      %p111 = scmp.eq.s32.totalorder %s22, 0
      %p112 = por %p110, %p111
      %s114 = sadd.s32 %s113, 1
      %p117 = scmp.eq.s32.totalorder %s16, 1
      %p118 = scmp.ne.s32.totalorder %s113, %s115
      %p119 = scmp.eq.s32.totalorder %s16, 0
      %p120 = por %p118, %p119
      %p121 = scmp.ne.s32.totalorder %s113, %s115
      %p122 = scmp.eq.s32.totalorder %s21, 1
      %p123 = por %p121, %p122
      %p124 = scmp.ne.s32.totalorder %s115, %s116
      %p125 = scmp.eq.s32.totalorder %s21, 0
      %p126 = por %p124, %p125
      %p127 = scmp.ne.s32.totalorder %s115, %s116
      %p128 = scmp.eq.s32.totalorder %s22, 1
      %p129 = por %p127, %p128
      %p131 = scmp.ne.s32.totalorder %s116, %s130
      %p132 = scmp.eq.s32.totalorder %s22, 0
      %p133 = por %p131, %p132
      %s135 = sadd.s32 %s134, 1
      %p138 = scmp.eq.s32.totalorder %s16, 1
      %p139 = scmp.ne.s32.totalorder %s134, %s136
      %p140 = scmp.eq.s32.totalorder %s16, 0
      %p141 = por %p139, %p140
      %p142 = scmp.ne.s32.totalorder %s134, %s136
      %p143 = scmp.eq.s32.totalorder %s21, 1
      %p144 = por %p142, %p143
      %p145 = scmp.ne.s32.totalorder %s136, %s137
      %p146 = scmp.eq.s32.totalorder %s21, 0
      %p147 = por %p145, %p146
      %p148 = scmp.ne.s32.totalorder %s136, %s137
      %p149 = scmp.eq.s32.totalorder %s22, 1
      %p150 = por %p148, %p149
      %p152 = scmp.ne.s32.totalorder %s137, %s151
      %p153 = scmp.eq.s32.totalorder %s22, 0
      %p154 = por %p152, %p153
      %s156 = sadd.s32 %s155, 1
      %p159 = scmp.eq.s32.totalorder %s16, 1
      %p160 = scmp.ne.s32.totalorder %s155, %s157
      %p161 = scmp.eq.s32.totalorder %s16, 0
      %p162 = por %p160, %p161
      %p163 = scmp.ne.s32.totalorder %s155, %s157
      %p164 = scmp.eq.s32.totalorder %s21, 1
      %p165 = por %p163, %p164
      %p166 = scmp.ne.s32.totalorder %s157, %s158
      %p167 = scmp.eq.s32.totalorder %s21, 0
      %p168 = por %p166, %p167
      %p169 = scmp.ne.s32.totalorder %s157, %s158
      %p170 = scmp.eq.s32.totalorder %s22, 1
      %p171 = por %p169, %p170
      %p173 = scmp.ne.s32.totalorder %s158, %s172
      %p174 = scmp.eq.s32.totalorder %s22, 0
      %p175 = por %p173, %p174
      %s176 = ssub.s32 %s16, %s23
      %p177 = scmp.eq.s32.totalorder %s176, 0
      %s179 = sadd.s32 %s178, 1
      %s180 = scalar_select %p177, %s178, %s179
      %p183 = pneg %p177
      %p184 = scmp.eq.s32.totalorder %s16, 1
      %p185 = por %p183, %p184
      %p186 = scmp.ne.s32.totalorder %s178, %s181
      %p187 = scmp.eq.s32.totalorder %s16, 0
      %p188 = por %p186, %p187
      %p189 = scmp.ne.s32.totalorder %s178, %s181
      %p190 = scmp.eq.s32.totalorder %s21, 1
      %p191 = por %p189, %p190
      %p192 = scmp.ne.s32.totalorder %s181, %s182
      %p193 = scmp.eq.s32.totalorder %s21, 0
      %p194 = por %p192, %p193
      %p195 = scmp.ne.s32.totalorder %s181, %s182
      %p196 = scmp.eq.s32.totalorder %s22, 1
      %p197 = por %p195, %p196
      %p199 = scmp.ne.s32.totalorder %s182, %s198
      %p200 = scmp.eq.s32.totalorder %s22, 0
      %p201 = por %p199, %p200
      %p202 = scmp.le.s32.totalorder 1, %s16
      %p203 = scmp.lt.s32.totalorder %s16, 3
      %p204 = pnand %p202, %p203
      %p205 = pneg %p204
      // Predicated region
      $region9: #{cnn_forward.1} parent=5 // pred_check
        _
      $region10: #{cnn_forward.1} parent=5 // pred_check_branch
        %207 = sbr.rel (%p204) target = $region12
      $region11: #{cnn_forward.1} parent=5 // pred_region
        %s208 = ssub.s32 %s16, 1
        // Predicated region
        $region13: #{cnn_forward.1} parent=11 // pred_check
          %p209 = pneg %p63
        $region14: #{cnn_forward.1} parent=11 // pred_check_branch
          %211 = sbr.rel (%p209) target = $region16
        $region15: #{cnn_forward.1} parent=11 // pred_region
          _
        $region16: #{cnn_forward.1} parent=11 // pred_fallthru
          _
        // Predicated region
        $region17: #{cnn_forward.1} parent=11 // pred_check
          %p212 = pneg %p84
        $region18: #{cnn_forward.1} parent=11 // pred_check_branch
          %214 = sbr.rel (%p212) target = $region20
        $region19: #{cnn_forward.1} parent=11 // pred_region
          _
        $region20: #{cnn_forward.1} parent=11 // pred_fallthru
          _
        // Predicated region
        $region21: #{cnn_forward.1} parent=11 // pred_check
          %p215 = pneg %p105
        $region22: #{cnn_forward.1} parent=11 // pred_check_branch
          %217 = sbr.rel (%p215) target = $region24
        $region23: #{cnn_forward.1} parent=11 // pred_region
          _
        $region24: #{cnn_forward.1} parent=11 // pred_fallthru
          _
        // Predicated region
        $region25: #{cnn_forward.1} parent=11 // pred_check
          %p218 = pneg %p126
        $region26: #{cnn_forward.1} parent=11 // pred_check_branch
          %220 = sbr.rel (%p218) target = $region28
        $region27: #{cnn_forward.1} parent=11 // pred_region
          _
        $region28: #{cnn_forward.1} parent=11 // pred_fallthru
          _
        // Predicated region
        $region29: #{cnn_forward.1} parent=11 // pred_check
          %p221 = pneg %p147
        $region30: #{cnn_forward.1} parent=11 // pred_check_branch
          %223 = sbr.rel (%p221) target = $region32
        $region31: #{cnn_forward.1} parent=11 // pred_region
          _
        $region32: #{cnn_forward.1} parent=11 // pred_fallthru
          _
        // Predicated region
        $region33: #{cnn_forward.1} parent=11 // pred_check
          %p224 = pneg %p168
        $region34: #{cnn_forward.1} parent=11 // pred_check_branch
          %226 = sbr.rel (%p224) target = $region36
        $region35: #{cnn_forward.1} parent=11 // pred_region
          _
        $region36: #{cnn_forward.1} parent=11 // pred_fallthru
          _
      $region12: #{cnn_forward.1} parent=5 // pred_fallthru
        _
      %p227 = scmp.lt.s32.totalorder %s16, 2
      // Predicated region
      $region37: #{cnn_forward.1} parent=5 // pred_check
        %p228 = pneg %p227
      $region38: #{cnn_forward.1} parent=5 // pred_check_branch
        %230 = sbr.rel (%p228) target = $region40
      $region39: #{cnn_forward.1} parent=5 // pred_region
        // Predicated region
        $region41: #{cnn_forward.1} parent=39 // pred_check
          %p231 = pneg %p36
        $region42: #{cnn_forward.1} parent=39 // pred_check_branch
          %233 = sbr.rel (%p231) target = $region44
        $region43: #{cnn_forward.1} parent=39 // pred_region
          %s234 = smul.u32 8, %s16
          %p235 = scmp.lt.s32.totalorder %s234, 15
          %s236 = scalar_select %p235, %s234, 15
          %s237 = smul.addr %s236, 4
          %s238 = scalar_lea.vmem %s0, %s237
          %s239 = smul.u32 8, %s16
        $region44: #{cnn_forward.1} parent=39 // pred_fallthru
          _
      $region40: #{cnn_forward.1} parent=5 // pred_fallthru
        _
      %p240 = scmp.le.s32.totalorder 1, %s16
      %p241 = scmp.lt.s32.totalorder %s16, 3
      %p242 = pnand %p240, %p241
      %p243 = pneg %p242
      // Predicated region
      $region45: #{cnn_forward.1} parent=5 // pred_check
        _
      $region46: #{cnn_forward.1} parent=5 // pred_check_branch
        %245 = sbr.rel (%p242) target = $region48
      $region47: #{cnn_forward.1} parent=5 // pred_region
        %s246 = ssub.s32 %s16, 1
        %s247 = smul.u32 8, %s21
        %p248 = scmp.lt.s32.totalorder %s247, 15
        %s249 = scalar_select %p248, %s247, 15
        %s250 = smul.addr %s249, 4
        %s251 = scalar_lea.vmem %s0, %s250
        %p252 = pneg %p42
        %p253 = pneg %p39
        %p254 = pneg %p63
        %p255 = pneg %p60
        %p256 = pneg %p84
        %p257 = pneg %p81
        %p258 = pneg %p105
        %p259 = pneg %p102
        %p260 = pneg %p126
        %p261 = pneg %p123
        %p262 = pneg %p147
        %p263 = pneg %p144
        %p264 = pneg %p168
        %p265 = pneg %p165
        %p266 = pneg %p194
        %p267 = pneg %p191
        %s268 = sand.u32 %s181, 1
        %s269 = scalar_lea.sflag [#allocation3], %s268
        %s270 = sand.u32 %s181, 1
        %s271 = smul.addr %s270, 64
        %s272 = scalar_lea.vmem [#allocation2], %s271
        %s273 = smul.u32 8, %s21
        %p274 = scmp.lt.s32.totalorder %s273, 15
        %s275 = scalar_select %p274, %s273, 15
        %s276 = smul.addr %s275, 4
        %s277 = scalar_lea.vmem %s0, %s276
        %s278 = smul.u32 8, %s21
        %s279 = smul.u32 8, %s21
        %v281 = vld [vmem:[%s277] sm:$0xf]
        %v282 = vld [vmem:[%s277 + $0x4] sm:$0xf]
        %v283 = vld [vmem:[%s277 + $0x8] sm:$0xf]
        %v284 = vld [vmem:[%s277 + $0xc] sm:$0xf]
        %v285 = vld [vmem:[%s277 + $0x10] sm:$0xf]
        %v286 = vld [vmem:[%s277 + $0x14] sm:$0xf]
        %v287 = vld [vmem:[%s277 + $0x18] sm:$0xf]
        %v288 = vld [vmem:[%s277 + $0x1c] sm:$0xf]
        %v289 = vld [vmem:[%s1] sm:$0xf]
        %v290 = vld [vmem:[%s1 + $0x4] sm:$0xf]
        %v291 = vld [vmem:[%s2] sm:$0x1]
        %v293 = vlaneseq
        %v294 = vshrl.u32 %v293, 7
        %v295 = vsub.s32 0, %v294
        %v296 = vrot.slane %v291, %v295
        %v306 = vunpack.c.l.b16 %v281
        %v307 = vunpack.c.l.b16 %v282
        %v308 = vunpack.c.l.b16 %v283
        %v309 = vunpack.c.l.b16 %v284
        %v310 = vunpack.c.l.b16 %v285
        %v311 = vunpack.c.l.b16 %v286
        %v312 = vunpack.c.l.b16 %v287
        %v313 = vunpack.c.l.b16 %v288
        %v314 = vpack.c.b16 %v307, %v306
        %v315 = vpack.c.b16 %v309, %v308
        %v316 = vpack.c.b16 %v311, %v310
        %v317 = vpack.c.b16 %v313, %v312
        %v320 = vunpack.c.l.b16 %v289
        %v321 = vunpack.c.l.b16 %v290
        %v322 = vpack.c.b16 %v321, %v320
        %vm324 = vcmask 130048
        %v326 = vsel %vm324, %v314, 0
        %v329 = vsel %vm324, %v315, 0
        %v332 = vsel %vm324, %v316, 0
        %v335 = vsel %vm324, %v317, 0
        %337 = vmatprep.subr.bf16.mxu0 0
        %338 = vmatpush1.bf16.msra.mxu0 %v322
        %339 = vmatprep.subr.bf16.mxu0 0
        %340 = vmatpush1.bf16.msra.mxu0 0
        %341 = vmatprep.subr.bf16.mxu0 0
        %342 = vmatpush1.bf16.msra.mxu0 0
        %343 = vmatprep.subr.bf16.mxu0 0
        %344 = vmatpush1.bf16.msra.mxu0 0
        %345 = vmatprep.subr.bf16.mxu0 0
        %346 = vmatpush1.bf16.msra.mxu0 0
        %347 = vmatprep.subr.bf16.mxu0 0
        %348 = vmatpush1.bf16.msra.mxu0 0
        %349 = vmatprep.subr.bf16.mxu0 0
        %350 = vmatpush1.bf16.msra.mxu0 0
        %351 = vmatprep.subr.bf16.mxu0 0
        %352 = vmatpush1.bf16.msra.mxu0 0
        %353 = vmatprep.subr.bf16.mxu0 0
        %354 = vmatpush1.bf16.msra.mxu0 0
        %355 = vmatprep.subr.bf16.mxu0 0
        %356 = vmatpush1.bf16.msra.mxu0 0
        %357 = vmatprep.subr.bf16.mxu0 0
        %358 = vmatpush1.bf16.msra.mxu0 0
        %359 = vmatprep.subr.bf16.mxu0 0
        %360 = vmatpush1.bf16.msra.mxu0 0
        %361 = vmatprep.subr.bf16.mxu0 0
        %362 = vmatpush1.bf16.msra.mxu0 0
        %363 = vmatprep.subr.bf16.mxu0 0
        %364 = vmatpush1.bf16.msra.mxu0 0
        %365 = vmatprep.subr.bf16.mxu0 0
        %366 = vmatpush1.bf16.msra.mxu0 0
        %367 = vmatprep.subr.bf16.mxu0 0
        %368 = vmatpush1.bf16.msra.mxu0 0
        %369 = vmatprep.mubr.bf16.mxu0 0
        %370 = vmatmul.mubr.bf16.gmra.mrb[0].mxu0 %v326
        %v371 = vpop.f32.mrb[0].mxu0
        %v372 = vadd.f32 %v296, %v371
        %v373 = vpop.f32.mrb[0].mxu0
        %v374 = vpop.f32.mrb[0].mxu0
        %v375 = vadd.f32 %v296, %v374
        %v376 = vpop.f32.mrb[0].mxu0
        %377 = vmatprep.mubr.bf16.mxu0 0
        %378 = vmatmul.mubr.bf16.gmra.mrb[0].mxu0 %v329
        %v379 = vpop.f32.mrb[0].mxu0
        %v380 = vadd.f32 %v296, %v379
        %v381 = vpop.f32.mrb[0].mxu0
        %v382 = vpop.f32.mrb[0].mxu0
        %v383 = vadd.f32 %v296, %v382
        %v384 = vpop.f32.mrb[0].mxu0
        %385 = vmatprep.mubr.bf16.mxu0 0
        %386 = vmatmul.mubr.bf16.gmra.mrb[0].mxu0 %v332
        %v387 = vpop.f32.mrb[0].mxu0
        %v388 = vadd.f32 %v296, %v387
        %v389 = vpop.f32.mrb[0].mxu0
        %v390 = vpop.f32.mrb[0].mxu0
        %v391 = vadd.f32 %v296, %v390
        %v392 = vpop.f32.mrb[0].mxu0
        %393 = vmatprep.mubr.bf16.mxu0 0
        %394 = vmatmul.mubr.bf16.gmra.mrb[0].mxu0 %v335
        %v395 = vpop.f32.mrb[0].mxu0
        %v396 = vadd.f32 %v296, %v395
        %v397 = vpop.f32.mrb[0].mxu0
        %v398 = vpop.f32.mrb[0].mxu0
        %v399 = vadd.f32 %v296, %v398
        %v400 = vpop.f32.mrb[0].mxu0
        %401 = vdwg.mxu0
        %v402 = vmax.f32 %v372, 0.0
        %v403 = vmax.f32 %v375, 0.0
        %v404 = vmax.f32 %v380, 0.0
        %v405 = vmax.f32 %v383, 0.0
        %v406 = vmax.f32 %v388, 0.0
        %v407 = vmax.f32 %v391, 0.0
        %v408 = vmax.f32 %v396, 0.0
        %v409 = vmax.f32 %v399, 0.0
        %v410 = vlaneseq
        %v411 = vshrl.u32 %v410, 7
        %v412 = vadd.s32 %v411, 8
        %v413 = vadd.s32 %v411, 16
        %v414 = vadd.s32 %v411, 24
        %v415 = vadd.s32 %v411, 32
        %v416 = vadd.s32 %v411, 40
        %v417 = vadd.s32 %v411, 48
        %v418 = vadd.s32 %v411, 56
        %v419 = vand.u32 %v411, 63
        %v420 = vand.u32 %v412, 63
        %v421 = vand.u32 %v413, 63
        %v422 = vand.u32 %v414, 63
        %v423 = vand.u32 %v415, 63
        %v424 = vand.u32 %v416, 63
        %v425 = vand.u32 %v417, 63
        %v426 = vand.u32 %v418, 63
        %v427 = vshra.s32 %v419, 3
        %v428 = vshra.s32 %v420, 3
        %v429 = vshra.s32 %v421, 3
        %v430 = vshra.s32 %v422, 3
        %v431 = vshra.s32 %v423, 3
        %v432 = vshra.s32 %v424, 3
        %v433 = vshra.s32 %v425, 3
        %v434 = vshra.s32 %v426, 3
        %v435 = vand.u32 %v419, 7
        %v436 = vand.u32 %v420, 7
        %v437 = vand.u32 %v421, 7
        %v438 = vand.u32 %v422, 7
        %v439 = vand.u32 %v423, 7
        %v440 = vand.u32 %v424, 7
        %v441 = vand.u32 %v425, 7
        %v442 = vand.u32 %v426, 7
        %vm443 = vcmp.ge.s32.totalorder %v427, 1
        %vm444 = vcmp.ge.s32.totalorder %v428, 1
        %vm445 = vcmp.ge.s32.totalorder %v429, 1
        %vm446 = vcmp.ge.s32.totalorder %v430, 1
        %vm447 = vcmp.ge.s32.totalorder %v431, 1
        %vm448 = vcmp.ge.s32.totalorder %v432, 1
        %vm449 = vcmp.ge.s32.totalorder %v433, 1
        %vm450 = vcmp.ge.s32.totalorder %v434, 1
        %vm451 = vcmp.lt.s32.totalorder %v427, 7
        %vm452 = vcmp.lt.s32.totalorder %v428, 7
        %vm453 = vcmp.lt.s32.totalorder %v429, 7
        %vm454 = vcmp.lt.s32.totalorder %v430, 7
        %vm455 = vcmp.lt.s32.totalorder %v431, 7
        %vm456 = vcmp.lt.s32.totalorder %v432, 7
        %vm457 = vcmp.lt.s32.totalorder %v433, 7
        %vm458 = vcmp.lt.s32.totalorder %v434, 7
        %vm459 = vcmp.ge.s32.totalorder %v435, 1
        %vm460 = vcmp.ge.s32.totalorder %v436, 1
        %vm461 = vcmp.ge.s32.totalorder %v437, 1
        %vm462 = vcmp.ge.s32.totalorder %v438, 1
        %vm463 = vcmp.ge.s32.totalorder %v439, 1
        %vm464 = vcmp.ge.s32.totalorder %v440, 1
        %vm465 = vcmp.ge.s32.totalorder %v441, 1
        %vm466 = vcmp.ge.s32.totalorder %v442, 1
        %vm467 = vcmp.lt.s32.totalorder %v435, 7
        %vm468 = vcmp.lt.s32.totalorder %v436, 7
        %vm469 = vcmp.lt.s32.totalorder %v437, 7
        %vm470 = vcmp.lt.s32.totalorder %v438, 7
        %vm471 = vcmp.lt.s32.totalorder %v439, 7
        %vm472 = vcmp.lt.s32.totalorder %v440, 7
        %vm473 = vcmp.lt.s32.totalorder %v441, 7
        %vm474 = vcmp.lt.s32.totalorder %v442, 7
        %v475 = vrot.slane %v402, 7
        %v476 = vrot.slane %v403, 7
        %v477 = vrot.slane %v404, 7
        %v478 = vrot.slane %v405, 7
        %v479 = vrot.slane %v406, 7
        %v480 = vrot.slane %v407, 7
        %v481 = vrot.slane %v408, 7
        %v482 = vrot.slane %v409, 7
        %vm483 = vcmp.lt.s32.totalorder %v411, 1
        %v484 = vsel %vm483, %v481, %v482
        %v485 = vsel %vm483, %v480, %v481
        %v486 = vsel %vm483, %v479, %v480
        %v487 = vsel %vm483, %v478, %v479
        %v488 = vsel %vm483, %v477, %v478
        %v489 = vsel %vm483, %v476, %v477
        %v490 = vsel %vm483, %v475, %v476
        %v491 = vsel %vm483, %v482, %v475
        %vm492 = vmand %vm443, %vm459
        %vm493 = vmand %vm444, %vm460
        %vm494 = vmand %vm445, %vm461
        %vm495 = vmand %vm446, %vm462
        %vm496 = vmand %vm447, %vm463
        %vm497 = vmand %vm448, %vm464
        %vm498 = vmand %vm449, %vm465
        %vm499 = vmand %vm450, %vm466
        %v500 = vsel %vm492, %v484, 0.0
        %v501 = vsel %vm493, %v491, 0.0
        %v502 = vsel %vm494, %v490, 0.0
        %v503 = vsel %vm495, %v489, 0.0
        %v504 = vsel %vm496, %v488, 0.0
        %v505 = vsel %vm497, %v487, 0.0
        %v506 = vsel %vm498, %v486, 0.0
        %v507 = vsel %vm499, %v485, 0.0
        %v508 = vpack.c.bf16 %v501, %v500
        %v509 = vpack.c.bf16 %v503, %v502
        %v510 = vpack.c.bf16 %v505, %v504
        %v511 = vpack.c.bf16 %v507, %v506
        %v512 = vld [vmem:[%s3] sm:$0xf]
        %v513 = vld [vmem:[%s3 + $0x4] sm:$0xf]
        %v514 = vld [vmem:[%s3 + $0x8] sm:$0xf]
        %v515 = vld [vmem:[%s3 + $0xc] sm:$0xf]
        %v516 = vld [vmem:[%s3 + $0x10] sm:$0xf]
        %v517 = vld [vmem:[%s3 + $0x14] sm:$0xf]
        %v518 = vld [vmem:[%s3 + $0x18] sm:$0xf]
        %v519 = vld [vmem:[%s3 + $0x1c] sm:$0xf]
        %v520 = vld [vmem:[%s3 + $0x20] sm:$0xf]
        %v521 = vld [vmem:[%s3 + $0x24] sm:$0xf]
        %v522 = vld [vmem:[%s3 + $0x28] sm:$0xf]
        %v523 = vld [vmem:[%s3 + $0x2c] sm:$0xf]
        %v524 = vld [vmem:[%s3 + $0x30] sm:$0xf]
        %v525 = vld [vmem:[%s3 + $0x34] sm:$0xf]
        %v526 = vld [vmem:[%s3 + $0x38] sm:$0xf]
        %v527 = vld [vmem:[%s3 + $0x3c] sm:$0xf]
        %v528 = vsel %vm443, %v409, 0.0
        %v529 = vsel %vm444, %v402, 0.0
        %v530 = vsel %vm445, %v403, 0.0
        %v531 = vsel %vm446, %v404, 0.0
        %v532 = vsel %vm447, %v405, 0.0
        %v533 = vsel %vm448, %v406, 0.0
        %v534 = vsel %vm449, %v407, 0.0
        %v535 = vsel %vm450, %v408, 0.0
        %v536 = vpack.c.bf16 %v529, %v528
        %v537 = vpack.c.bf16 %v531, %v530
        %v538 = vpack.c.bf16 %v533, %v532
        %v539 = vpack.c.bf16 %v535, %v534
        %s540 = scalar_lea.vmem %s3, 64
        %v541 = vld [vmem:[%s540] sm:$0xf]
        %v542 = vld [vmem:[%s540 + $0x4] sm:$0xf]
        %v543 = vld [vmem:[%s540 + $0x8] sm:$0xf]
        %v544 = vld [vmem:[%s540 + $0xc] sm:$0xf]
        %v545 = vld [vmem:[%s540 + $0x10] sm:$0xf]
        %v546 = vld [vmem:[%s540 + $0x14] sm:$0xf]
        %v547 = vld [vmem:[%s540 + $0x18] sm:$0xf]
        %v548 = vld [vmem:[%s540 + $0x1c] sm:$0xf]
        %v549 = vld [vmem:[%s540 + $0x20] sm:$0xf]
        %v550 = vld [vmem:[%s540 + $0x24] sm:$0xf]
        %v551 = vld [vmem:[%s540 + $0x28] sm:$0xf]
        %v552 = vld [vmem:[%s540 + $0x2c] sm:$0xf]
        %v553 = vld [vmem:[%s540 + $0x30] sm:$0xf]
        %v554 = vld [vmem:[%s540 + $0x34] sm:$0xf]
        %v555 = vld [vmem:[%s540 + $0x38] sm:$0xf]
        %v556 = vld [vmem:[%s540 + $0x3c] sm:$0xf]
        %v573 = vunpack.c.l.b16 %v541
        %v574 = vunpack.c.l.b16 %v542
        %v575 = vunpack.c.l.b16 %v543
        %v576 = vunpack.c.l.b16 %v544
        %v577 = vunpack.c.l.b16 %v545
        %v578 = vunpack.c.l.b16 %v546
        %v579 = vunpack.c.l.b16 %v547
        %v580 = vunpack.c.l.b16 %v548
        %v581 = vunpack.c.l.b16 %v549
        %v582 = vunpack.c.l.b16 %v550
        %v583 = vunpack.c.l.b16 %v551
        %v584 = vunpack.c.l.b16 %v552
        %v585 = vunpack.c.l.b16 %v553
        %v586 = vunpack.c.l.b16 %v554
        %v587 = vunpack.c.l.b16 %v555
        %v588 = vunpack.c.l.b16 %v556
        %v589 = vpack.c.b16 %v574, %v573
        %v590 = vpack.c.b16 %v576, %v575
        %v591 = vpack.c.b16 %v578, %v577
        %v592 = vpack.c.b16 %v580, %v579
        %v593 = vpack.c.b16 %v582, %v581
        %v594 = vpack.c.b16 %v584, %v583
        %v595 = vpack.c.b16 %v586, %v585
        %v596 = vpack.c.b16 %v588, %v587
        %605 = vmatprep.subr.bf16.mxu0 0
        %606 = vmatpush1.bf16.msra.mxu0 %v589
        %607 = vmatprep.subr.bf16.mxu0 0
        %608 = vmatpush1.bf16.msra.mxu0 %v590
        %609 = vmatprep.subr.bf16.mxu0 0
        %610 = vmatpush1.bf16.msra.mxu0 %v591
        %611 = vmatprep.subr.bf16.mxu0 0
        %612 = vmatpush1.bf16.msra.mxu0 %v592
        %613 = vmatprep.subr.bf16.mxu0 0
        %614 = vmatpush1.bf16.msra.mxu0 %v593
        %615 = vmatprep.subr.bf16.mxu0 0
        %616 = vmatpush1.bf16.msra.mxu0 %v594
        %617 = vmatprep.subr.bf16.mxu0 0
        %618 = vmatpush1.bf16.msra.mxu0 %v595
        %619 = vmatprep.subr.bf16.mxu0 0
        %620 = vmatpush1.bf16.msra.mxu0 %v596
        %621 = vmatprep.subr.bf16.mxu0 0
        %622 = vmatpush1.bf16.msra.mxu0 0
        %623 = vmatprep.subr.bf16.mxu0 0
        %624 = vmatpush1.bf16.msra.mxu0 0
        %625 = vmatprep.subr.bf16.mxu0 0
        %626 = vmatpush1.bf16.msra.mxu0 0
        %627 = vmatprep.subr.bf16.mxu0 0
        %628 = vmatpush1.bf16.msra.mxu0 0
        %629 = vmatprep.subr.bf16.mxu0 0
        %630 = vmatpush1.bf16.msra.mxu0 0
        %631 = vmatprep.subr.bf16.mxu0 0
        %632 = vmatpush1.bf16.msra.mxu0 0
        %633 = vmatprep.subr.bf16.mxu0 0
        %634 = vmatpush1.bf16.msra.mxu0 0
        %635 = vmatprep.subr.bf16.mxu0 0
        %636 = vmatpush1.bf16.msra.mxu0 0
        %637 = vmatprep.mubr.bf16.mxu0 0
        %638 = vmatmul.mubr.bf16.gmra.mrb[0].mxu0 %v536
        %v639 = vpop.f32.mrb[0].mxu0
        %v640 = vadd.f32 0.0, %v639
        %v641 = vpop.f32.mrb[0].mxu0
        %v642 = vpop.f32.mrb[0].mxu0
        %v643 = vadd.f32 0.0, %v642
        %v644 = vpop.f32.mrb[0].mxu0
        %645 = vmatprep.mubr.bf16.mxu0 0
        %646 = vmatmul.mubr.bf16.gmra.mrb[0].mxu0 %v537
        %v647 = vpop.f32.mrb[0].mxu0
        %v648 = vadd.f32 0.0, %v647
        %v649 = vpop.f32.mrb[0].mxu0
        %v650 = vpop.f32.mrb[0].mxu0
        %v651 = vadd.f32 0.0, %v650
        %v652 = vpop.f32.mrb[0].mxu0
        %653 = vmatprep.mubr.bf16.mxu0 0
        %654 = vmatmul.mubr.bf16.gmra.mrb[0].mxu0 %v538
        %v655 = vpop.f32.mrb[0].mxu0
        %v656 = vadd.f32 0.0, %v655
        %v657 = vpop.f32.mrb[0].mxu0
        %v658 = vpop.f32.mrb[0].mxu0
        %v659 = vadd.f32 0.0, %v658
        %v660 = vpop.f32.mrb[0].mxu0
        %661 = vmatprep.mubr.bf16.mxu0 0
        %662 = vmatmul.mubr.bf16.gmra.mrb[0].mxu0 %v539
        %v663 = vpop.f32.mrb[0].mxu0
        %v664 = vadd.f32 0.0, %v663
        %v665 = vpop.f32.mrb[0].mxu0
        %v666 = vpop.f32.mrb[0].mxu0
        %v667 = vadd.f32 0.0, %v666
        %v668 = vpop.f32.mrb[0].mxu0
        %669 = vdwg.mxu0
        %v686 = vunpack.c.l.b16 %v512
        %v687 = vunpack.c.l.b16 %v513
        %v688 = vunpack.c.l.b16 %v514
        %v689 = vunpack.c.l.b16 %v515
        %v690 = vunpack.c.l.b16 %v516
        %v691 = vunpack.c.l.b16 %v517
        %v692 = vunpack.c.l.b16 %v518
        %v693 = vunpack.c.l.b16 %v519
        %v694 = vunpack.c.l.b16 %v520
        %v695 = vunpack.c.l.b16 %v521
        %v696 = vunpack.c.l.b16 %v522
        %v697 = vunpack.c.l.b16 %v523
        %v698 = vunpack.c.l.b16 %v524
        %v699 = vunpack.c.l.b16 %v525
        %v700 = vunpack.c.l.b16 %v526
        %v701 = vunpack.c.l.b16 %v527
        %v702 = vpack.c.b16 %v687, %v686
        %v703 = vpack.c.b16 %v689, %v688
        %v704 = vpack.c.b16 %v691, %v690
        %v705 = vpack.c.b16 %v693, %v692
        %v706 = vpack.c.b16 %v695, %v694
        %v707 = vpack.c.b16 %v697, %v696
        %v708 = vpack.c.b16 %v699, %v698
        %v709 = vpack.c.b16 %v701, %v700
        %718 = vmatprep.subr.bf16.mxu0 0
        %719 = vmatpush1.bf16.msra.mxu0 %v702
        %720 = vmatprep.subr.bf16.mxu0 0
        %721 = vmatpush1.bf16.msra.mxu0 %v703
        %722 = vmatprep.subr.bf16.mxu0 0
        %723 = vmatpush1.bf16.msra.mxu0 %v704
        %724 = vmatprep.subr.bf16.mxu0 0
        %725 = vmatpush1.bf16.msra.mxu0 %v705
        %726 = vmatprep.subr.bf16.mxu0 0
        %727 = vmatpush1.bf16.msra.mxu0 %v706
        %728 = vmatprep.subr.bf16.mxu0 0
        %729 = vmatpush1.bf16.msra.mxu0 %v707
        %730 = vmatprep.subr.bf16.mxu0 0
        %731 = vmatpush1.bf16.msra.mxu0 %v708
        %732 = vmatprep.subr.bf16.mxu0 0
        %733 = vmatpush1.bf16.msra.mxu0 %v709
        %734 = vmatprep.subr.bf16.mxu0 0
        %735 = vmatpush1.bf16.msra.mxu0 0
        %736 = vmatprep.subr.bf16.mxu0 0
        %737 = vmatpush1.bf16.msra.mxu0 0
        %738 = vmatprep.subr.bf16.mxu0 0
        %739 = vmatpush1.bf16.msra.mxu0 0
        %740 = vmatprep.subr.bf16.mxu0 0
        %741 = vmatpush1.bf16.msra.mxu0 0
        %742 = vmatprep.subr.bf16.mxu0 0
        %743 = vmatpush1.bf16.msra.mxu0 0
        %744 = vmatprep.subr.bf16.mxu0 0
        %745 = vmatpush1.bf16.msra.mxu0 0
        %746 = vmatprep.subr.bf16.mxu0 0
        %747 = vmatpush1.bf16.msra.mxu0 0
        %748 = vmatprep.subr.bf16.mxu0 0
        %749 = vmatpush1.bf16.msra.mxu0 0
        %750 = vmatprep.mubr.bf16.mxu0 0
        %751 = vmatmul.mubr.bf16.gmra.mrb[0].mxu0 %v508
        %v752 = vpop.f32.mrb[0].mxu0
        %v753 = vadd.f32 %v640, %v752
        %v754 = vpop.f32.mrb[0].mxu0
        %v755 = vpop.f32.mrb[0].mxu0
        %v756 = vadd.f32 %v643, %v755
        %v757 = vpop.f32.mrb[0].mxu0
        %758 = vmatprep.mubr.bf16.mxu0 0
        %759 = vmatmul.mubr.bf16.gmra.mrb[0].mxu0 %v509
        %v760 = vpop.f32.mrb[0].mxu0
        %v761 = vadd.f32 %v648, %v760
        %v762 = vpop.f32.mrb[0].mxu0
        %v763 = vpop.f32.mrb[0].mxu0
        %v764 = vadd.f32 %v651, %v763
        %v765 = vpop.f32.mrb[0].mxu0
        %766 = vmatprep.mubr.bf16.mxu0 0
        %767 = vmatmul.mubr.bf16.gmra.mrb[0].mxu0 %v510
        %v768 = vpop.f32.mrb[0].mxu0
        %v769 = vadd.f32 %v656, %v768
        %v770 = vpop.f32.mrb[0].mxu0
        %v771 = vpop.f32.mrb[0].mxu0
        %v772 = vadd.f32 %v659, %v771
        %v773 = vpop.f32.mrb[0].mxu0
        %774 = vmatprep.mubr.bf16.mxu0 0
        %775 = vmatmul.mubr.bf16.gmra.mrb[0].mxu0 %v511
        %v776 = vpop.f32.mrb[0].mxu0
        %v777 = vadd.f32 %v664, %v776
        %v778 = vpop.f32.mrb[0].mxu0
        %v779 = vpop.f32.mrb[0].mxu0
        %v780 = vadd.f32 %v667, %v779
        %v781 = vpop.f32.mrb[0].mxu0
        %782 = vdwg.mxu0
        %v783 = vrot.slane %v402, 1
        %v784 = vrot.slane %v403, 1
        %v785 = vrot.slane %v404, 1
        %v786 = vrot.slane %v405, 1
        %v787 = vrot.slane %v406, 1
        %v788 = vrot.slane %v407, 1
        %v789 = vrot.slane %v408, 1
        %v790 = vrot.slane %v409, 1
        %vm791 = vcmp.lt.s32.totalorder %v411, 7
        %v792 = vsel %vm791, %v789, %v790
        %v793 = vsel %vm791, %v788, %v789
        %v794 = vsel %vm791, %v787, %v788
        %v795 = vsel %vm791, %v786, %v787
        %v796 = vsel %vm791, %v785, %v786
        %v797 = vsel %vm791, %v784, %v785
        %v798 = vsel %vm791, %v783, %v784
        %v799 = vsel %vm791, %v790, %v783
        %vm800 = vmand %vm443, %vm467
        %vm801 = vmand %vm444, %vm468
        %vm802 = vmand %vm445, %vm469
        %vm803 = vmand %vm446, %vm470
        %vm804 = vmand %vm447, %vm471
        %vm805 = vmand %vm448, %vm472
        %vm806 = vmand %vm449, %vm473
        %vm807 = vmand %vm450, %vm474
        %v808 = vsel %vm800, %v799, 0.0
        %v809 = vsel %vm801, %v798, 0.0
        %v810 = vsel %vm802, %v797, 0.0
        %v811 = vsel %vm803, %v796, 0.0
        %v812 = vsel %vm804, %v795, 0.0
        %v813 = vsel %vm805, %v794, 0.0
        %v814 = vsel %vm806, %v793, 0.0
        %v815 = vsel %vm807, %v792, 0.0
        %v816 = vpack.c.bf16 %v809, %v808
        %v817 = vpack.c.bf16 %v811, %v810
        %v818 = vpack.c.bf16 %v813, %v812
        %v819 = vpack.c.bf16 %v815, %v814
        %s820 = scalar_lea.vmem %s3, 128
        %v821 = vld [vmem:[%s820] sm:$0xf]
        %v822 = vld [vmem:[%s820 + $0x4] sm:$0xf]
        %v823 = vld [vmem:[%s820 + $0x8] sm:$0xf]
        %v824 = vld [vmem:[%s820 + $0xc] sm:$0xf]
        %v825 = vld [vmem:[%s820 + $0x10] sm:$0xf]
        %v826 = vld [vmem:[%s820 + $0x14] sm:$0xf]
        %v827 = vld [vmem:[%s820 + $0x18] sm:$0xf]
        %v828 = vld [vmem:[%s820 + $0x1c] sm:$0xf]
        %v829 = vld [vmem:[%s820 + $0x20] sm:$0xf]
        %v830 = vld [vmem:[%s820 + $0x24] sm:$0xf]
        %v831 = vld [vmem:[%s820 + $0x28] sm:$0xf]
        %v832 = vld [vmem:[%s820 + $0x2c] sm:$0xf]
        %v833 = vld [vmem:[%s820 + $0x30] sm:$0xf]
        %v834 = vld [vmem:[%s820 + $0x34] sm:$0xf]
        %v835 = vld [vmem:[%s820 + $0x38] sm:$0xf]
        %v836 = vld [vmem:[%s820 + $0x3c] sm:$0xf]
        %v853 = vunpack.c.l.b16 %v821
        %v854 = vunpack.c.l.b16 %v822
        %v855 = vunpack.c.l.b16 %v823
        %v856 = vunpack.c.l.b16 %v824
        %v857 = vunpack.c.l.b16 %v825
        %v858 = vunpack.c.l.b16 %v826
        %v859 = vunpack.c.l.b16 %v827
        %v860 = vunpack.c.l.b16 %v828
        %v861 = vunpack.c.l.b16 %v829
        %v862 = vunpack.c.l.b16 %v830
        %v863 = vunpack.c.l.b16 %v831
        %v864 = vunpack.c.l.b16 %v832
        %v865 = vunpack.c.l.b16 %v833
        %v866 = vunpack.c.l.b16 %v834
        %v867 = vunpack.c.l.b16 %v835
        %v868 = vunpack.c.l.b16 %v836
        %v869 = vpack.c.b16 %v854, %v853
        %v870 = vpack.c.b16 %v856, %v855
        %v871 = vpack.c.b16 %v858, %v857
        %v872 = vpack.c.b16 %v860, %v859
        %v873 = vpack.c.b16 %v862, %v861
        %v874 = vpack.c.b16 %v864, %v863
        %v875 = vpack.c.b16 %v866, %v865
        %v876 = vpack.c.b16 %v868, %v867
        %885 = vmatprep.subr.bf16.mxu0 0
        %886 = vmatpush1.bf16.msra.mxu0 %v869
        %887 = vmatprep.subr.bf16.mxu0 0
        %888 = vmatpush1.bf16.msra.mxu0 %v870
        %889 = vmatprep.subr.bf16.mxu0 0
        %890 = vmatpush1.bf16.msra.mxu0 %v871
        %891 = vmatprep.subr.bf16.mxu0 0
        %892 = vmatpush1.bf16.msra.mxu0 %v872
        %893 = vmatprep.subr.bf16.mxu0 0
        %894 = vmatpush1.bf16.msra.mxu0 %v873
        %895 = vmatprep.subr.bf16.mxu0 0
        %896 = vmatpush1.bf16.msra.mxu0 %v874
        %897 = vmatprep.subr.bf16.mxu0 0
        %898 = vmatpush1.bf16.msra.mxu0 %v875
        %899 = vmatprep.subr.bf16.mxu0 0
        %900 = vmatpush1.bf16.msra.mxu0 %v876
        %901 = vmatprep.subr.bf16.mxu0 0
        %902 = vmatpush1.bf16.msra.mxu0 0
        %903 = vmatprep.subr.bf16.mxu0 0
        %904 = vmatpush1.bf16.msra.mxu0 0
        %905 = vmatprep.subr.bf16.mxu0 0
        %906 = vmatpush1.bf16.msra.mxu0 0
        %907 = vmatprep.subr.bf16.mxu0 0
        %908 = vmatpush1.bf16.msra.mxu0 0
        %909 = vmatprep.subr.bf16.mxu0 0
        %910 = vmatpush1.bf16.msra.mxu0 0
        %911 = vmatprep.subr.bf16.mxu0 0
        %912 = vmatpush1.bf16.msra.mxu0 0
        %913 = vmatprep.subr.bf16.mxu0 0
        %914 = vmatpush1.bf16.msra.mxu0 0
        %915 = vmatprep.subr.bf16.mxu0 0
        %916 = vmatpush1.bf16.msra.mxu0 0
        %917 = vmatprep.mubr.bf16.mxu0 0
        %918 = vmatmul.mubr.bf16.gmra.mrb[0].mxu0 %v816
        %v919 = vpop.f32.mrb[0].mxu0
        %v920 = vadd.f32 0.0, %v919
        %v921 = vpop.f32.mrb[0].mxu0
        %v922 = vpop.f32.mrb[0].mxu0
        %v923 = vadd.f32 0.0, %v922
        %v924 = vpop.f32.mrb[0].mxu0
        %925 = vmatprep.mubr.bf16.mxu0 0
        %926 = vmatmul.mubr.bf16.gmra.mrb[0].mxu0 %v817
        %v927 = vpop.f32.mrb[0].mxu0
        %v928 = vadd.f32 0.0, %v927
        %v929 = vpop.f32.mrb[0].mxu0
        %v930 = vpop.f32.mrb[0].mxu0
        %v931 = vadd.f32 0.0, %v930
        %v932 = vpop.f32.mrb[0].mxu0
        %933 = vmatprep.mubr.bf16.mxu0 0
        %934 = vmatmul.mubr.bf16.gmra.mrb[0].mxu0 %v818
        %v935 = vpop.f32.mrb[0].mxu0
        %v936 = vadd.f32 0.0, %v935
        %v937 = vpop.f32.mrb[0].mxu0
        %v938 = vpop.f32.mrb[0].mxu0
        %v939 = vadd.f32 0.0, %v938
        %v940 = vpop.f32.mrb[0].mxu0
        %941 = vmatprep.mubr.bf16.mxu0 0
        %942 = vmatmul.mubr.bf16.gmra.mrb[0].mxu0 %v819
        %v943 = vpop.f32.mrb[0].mxu0
        %v944 = vadd.f32 0.0, %v943
        %v945 = vpop.f32.mrb[0].mxu0
        %v946 = vpop.f32.mrb[0].mxu0
        %v947 = vadd.f32 0.0, %v946
        %v948 = vpop.f32.mrb[0].mxu0
        %949 = vdwg.mxu0
        %v950 = vadd.f32 %v753, %v920
        %v951 = vadd.f32 %v756, %v923
        %v952 = vadd.f32 %v761, %v928
        %v953 = vadd.f32 %v764, %v931
        %v954 = vadd.f32 %v769, %v936
        %v955 = vadd.f32 %v772, %v939
        %v956 = vadd.f32 %v777, %v944
        %v957 = vadd.f32 %v780, %v947
        %v958 = vsel %vm459, %v491, 0.0
        %v959 = vsel %vm460, %v490, 0.0
        %v960 = vsel %vm461, %v489, 0.0
        %v961 = vsel %vm462, %v488, 0.0
        %v962 = vsel %vm463, %v487, 0.0
        %v963 = vsel %vm464, %v486, 0.0
        %v964 = vsel %vm465, %v485, 0.0
        %v965 = vsel %vm466, %v484, 0.0
        %v966 = vpack.c.bf16 %v959, %v958
        %v967 = vpack.c.bf16 %v961, %v960
        %v968 = vpack.c.bf16 %v963, %v962
        %v969 = vpack.c.bf16 %v965, %v964
        %s970 = scalar_lea.vmem %s3, 192
        %v971 = vld [vmem:[%s970] sm:$0xf]
        %v972 = vld [vmem:[%s970 + $0x4] sm:$0xf]
        %v973 = vld [vmem:[%s970 + $0x8] sm:$0xf]
        %v974 = vld [vmem:[%s970 + $0xc] sm:$0xf]
        %v975 = vld [vmem:[%s970 + $0x10] sm:$0xf]
        %v976 = vld [vmem:[%s970 + $0x14] sm:$0xf]
        %v977 = vld [vmem:[%s970 + $0x18] sm:$0xf]
        %v978 = vld [vmem:[%s970 + $0x1c] sm:$0xf]
        %v979 = vld [vmem:[%s970 + $0x20] sm:$0xf]
        %v980 = vld [vmem:[%s970 + $0x24] sm:$0xf]
        %v981 = vld [vmem:[%s970 + $0x28] sm:$0xf]
        %v982 = vld [vmem:[%s970 + $0x2c] sm:$0xf]
        %v983 = vld [vmem:[%s970 + $0x30] sm:$0xf]
        %v984 = vld [vmem:[%s970 + $0x34] sm:$0xf]
        %v985 = vld [vmem:[%s970 + $0x38] sm:$0xf]
        %v986 = vld [vmem:[%s970 + $0x3c] sm:$0xf]
        %v1003 = vunpack.c.l.b16 %v971
        %v1004 = vunpack.c.l.b16 %v972
        %v1005 = vunpack.c.l.b16 %v973
        %v1006 = vunpack.c.l.b16 %v974
        %v1007 = vunpack.c.l.b16 %v975
        %v1008 = vunpack.c.l.b16 %v976
        %v1009 = vunpack.c.l.b16 %v977
        %v1010 = vunpack.c.l.b16 %v978
        %v1011 = vunpack.c.l.b16 %v979
        %v1012 = vunpack.c.l.b16 %v980
        %v1013 = vunpack.c.l.b16 %v981
        %v1014 = vunpack.c.l.b16 %v982
        %v1015 = vunpack.c.l.b16 %v983
        %v1016 = vunpack.c.l.b16 %v984
        %v1017 = vunpack.c.l.b16 %v985
        %v1018 = vunpack.c.l.b16 %v986
        %v1019 = vpack.c.b16 %v1004, %v1003
        %v1020 = vpack.c.b16 %v1006, %v1005
        %v1021 = vpack.c.b16 %v1008, %v1007
        %v1022 = vpack.c.b16 %v1010, %v1009
        %v1023 = vpack.c.b16 %v1012, %v1011
        %v1024 = vpack.c.b16 %v1014, %v1013
        %v1025 = vpack.c.b16 %v1016, %v1015
        %v1026 = vpack.c.b16 %v1018, %v1017
        %1035 = vmatprep.subr.bf16.mxu0 0
        %1036 = vmatpush1.bf16.msra.mxu0 %v1019
        %1037 = vmatprep.subr.bf16.mxu0 0
        %1038 = vmatpush1.bf16.msra.mxu0 %v1020
        %1039 = vmatprep.subr.bf16.mxu0 0
        %1040 = vmatpush1.bf16.msra.mxu0 %v1021
        %1041 = vmatprep.subr.bf16.mxu0 0
        %1042 = vmatpush1.bf16.msra.mxu0 %v1022
        %1043 = vmatprep.subr.bf16.mxu0 0
        %1044 = vmatpush1.bf16.msra.mxu0 %v1023
        %1045 = vmatprep.subr.bf16.mxu0 0
        %1046 = vmatpush1.bf16.msra.mxu0 %v1024
        %1047 = vmatprep.subr.bf16.mxu0 0
        %1048 = vmatpush1.bf16.msra.mxu0 %v1025
        %1049 = vmatprep.subr.bf16.mxu0 0
        %1050 = vmatpush1.bf16.msra.mxu0 %v1026
        %1051 = vmatprep.subr.bf16.mxu0 0
        %1052 = vmatpush1.bf16.msra.mxu0 0
        %1053 = vmatprep.subr.bf16.mxu0 0
        %1054 = vmatpush1.bf16.msra.mxu0 0
        %1055 = vmatprep.subr.bf16.mxu0 0
        %1056 = vmatpush1.bf16.msra.mxu0 0
        %1057 = vmatprep.subr.bf16.mxu0 0
        %1058 = vmatpush1.bf16.msra.mxu0 0
        %1059 = vmatprep.subr.bf16.mxu0 0
        %1060 = vmatpush1.bf16.msra.mxu0 0
        %1061 = vmatprep.subr.bf16.mxu0 0
        %1062 = vmatpush1.bf16.msra.mxu0 0
        %1063 = vmatprep.subr.bf16.mxu0 0
        %1064 = vmatpush1.bf16.msra.mxu0 0
        %1065 = vmatprep.subr.bf16.mxu0 0
        %1066 = vmatpush1.bf16.msra.mxu0 0
        %1067 = vmatprep.mubr.bf16.mxu0 0
        %1068 = vmatmul.mubr.bf16.gmra.mrb[0].mxu0 %v966
        %v1069 = vpop.f32.mrb[0].mxu0
        %v1070 = vadd.f32 0.0, %v1069
        %v1071 = vpop.f32.mrb[0].mxu0
        %v1072 = vpop.f32.mrb[0].mxu0
        %v1073 = vadd.f32 0.0, %v1072
        %v1074 = vpop.f32.mrb[0].mxu0
        %1075 = vmatprep.mubr.bf16.mxu0 0
        %1076 = vmatmul.mubr.bf16.gmra.mrb[0].mxu0 %v967
        %v1077 = vpop.f32.mrb[0].mxu0
        %v1078 = vadd.f32 0.0, %v1077
        %v1079 = vpop.f32.mrb[0].mxu0
        %v1080 = vpop.f32.mrb[0].mxu0
        %v1081 = vadd.f32 0.0, %v1080
        %v1082 = vpop.f32.mrb[0].mxu0
        %1083 = vmatprep.mubr.bf16.mxu0 0
        %1084 = vmatmul.mubr.bf16.gmra.mrb[0].mxu0 %v968
        %v1085 = vpop.f32.mrb[0].mxu0
        %v1086 = vadd.f32 0.0, %v1085
        %v1087 = vpop.f32.mrb[0].mxu0
        %v1088 = vpop.f32.mrb[0].mxu0
        %v1089 = vadd.f32 0.0, %v1088
        %v1090 = vpop.f32.mrb[0].mxu0
        %1091 = vmatprep.mubr.bf16.mxu0 0
        %1092 = vmatmul.mubr.bf16.gmra.mrb[0].mxu0 %v969
        %v1093 = vpop.f32.mrb[0].mxu0
        %v1094 = vadd.f32 0.0, %v1093
        %v1095 = vpop.f32.mrb[0].mxu0
        %v1096 = vpop.f32.mrb[0].mxu0
        %v1097 = vadd.f32 0.0, %v1096
        %v1098 = vpop.f32.mrb[0].mxu0
        %1099 = vdwg.mxu0
        %v1100 = vadd.f32 %v950, %v1070
        %v1101 = vadd.f32 %v951, %v1073
        %v1102 = vadd.f32 %v952, %v1078
        %v1103 = vadd.f32 %v953, %v1081
        %v1104 = vadd.f32 %v954, %v1086
        %v1105 = vadd.f32 %v955, %v1089
        %v1106 = vadd.f32 %v956, %v1094
        %v1107 = vadd.f32 %v957, %v1097
        %v1108 = vpack.c.bf16 %v403, %v402
        %v1109 = vpack.c.bf16 %v405, %v404
        %v1110 = vpack.c.bf16 %v407, %v406
        %v1111 = vpack.c.bf16 %v409, %v408
        %s1112 = scalar_lea.vmem %s3, 256
        %v1113 = vld [vmem:[%s1112] sm:$0xf]
        %v1114 = vld [vmem:[%s1112 + $0x4] sm:$0xf]
        %v1115 = vld [vmem:[%s1112 + $0x8] sm:$0xf]
        %v1116 = vld [vmem:[%s1112 + $0xc] sm:$0xf]
        %v1117 = vld [vmem:[%s1112 + $0x10] sm:$0xf]
        %v1118 = vld [vmem:[%s1112 + $0x14] sm:$0xf]
        %v1119 = vld [vmem:[%s1112 + $0x18] sm:$0xf]
        %v1120 = vld [vmem:[%s1112 + $0x1c] sm:$0xf]
        %v1121 = vld [vmem:[%s1112 + $0x20] sm:$0xf]
        %v1122 = vld [vmem:[%s1112 + $0x24] sm:$0xf]
        %v1123 = vld [vmem:[%s1112 + $0x28] sm:$0xf]
        %v1124 = vld [vmem:[%s1112 + $0x2c] sm:$0xf]
        %v1125 = vld [vmem:[%s1112 + $0x30] sm:$0xf]
        %v1126 = vld [vmem:[%s1112 + $0x34] sm:$0xf]
        %v1127 = vld [vmem:[%s1112 + $0x38] sm:$0xf]
        %v1128 = vld [vmem:[%s1112 + $0x3c] sm:$0xf]
        %v1145 = vunpack.c.l.b16 %v1113
        %v1146 = vunpack.c.l.b16 %v1114
        %v1147 = vunpack.c.l.b16 %v1115
        %v1148 = vunpack.c.l.b16 %v1116
        %v1149 = vunpack.c.l.b16 %v1117
        %v1150 = vunpack.c.l.b16 %v1118
        %v1151 = vunpack.c.l.b16 %v1119
        %v1152 = vunpack.c.l.b16 %v1120
        %v1153 = vunpack.c.l.b16 %v1121
        %v1154 = vunpack.c.l.b16 %v1122
        %v1155 = vunpack.c.l.b16 %v1123
        %v1156 = vunpack.c.l.b16 %v1124
        %v1157 = vunpack.c.l.b16 %v1125
        %v1158 = vunpack.c.l.b16 %v1126
        %v1159 = vunpack.c.l.b16 %v1127
        %v1160 = vunpack.c.l.b16 %v1128
        %v1161 = vpack.c.b16 %v1146, %v1145
        %v1162 = vpack.c.b16 %v1148, %v1147
        %v1163 = vpack.c.b16 %v1150, %v1149
        %v1164 = vpack.c.b16 %v1152, %v1151
        %v1165 = vpack.c.b16 %v1154, %v1153
        %v1166 = vpack.c.b16 %v1156, %v1155
        %v1167 = vpack.c.b16 %v1158, %v1157
        %v1168 = vpack.c.b16 %v1160, %v1159
        %1177 = vmatprep.subr.bf16.mxu0 0
        %1178 = vmatpush1.bf16.msra.mxu0 %v1161
        %1179 = vmatprep.subr.bf16.mxu0 0
        %1180 = vmatpush1.bf16.msra.mxu0 %v1162
        %1181 = vmatprep.subr.bf16.mxu0 0
        %1182 = vmatpush1.bf16.msra.mxu0 %v1163
        %1183 = vmatprep.subr.bf16.mxu0 0
        %1184 = vmatpush1.bf16.msra.mxu0 %v1164
        %1185 = vmatprep.subr.bf16.mxu0 0
        %1186 = vmatpush1.bf16.msra.mxu0 %v1165
        %1187 = vmatprep.subr.bf16.mxu0 0
        %1188 = vmatpush1.bf16.msra.mxu0 %v1166
        %1189 = vmatprep.subr.bf16.mxu0 0
        %1190 = vmatpush1.bf16.msra.mxu0 %v1167
        %1191 = vmatprep.subr.bf16.mxu0 0
        %1192 = vmatpush1.bf16.msra.mxu0 %v1168
        %1193 = vmatprep.subr.bf16.mxu0 0
        %1194 = vmatpush1.bf16.msra.mxu0 0
        %1195 = vmatprep.subr.bf16.mxu0 0
        %1196 = vmatpush1.bf16.msra.mxu0 0
        %1197 = vmatprep.subr.bf16.mxu0 0
        %1198 = vmatpush1.bf16.msra.mxu0 0
        %1199 = vmatprep.subr.bf16.mxu0 0
        %1200 = vmatpush1.bf16.msra.mxu0 0
        %1201 = vmatprep.subr.bf16.mxu0 0
        %1202 = vmatpush1.bf16.msra.mxu0 0
        %1203 = vmatprep.subr.bf16.mxu0 0
        %1204 = vmatpush1.bf16.msra.mxu0 0
        %1205 = vmatprep.subr.bf16.mxu0 0
        %1206 = vmatpush1.bf16.msra.mxu0 0
        %1207 = vmatprep.subr.bf16.mxu0 0
        %1208 = vmatpush1.bf16.msra.mxu0 0
        %1209 = vmatprep.mubr.bf16.mxu0 0
        %1210 = vmatmul.mubr.bf16.gmra.mrb[0].mxu0 %v1108
        %v1211 = vpop.f32.mrb[0].mxu0
        %v1212 = vadd.f32 0.0, %v1211
        %v1213 = vpop.f32.mrb[0].mxu0
        %v1214 = vpop.f32.mrb[0].mxu0
        %v1215 = vadd.f32 0.0, %v1214
        %v1216 = vpop.f32.mrb[0].mxu0
        %1217 = vmatprep.mubr.bf16.mxu0 0
        %1218 = vmatmul.mubr.bf16.gmra.mrb[0].mxu0 %v1109
        %v1219 = vpop.f32.mrb[0].mxu0
        %v1220 = vadd.f32 0.0, %v1219
        %v1221 = vpop.f32.mrb[0].mxu0
        %v1222 = vpop.f32.mrb[0].mxu0
        %v1223 = vadd.f32 0.0, %v1222
        %v1224 = vpop.f32.mrb[0].mxu0
        %1225 = vmatprep.mubr.bf16.mxu0 0
        %1226 = vmatmul.mubr.bf16.gmra.mrb[0].mxu0 %v1110
        %v1227 = vpop.f32.mrb[0].mxu0
        %v1228 = vadd.f32 0.0, %v1227
        %v1229 = vpop.f32.mrb[0].mxu0
        %v1230 = vpop.f32.mrb[0].mxu0
        %v1231 = vadd.f32 0.0, %v1230
        %v1232 = vpop.f32.mrb[0].mxu0
        %1233 = vmatprep.mubr.bf16.mxu0 0
        %1234 = vmatmul.mubr.bf16.gmra.mrb[0].mxu0 %v1111
        %v1235 = vpop.f32.mrb[0].mxu0
        %v1236 = vadd.f32 0.0, %v1235
        %v1237 = vpop.f32.mrb[0].mxu0
        %v1238 = vpop.f32.mrb[0].mxu0
        %v1239 = vadd.f32 0.0, %v1238
        %v1240 = vpop.f32.mrb[0].mxu0
        %1241 = vdwg.mxu0
        %v1242 = vadd.f32 %v1100, %v1212
        %v1243 = vadd.f32 %v1101, %v1215
        %v1244 = vadd.f32 %v1102, %v1220
        %v1245 = vadd.f32 %v1103, %v1223
        %v1246 = vadd.f32 %v1104, %v1228
        %v1247 = vadd.f32 %v1105, %v1231
        %v1248 = vadd.f32 %v1106, %v1236
        %v1249 = vadd.f32 %v1107, %v1239
        %v1250 = vsel %vm467, %v798, 0.0
        %v1251 = vsel %vm468, %v797, 0.0
        %v1252 = vsel %vm469, %v796, 0.0
        %v1253 = vsel %vm470, %v795, 0.0
        %v1254 = vsel %vm471, %v794, 0.0
        %v1255 = vsel %vm472, %v793, 0.0
        %v1256 = vsel %vm473, %v792, 0.0
        %v1257 = vsel %vm474, %v799, 0.0
        %v1258 = vpack.c.bf16 %v1251, %v1250
        %v1259 = vpack.c.bf16 %v1253, %v1252
        %v1260 = vpack.c.bf16 %v1255, %v1254
        %v1261 = vpack.c.bf16 %v1257, %v1256
        %s1262 = scalar_lea.vmem %s3, 320
        %v1263 = vld [vmem:[%s1262] sm:$0xf]
        %v1264 = vld [vmem:[%s1262 + $0x4] sm:$0xf]
        %v1265 = vld [vmem:[%s1262 + $0x8] sm:$0xf]
        %v1266 = vld [vmem:[%s1262 + $0xc] sm:$0xf]
        %v1267 = vld [vmem:[%s1262 + $0x10] sm:$0xf]
        %v1268 = vld [vmem:[%s1262 + $0x14] sm:$0xf]
        %v1269 = vld [vmem:[%s1262 + $0x18] sm:$0xf]
        %v1270 = vld [vmem:[%s1262 + $0x1c] sm:$0xf]
        %v1271 = vld [vmem:[%s1262 + $0x20] sm:$0xf]
        %v1272 = vld [vmem:[%s1262 + $0x24] sm:$0xf]
        %v1273 = vld [vmem:[%s1262 + $0x28] sm:$0xf]
        %v1274 = vld [vmem:[%s1262 + $0x2c] sm:$0xf]
        %v1275 = vld [vmem:[%s1262 + $0x30] sm:$0xf]
        %v1276 = vld [vmem:[%s1262 + $0x34] sm:$0xf]
        %v1277 = vld [vmem:[%s1262 + $0x38] sm:$0xf]
        %v1278 = vld [vmem:[%s1262 + $0x3c] sm:$0xf]
        %v1295 = vunpack.c.l.b16 %v1263
        %v1296 = vunpack.c.l.b16 %v1264
        %v1297 = vunpack.c.l.b16 %v1265
        %v1298 = vunpack.c.l.b16 %v1266
        %v1299 = vunpack.c.l.b16 %v1267
        %v1300 = vunpack.c.l.b16 %v1268
        %v1301 = vunpack.c.l.b16 %v1269
        %v1302 = vunpack.c.l.b16 %v1270
        %v1303 = vunpack.c.l.b16 %v1271
        %v1304 = vunpack.c.l.b16 %v1272
        %v1305 = vunpack.c.l.b16 %v1273
        %v1306 = vunpack.c.l.b16 %v1274
        %v1307 = vunpack.c.l.b16 %v1275
        %v1308 = vunpack.c.l.b16 %v1276
        %v1309 = vunpack.c.l.b16 %v1277
        %v1310 = vunpack.c.l.b16 %v1278
        %v1311 = vpack.c.b16 %v1296, %v1295
        %v1312 = vpack.c.b16 %v1298, %v1297
        %v1313 = vpack.c.b16 %v1300, %v1299
        %v1314 = vpack.c.b16 %v1302, %v1301
        %v1315 = vpack.c.b16 %v1304, %v1303
        %v1316 = vpack.c.b16 %v1306, %v1305
        %v1317 = vpack.c.b16 %v1308, %v1307
        %v1318 = vpack.c.b16 %v1310, %v1309
        %1327 = vmatprep.subr.bf16.mxu0 0
        %1328 = vmatpush1.bf16.msra.mxu0 %v1311
        %1329 = vmatprep.subr.bf16.mxu0 0
        %1330 = vmatpush1.bf16.msra.mxu0 %v1312
        %1331 = vmatprep.subr.bf16.mxu0 0
        %1332 = vmatpush1.bf16.msra.mxu0 %v1313
        %1333 = vmatprep.subr.bf16.mxu0 0
        %1334 = vmatpush1.bf16.msra.mxu0 %v1314
        %1335 = vmatprep.subr.bf16.mxu0 0
        %1336 = vmatpush1.bf16.msra.mxu0 %v1315
        %1337 = vmatprep.subr.bf16.mxu0 0
        %1338 = vmatpush1.bf16.msra.mxu0 %v1316
        %1339 = vmatprep.subr.bf16.mxu0 0
        %1340 = vmatpush1.bf16.msra.mxu0 %v1317
        %1341 = vmatprep.subr.bf16.mxu0 0
        %1342 = vmatpush1.bf16.msra.mxu0 %v1318
        %1343 = vmatprep.subr.bf16.mxu0 0
        %1344 = vmatpush1.bf16.msra.mxu0 0
        %1345 = vmatprep.subr.bf16.mxu0 0
        %1346 = vmatpush1.bf16.msra.mxu0 0
        %1347 = vmatprep.subr.bf16.mxu0 0
        %1348 = vmatpush1.bf16.msra.mxu0 0
        %1349 = vmatprep.subr.bf16.mxu0 0
        %1350 = vmatpush1.bf16.msra.mxu0 0
        %1351 = vmatprep.subr.bf16.mxu0 0
        %1352 = vmatpush1.bf16.msra.mxu0 0
        %1353 = vmatprep.subr.bf16.mxu0 0
        %1354 = vmatpush1.bf16.msra.mxu0 0
        %1355 = vmatprep.subr.bf16.mxu0 0
        %1356 = vmatpush1.bf16.msra.mxu0 0
        %1357 = vmatprep.subr.bf16.mxu0 0
        %1358 = vmatpush1.bf16.msra.mxu0 0
        %1359 = vmatprep.mubr.bf16.mxu0 0
        %1360 = vmatmul.mubr.bf16.gmra.mrb[0].mxu0 %v1258
        %v1361 = vpop.f32.mrb[0].mxu0
        %v1362 = vadd.f32 0.0, %v1361
        %v1363 = vpop.f32.mrb[0].mxu0
        %v1364 = vpop.f32.mrb[0].mxu0
        %v1365 = vadd.f32 0.0, %v1364
        %v1366 = vpop.f32.mrb[0].mxu0
        %1367 = vmatprep.mubr.bf16.mxu0 0
        %1368 = vmatmul.mubr.bf16.gmra.mrb[0].mxu0 %v1259
        %v1369 = vpop.f32.mrb[0].mxu0
        %v1370 = vadd.f32 0.0, %v1369
        %v1371 = vpop.f32.mrb[0].mxu0
        %v1372 = vpop.f32.mrb[0].mxu0
        %v1373 = vadd.f32 0.0, %v1372
        %v1374 = vpop.f32.mrb[0].mxu0
        %1375 = vmatprep.mubr.bf16.mxu0 0
        %1376 = vmatmul.mubr.bf16.gmra.mrb[0].mxu0 %v1260
        %v1377 = vpop.f32.mrb[0].mxu0
        %v1378 = vadd.f32 0.0, %v1377
        %v1379 = vpop.f32.mrb[0].mxu0
        %v1380 = vpop.f32.mrb[0].mxu0
        %v1381 = vadd.f32 0.0, %v1380
        %v1382 = vpop.f32.mrb[0].mxu0
        %1383 = vmatprep.mubr.bf16.mxu0 0
        %1384 = vmatmul.mubr.bf16.gmra.mrb[0].mxu0 %v1261
        %v1385 = vpop.f32.mrb[0].mxu0
        %v1386 = vadd.f32 0.0, %v1385
        %v1387 = vpop.f32.mrb[0].mxu0
        %v1388 = vpop.f32.mrb[0].mxu0
        %v1389 = vadd.f32 0.0, %v1388
        %v1390 = vpop.f32.mrb[0].mxu0
        %1391 = vdwg.mxu0
        %v1392 = vadd.f32 %v1242, %v1362
        %v1393 = vadd.f32 %v1243, %v1365
        %v1394 = vadd.f32 %v1244, %v1370
        %v1395 = vadd.f32 %v1245, %v1373
        %v1396 = vadd.f32 %v1246, %v1378
        %v1397 = vadd.f32 %v1247, %v1381
        %v1398 = vadd.f32 %v1248, %v1386
        %v1399 = vadd.f32 %v1249, %v1389
        %vm1400 = vmand %vm451, %vm459
        %vm1401 = vmand %vm452, %vm460
        %vm1402 = vmand %vm453, %vm461
        %vm1403 = vmand %vm454, %vm462
        %vm1404 = vmand %vm455, %vm463
        %vm1405 = vmand %vm456, %vm464
        %vm1406 = vmand %vm457, %vm465
        %vm1407 = vmand %vm458, %vm466
        %v1408 = vsel %vm1400, %v490, 0.0
        %v1409 = vsel %vm1401, %v489, 0.0
        %v1410 = vsel %vm1402, %v488, 0.0
        %v1411 = vsel %vm1403, %v487, 0.0
        %v1412 = vsel %vm1404, %v486, 0.0
        %v1413 = vsel %vm1405, %v485, 0.0
        %v1414 = vsel %vm1406, %v484, 0.0
        %v1415 = vsel %vm1407, %v491, 0.0
        %v1416 = vpack.c.bf16 %v1409, %v1408
        %v1417 = vpack.c.bf16 %v1411, %v1410
        %v1418 = vpack.c.bf16 %v1413, %v1412
        %v1419 = vpack.c.bf16 %v1415, %v1414
        %s1420 = scalar_lea.vmem %s3, 384
        %v1421 = vld [vmem:[%s1420] sm:$0xf]
        %v1422 = vld [vmem:[%s1420 + $0x4] sm:$0xf]
        %v1423 = vld [vmem:[%s1420 + $0x8] sm:$0xf]
        %v1424 = vld [vmem:[%s1420 + $0xc] sm:$0xf]
        %v1425 = vld [vmem:[%s1420 + $0x10] sm:$0xf]
        %v1426 = vld [vmem:[%s1420 + $0x14] sm:$0xf]
        %v1427 = vld [vmem:[%s1420 + $0x18] sm:$0xf]
        %v1428 = vld [vmem:[%s1420 + $0x1c] sm:$0xf]
        %v1429 = vld [vmem:[%s1420 + $0x20] sm:$0xf]
        %v1430 = vld [vmem:[%s1420 + $0x24] sm:$0xf]
        %v1431 = vld [vmem:[%s1420 + $0x28] sm:$0xf]
        %v1432 = vld [vmem:[%s1420 + $0x2c] sm:$0xf]
        %v1433 = vld [vmem:[%s1420 + $0x30] sm:$0xf]
        %v1434 = vld [vmem:[%s1420 + $0x34] sm:$0xf]
        %v1435 = vld [vmem:[%s1420 + $0x38] sm:$0xf]
        %v1436 = vld [vmem:[%s1420 + $0x3c] sm:$0xf]
        %v1453 = vunpack.c.l.b16 %v1421
        %v1454 = vunpack.c.l.b16 %v1422
        %v1455 = vunpack.c.l.b16 %v1423
        %v1456 = vunpack.c.l.b16 %v1424
        %v1457 = vunpack.c.l.b16 %v1425
        %v1458 = vunpack.c.l.b16 %v1426
        %v1459 = vunpack.c.l.b16 %v1427
        %v1460 = vunpack.c.l.b16 %v1428
        %v1461 = vunpack.c.l.b16 %v1429
        %v1462 = vunpack.c.l.b16 %v1430
        %v1463 = vunpack.c.l.b16 %v1431
        %v1464 = vunpack.c.l.b16 %v1432
        %v1465 = vunpack.c.l.b16 %v1433
        %v1466 = vunpack.c.l.b16 %v1434
        %v1467 = vunpack.c.l.b16 %v1435
        %v1468 = vunpack.c.l.b16 %v1436
        %v1469 = vpack.c.b16 %v1454, %v1453
        %v1470 = vpack.c.b16 %v1456, %v1455
        %v1471 = vpack.c.b16 %v1458, %v1457
        %v1472 = vpack.c.b16 %v1460, %v1459
        %v1473 = vpack.c.b16 %v1462, %v1461
        %v1474 = vpack.c.b16 %v1464, %v1463
        %v1475 = vpack.c.b16 %v1466, %v1465
        %v1476 = vpack.c.b16 %v1468, %v1467
        %1485 = vmatprep.subr.bf16.mxu0 0
        %1486 = vmatpush1.bf16.msra.mxu0 %v1469
        %1487 = vmatprep.subr.bf16.mxu0 0
        %1488 = vmatpush1.bf16.msra.mxu0 %v1470
        %1489 = vmatprep.subr.bf16.mxu0 0
        %1490 = vmatpush1.bf16.msra.mxu0 %v1471
        %1491 = vmatprep.subr.bf16.mxu0 0
        %1492 = vmatpush1.bf16.msra.mxu0 %v1472
        %1493 = vmatprep.subr.bf16.mxu0 0
        %1494 = vmatpush1.bf16.msra.mxu0 %v1473
        %1495 = vmatprep.subr.bf16.mxu0 0
        %1496 = vmatpush1.bf16.msra.mxu0 %v1474
        %1497 = vmatprep.subr.bf16.mxu0 0
        %1498 = vmatpush1.bf16.msra.mxu0 %v1475
        %1499 = vmatprep.subr.bf16.mxu0 0
        %1500 = vmatpush1.bf16.msra.mxu0 %v1476
        %1501 = vmatprep.subr.bf16.mxu0 0
        %1502 = vmatpush1.bf16.msra.mxu0 0
        %1503 = vmatprep.subr.bf16.mxu0 0
        %1504 = vmatpush1.bf16.msra.mxu0 0
        %1505 = vmatprep.subr.bf16.mxu0 0
        %1506 = vmatpush1.bf16.msra.mxu0 0
        %1507 = vmatprep.subr.bf16.mxu0 0
        %1508 = vmatpush1.bf16.msra.mxu0 0
        %1509 = vmatprep.subr.bf16.mxu0 0
        %1510 = vmatpush1.bf16.msra.mxu0 0
        %1511 = vmatprep.subr.bf16.mxu0 0
        %1512 = vmatpush1.bf16.msra.mxu0 0
        %1513 = vmatprep.subr.bf16.mxu0 0
        %1514 = vmatpush1.bf16.msra.mxu0 0
        %1515 = vmatprep.subr.bf16.mxu0 0
        %1516 = vmatpush1.bf16.msra.mxu0 0
        %1517 = vmatprep.mubr.bf16.mxu0 0
        %1518 = vmatmul.mubr.bf16.gmra.mrb[0].mxu0 %v1416
        %v1519 = vpop.f32.mrb[0].mxu0
        %v1520 = vadd.f32 0.0, %v1519
        %v1521 = vpop.f32.mrb[0].mxu0
        %v1522 = vpop.f32.mrb[0].mxu0
        %v1523 = vadd.f32 0.0, %v1522
        %v1524 = vpop.f32.mrb[0].mxu0
        %1525 = vmatprep.mubr.bf16.mxu0 0
        %1526 = vmatmul.mubr.bf16.gmra.mrb[0].mxu0 %v1417
        %v1527 = vpop.f32.mrb[0].mxu0
        %v1528 = vadd.f32 0.0, %v1527
        %v1529 = vpop.f32.mrb[0].mxu0
        %v1530 = vpop.f32.mrb[0].mxu0
        %v1531 = vadd.f32 0.0, %v1530
        %v1532 = vpop.f32.mrb[0].mxu0
        %1533 = vmatprep.mubr.bf16.mxu0 0
        %1534 = vmatmul.mubr.bf16.gmra.mrb[0].mxu0 %v1418
        %v1535 = vpop.f32.mrb[0].mxu0
        %v1536 = vadd.f32 0.0, %v1535
        %v1537 = vpop.f32.mrb[0].mxu0
        %v1538 = vpop.f32.mrb[0].mxu0
        %v1539 = vadd.f32 0.0, %v1538
        %v1540 = vpop.f32.mrb[0].mxu0
        %1541 = vmatprep.mubr.bf16.mxu0 0
        %1542 = vmatmul.mubr.bf16.gmra.mrb[0].mxu0 %v1419
        %v1543 = vpop.f32.mrb[0].mxu0
        %v1544 = vadd.f32 0.0, %v1543
        %v1545 = vpop.f32.mrb[0].mxu0
        %v1546 = vpop.f32.mrb[0].mxu0
        %v1547 = vadd.f32 0.0, %v1546
        %v1548 = vpop.f32.mrb[0].mxu0
        %1549 = vdwg.mxu0
        %v1550 = vadd.f32 %v1392, %v1520
        %v1551 = vadd.f32 %v1393, %v1523
        %v1552 = vadd.f32 %v1394, %v1528
        %v1553 = vadd.f32 %v1395, %v1531
        %v1554 = vadd.f32 %v1396, %v1536
        %v1555 = vadd.f32 %v1397, %v1539
        %v1556 = vadd.f32 %v1398, %v1544
        %v1557 = vadd.f32 %v1399, %v1547
        %v1558 = vsel %vm451, %v403, 0.0
        %v1559 = vsel %vm452, %v404, 0.0
        %v1560 = vsel %vm453, %v405, 0.0
        %v1561 = vsel %vm454, %v406, 0.0
        %v1562 = vsel %vm455, %v407, 0.0
        %v1563 = vsel %vm456, %v408, 0.0
        %v1564 = vsel %vm457, %v409, 0.0
        %v1565 = vsel %vm458, %v402, 0.0
        %v1566 = vpack.c.bf16 %v1559, %v1558
        %v1567 = vpack.c.bf16 %v1561, %v1560
        %v1568 = vpack.c.bf16 %v1563, %v1562
        %v1569 = vpack.c.bf16 %v1565, %v1564
        %s1570 = scalar_lea.vmem %s3, 448
        %v1571 = vld [vmem:[%s1570] sm:$0xf]
        %v1572 = vld [vmem:[%s1570 + $0x4] sm:$0xf]
        %v1573 = vld [vmem:[%s1570 + $0x8] sm:$0xf]
        %v1574 = vld [vmem:[%s1570 + $0xc] sm:$0xf]
        %v1575 = vld [vmem:[%s1570 + $0x10] sm:$0xf]
        %v1576 = vld [vmem:[%s1570 + $0x14] sm:$0xf]
        %v1577 = vld [vmem:[%s1570 + $0x18] sm:$0xf]
        %v1578 = vld [vmem:[%s1570 + $0x1c] sm:$0xf]
        %v1579 = vld [vmem:[%s1570 + $0x20] sm:$0xf]
        %v1580 = vld [vmem:[%s1570 + $0x24] sm:$0xf]
        %v1581 = vld [vmem:[%s1570 + $0x28] sm:$0xf]
        %v1582 = vld [vmem:[%s1570 + $0x2c] sm:$0xf]
        %v1583 = vld [vmem:[%s1570 + $0x30] sm:$0xf]
        %v1584 = vld [vmem:[%s1570 + $0x34] sm:$0xf]
        %v1585 = vld [vmem:[%s1570 + $0x38] sm:$0xf]
        %v1586 = vld [vmem:[%s1570 + $0x3c] sm:$0xf]
        %v1603 = vunpack.c.l.b16 %v1571
        %v1604 = vunpack.c.l.b16 %v1572
        %v1605 = vunpack.c.l.b16 %v1573
        %v1606 = vunpack.c.l.b16 %v1574
        %v1607 = vunpack.c.l.b16 %v1575
        %v1608 = vunpack.c.l.b16 %v1576
        %v1609 = vunpack.c.l.b16 %v1577
        %v1610 = vunpack.c.l.b16 %v1578
        %v1611 = vunpack.c.l.b16 %v1579
        %v1612 = vunpack.c.l.b16 %v1580
        %v1613 = vunpack.c.l.b16 %v1581
        %v1614 = vunpack.c.l.b16 %v1582
        %v1615 = vunpack.c.l.b16 %v1583
        %v1616 = vunpack.c.l.b16 %v1584
        %v1617 = vunpack.c.l.b16 %v1585
        %v1618 = vunpack.c.l.b16 %v1586
        %v1619 = vpack.c.b16 %v1604, %v1603
        %v1620 = vpack.c.b16 %v1606, %v1605
        %v1621 = vpack.c.b16 %v1608, %v1607
        %v1622 = vpack.c.b16 %v1610, %v1609
        %v1623 = vpack.c.b16 %v1612, %v1611
        %v1624 = vpack.c.b16 %v1614, %v1613
        %v1625 = vpack.c.b16 %v1616, %v1615
        %v1626 = vpack.c.b16 %v1618, %v1617
        %1635 = vmatprep.subr.bf16.mxu0 0
        %1636 = vmatpush1.bf16.msra.mxu0 %v1619
        %1637 = vmatprep.subr.bf16.mxu0 0
        %1638 = vmatpush1.bf16.msra.mxu0 %v1620
        %1639 = vmatprep.subr.bf16.mxu0 0
        %1640 = vmatpush1.bf16.msra.mxu0 %v1621
        %1641 = vmatprep.subr.bf16.mxu0 0
        %1642 = vmatpush1.bf16.msra.mxu0 %v1622
        %1643 = vmatprep.subr.bf16.mxu0 0
        %1644 = vmatpush1.bf16.msra.mxu0 %v1623
        %1645 = vmatprep.subr.bf16.mxu0 0
        %1646 = vmatpush1.bf16.msra.mxu0 %v1624
        %1647 = vmatprep.subr.bf16.mxu0 0
        %1648 = vmatpush1.bf16.msra.mxu0 %v1625
        %1649 = vmatprep.subr.bf16.mxu0 0
        %1650 = vmatpush1.bf16.msra.mxu0 %v1626
        %1651 = vmatprep.subr.bf16.mxu0 0
        %1652 = vmatpush1.bf16.msra.mxu0 0
        %1653 = vmatprep.subr.bf16.mxu0 0
        %1654 = vmatpush1.bf16.msra.mxu0 0
        %1655 = vmatprep.subr.bf16.mxu0 0
        %1656 = vmatpush1.bf16.msra.mxu0 0
        %1657 = vmatprep.subr.bf16.mxu0 0
        %1658 = vmatpush1.bf16.msra.mxu0 0
        %1659 = vmatprep.subr.bf16.mxu0 0
        %1660 = vmatpush1.bf16.msra.mxu0 0
        %1661 = vmatprep.subr.bf16.mxu0 0
        %1662 = vmatpush1.bf16.msra.mxu0 0
        %1663 = vmatprep.subr.bf16.mxu0 0
        %1664 = vmatpush1.bf16.msra.mxu0 0
        %1665 = vmatprep.subr.bf16.mxu0 0
        %1666 = vmatpush1.bf16.msra.mxu0 0
        %1667 = vmatprep.mubr.bf16.mxu0 0
        %1668 = vmatmul.mubr.bf16.gmra.mrb[0].mxu0 %v1566
        %v1669 = vpop.f32.mrb[0].mxu0
        %v1670 = vadd.f32 0.0, %v1669
        %v1671 = vpop.f32.mrb[0].mxu0
        %v1672 = vpop.f32.mrb[0].mxu0
        %v1673 = vadd.f32 0.0, %v1672
        %v1674 = vpop.f32.mrb[0].mxu0
        %1675 = vmatprep.mubr.bf16.mxu0 0
        %1676 = vmatmul.mubr.bf16.gmra.mrb[0].mxu0 %v1567
        %v1677 = vpop.f32.mrb[0].mxu0
        %v1678 = vadd.f32 0.0, %v1677
        %v1679 = vpop.f32.mrb[0].mxu0
        %v1680 = vpop.f32.mrb[0].mxu0
        %v1681 = vadd.f32 0.0, %v1680
        %v1682 = vpop.f32.mrb[0].mxu0
        %1683 = vmatprep.mubr.bf16.mxu0 0
        %1684 = vmatmul.mubr.bf16.gmra.mrb[0].mxu0 %v1568
        %v1685 = vpop.f32.mrb[0].mxu0
        %v1686 = vadd.f32 0.0, %v1685
        %v1687 = vpop.f32.mrb[0].mxu0
        %v1688 = vpop.f32.mrb[0].mxu0
        %v1689 = vadd.f32 0.0, %v1688
        %v1690 = vpop.f32.mrb[0].mxu0
        %1691 = vmatprep.mubr.bf16.mxu0 0
        %1692 = vmatmul.mubr.bf16.gmra.mrb[0].mxu0 %v1569
        %v1693 = vpop.f32.mrb[0].mxu0
        %v1694 = vadd.f32 0.0, %v1693
        %v1695 = vpop.f32.mrb[0].mxu0
        %v1696 = vpop.f32.mrb[0].mxu0
        %v1697 = vadd.f32 0.0, %v1696
        %v1698 = vpop.f32.mrb[0].mxu0
        %1699 = vdwg.mxu0
        %v1700 = vadd.f32 %v1550, %v1670
        %v1701 = vadd.f32 %v1551, %v1673
        %v1702 = vadd.f32 %v1552, %v1678
        %v1703 = vadd.f32 %v1553, %v1681
        %v1704 = vadd.f32 %v1554, %v1686
        %v1705 = vadd.f32 %v1555, %v1689
        %v1706 = vadd.f32 %v1556, %v1694
        %v1707 = vadd.f32 %v1557, %v1697
        %vm1708 = vmand %vm451, %vm467
        %vm1709 = vmand %vm452, %vm468
        %vm1710 = vmand %vm453, %vm469
        %vm1711 = vmand %vm454, %vm470
        %vm1712 = vmand %vm455, %vm471
        %vm1713 = vmand %vm456, %vm472
        %vm1714 = vmand %vm457, %vm473
        %vm1715 = vmand %vm458, %vm474
        %v1716 = vsel %vm1708, %v797, 0.0
        %v1717 = vsel %vm1709, %v796, 0.0
        %v1718 = vsel %vm1710, %v795, 0.0
        %v1719 = vsel %vm1711, %v794, 0.0
        %v1720 = vsel %vm1712, %v793, 0.0
        %v1721 = vsel %vm1713, %v792, 0.0
        %v1722 = vsel %vm1714, %v799, 0.0
        %v1723 = vsel %vm1715, %v798, 0.0
        %v1724 = vpack.c.bf16 %v1717, %v1716
        %v1725 = vpack.c.bf16 %v1719, %v1718
        %v1726 = vpack.c.bf16 %v1721, %v1720
        %v1727 = vpack.c.bf16 %v1723, %v1722
        %s1728 = scalar_lea.vmem %s3, 512
        %v1729 = vld [vmem:[%s1728] sm:$0xf]
        %v1730 = vld [vmem:[%s1728 + $0x4] sm:$0xf]
        %v1731 = vld [vmem:[%s1728 + $0x8] sm:$0xf]
        %v1732 = vld [vmem:[%s1728 + $0xc] sm:$0xf]
        %v1733 = vld [vmem:[%s1728 + $0x10] sm:$0xf]
        %v1734 = vld [vmem:[%s1728 + $0x14] sm:$0xf]
        %v1735 = vld [vmem:[%s1728 + $0x18] sm:$0xf]
        %v1736 = vld [vmem:[%s1728 + $0x1c] sm:$0xf]
        %v1737 = vld [vmem:[%s1728 + $0x20] sm:$0xf]
        %v1738 = vld [vmem:[%s1728 + $0x24] sm:$0xf]
        %v1739 = vld [vmem:[%s1728 + $0x28] sm:$0xf]
        %v1740 = vld [vmem:[%s1728 + $0x2c] sm:$0xf]
        %v1741 = vld [vmem:[%s1728 + $0x30] sm:$0xf]
        %v1742 = vld [vmem:[%s1728 + $0x34] sm:$0xf]
        %v1743 = vld [vmem:[%s1728 + $0x38] sm:$0xf]
        %v1744 = vld [vmem:[%s1728 + $0x3c] sm:$0xf]
        %v1761 = vunpack.c.l.b16 %v1729
        %v1762 = vunpack.c.l.b16 %v1730
        %v1763 = vunpack.c.l.b16 %v1731
        %v1764 = vunpack.c.l.b16 %v1732
        %v1765 = vunpack.c.l.b16 %v1733
        %v1766 = vunpack.c.l.b16 %v1734
        %v1767 = vunpack.c.l.b16 %v1735
        %v1768 = vunpack.c.l.b16 %v1736
        %v1769 = vunpack.c.l.b16 %v1737
        %v1770 = vunpack.c.l.b16 %v1738
        %v1771 = vunpack.c.l.b16 %v1739
        %v1772 = vunpack.c.l.b16 %v1740
        %v1773 = vunpack.c.l.b16 %v1741
        %v1774 = vunpack.c.l.b16 %v1742
        %v1775 = vunpack.c.l.b16 %v1743
        %v1776 = vunpack.c.l.b16 %v1744
        %v1777 = vpack.c.b16 %v1762, %v1761
        %v1778 = vpack.c.b16 %v1764, %v1763
        %v1779 = vpack.c.b16 %v1766, %v1765
        %v1780 = vpack.c.b16 %v1768, %v1767
        %v1781 = vpack.c.b16 %v1770, %v1769
        %v1782 = vpack.c.b16 %v1772, %v1771
        %v1783 = vpack.c.b16 %v1774, %v1773
        %v1784 = vpack.c.b16 %v1776, %v1775
        %1793 = vmatprep.subr.bf16.mxu0 0
        %1794 = vmatpush1.bf16.msra.mxu0 %v1777
        %1795 = vmatprep.subr.bf16.mxu0 0
        %1796 = vmatpush1.bf16.msra.mxu0 %v1778
        %1797 = vmatprep.subr.bf16.mxu0 0
        %1798 = vmatpush1.bf16.msra.mxu0 %v1779
        %1799 = vmatprep.subr.bf16.mxu0 0
        %1800 = vmatpush1.bf16.msra.mxu0 %v1780
        %1801 = vmatprep.subr.bf16.mxu0 0
        %1802 = vmatpush1.bf16.msra.mxu0 %v1781
        %1803 = vmatprep.subr.bf16.mxu0 0
        %1804 = vmatpush1.bf16.msra.mxu0 %v1782
        %1805 = vmatprep.subr.bf16.mxu0 0
        %1806 = vmatpush1.bf16.msra.mxu0 %v1783
        %1807 = vmatprep.subr.bf16.mxu0 0
        %1808 = vmatpush1.bf16.msra.mxu0 %v1784
        %1809 = vmatprep.subr.bf16.mxu0 0
        %1810 = vmatpush1.bf16.msra.mxu0 0
        %1811 = vmatprep.subr.bf16.mxu0 0
        %1812 = vmatpush1.bf16.msra.mxu0 0
        %1813 = vmatprep.subr.bf16.mxu0 0
        %1814 = vmatpush1.bf16.msra.mxu0 0
        %1815 = vmatprep.subr.bf16.mxu0 0
        %1816 = vmatpush1.bf16.msra.mxu0 0
        %1817 = vmatprep.subr.bf16.mxu0 0
        %1818 = vmatpush1.bf16.msra.mxu0 0
        %1819 = vmatprep.subr.bf16.mxu0 0
        %1820 = vmatpush1.bf16.msra.mxu0 0
        %1821 = vmatprep.subr.bf16.mxu0 0
        %1822 = vmatpush1.bf16.msra.mxu0 0
        %1823 = vmatprep.subr.bf16.mxu0 0
        %1824 = vmatpush1.bf16.msra.mxu0 0
        %1825 = vmatprep.mubr.bf16.mxu0 0
        %1826 = vmatmul.mubr.bf16.gmra.mrb[0].mxu0 %v1724
        %v1827 = vpop.f32.mrb[0].mxu0
        %v1828 = vadd.f32 0.0, %v1827
        %v1829 = vpop.f32.mrb[0].mxu0
        %v1830 = vpop.f32.mrb[0].mxu0
        %v1831 = vadd.f32 0.0, %v1830
        %v1832 = vpop.f32.mrb[0].mxu0
        %1833 = vmatprep.mubr.bf16.mxu0 0
        %1834 = vmatmul.mubr.bf16.gmra.mrb[0].mxu0 %v1725
        %v1835 = vpop.f32.mrb[0].mxu0
        %v1836 = vadd.f32 0.0, %v1835
        %v1837 = vpop.f32.mrb[0].mxu0
        %v1838 = vpop.f32.mrb[0].mxu0
        %v1839 = vadd.f32 0.0, %v1838
        %v1840 = vpop.f32.mrb[0].mxu0
        %1841 = vmatprep.mubr.bf16.mxu0 0
        %1842 = vmatmul.mubr.bf16.gmra.mrb[0].mxu0 %v1726
        %v1843 = vpop.f32.mrb[0].mxu0
        %v1844 = vadd.f32 0.0, %v1843
        %v1845 = vpop.f32.mrb[0].mxu0
        %v1846 = vpop.f32.mrb[0].mxu0
        %v1847 = vadd.f32 0.0, %v1846
        %v1848 = vpop.f32.mrb[0].mxu0
        %1849 = vmatprep.mubr.bf16.mxu0 0
        %1850 = vmatmul.mubr.bf16.gmra.mrb[0].mxu0 %v1727
        %v1851 = vpop.f32.mrb[0].mxu0
        %v1852 = vadd.f32 0.0, %v1851
        %v1853 = vpop.f32.mrb[0].mxu0
        %v1854 = vpop.f32.mrb[0].mxu0
        %v1855 = vadd.f32 0.0, %v1854
        %v1856 = vpop.f32.mrb[0].mxu0
        %1857 = vdwg.mxu0
        %v1858 = vadd.f32 %v1700, %v1828
        %v1859 = vadd.f32 %v1701, %v1831
        %v1860 = vadd.f32 %v1702, %v1836
        %v1861 = vadd.f32 %v1703, %v1839
        %v1862 = vadd.f32 %v1704, %v1844
        %v1863 = vadd.f32 %v1705, %v1847
        %v1864 = vadd.f32 %v1706, %v1852
        %v1865 = vadd.f32 %v1707, %v1855
        %v1866 = vld [vmem:[%s4] sm:$0x1]
        %v1868 = vlaneseq
        %v1869 = vshrl.u32 %v1868, 7
        %v1870 = vsub.s32 0, %v1869
        %v1871 = vrot.slane %v1866, %v1870
        %v1873 = vadd.f32 %v1858, %v1871
        %v1874 = vadd.f32 %v1859, %v1871
        %v1875 = vadd.f32 %v1860, %v1871
        %v1876 = vadd.f32 %v1861, %v1871
        %v1877 = vadd.f32 %v1862, %v1871
        %v1878 = vadd.f32 %v1863, %v1871
        %v1879 = vadd.f32 %v1864, %v1871
        %v1880 = vadd.f32 %v1865, %v1871
        %v1881 = vmax.f32 %v1873, 0.0
        %v1882 = vmax.f32 %v1874, 0.0
        %v1883 = vmax.f32 %v1875, 0.0
        %v1884 = vmax.f32 %v1876, 0.0
        %v1885 = vmax.f32 %v1877, 0.0
        %v1886 = vmax.f32 %v1878, 0.0
        %v1887 = vmax.f32 %v1879, 0.0
        %v1888 = vmax.f32 %v1880, 0.0
        %v1889 = vrot.slane %v1881, 7
        %v1890 = vrot.slane %v1882, 7
        %v1891 = vrot.slane %v1883, 7
        %v1892 = vrot.slane %v1884, 7
        %v1893 = vrot.slane %v1885, 7
        %v1894 = vrot.slane %v1886, 7
        %v1895 = vrot.slane %v1887, 7
        %v1896 = vrot.slane %v1888, 7
        %v1897 = vsel %vm483, %v1895, %v1896
        %v1898 = vsel %vm483, %v1894, %v1895
        %v1899 = vsel %vm483, %v1893, %v1894
        %v1900 = vsel %vm483, %v1892, %v1893
        %v1901 = vsel %vm483, %v1891, %v1892
        %v1902 = vsel %vm483, %v1890, %v1891
        %v1903 = vsel %vm483, %v1889, %v1890
        %v1904 = vsel %vm483, %v1896, %v1889
        %v1905 = vsel %vm492, %v1897, 0.0
        %v1906 = vsel %vm493, %v1904, 0.0
        %v1907 = vsel %vm494, %v1903, 0.0
        %v1908 = vsel %vm495, %v1902, 0.0
        %v1909 = vsel %vm496, %v1901, 0.0
        %v1910 = vsel %vm497, %v1900, 0.0
        %v1911 = vsel %vm498, %v1899, 0.0
        %v1912 = vsel %vm499, %v1898, 0.0
        %v1913 = vpack.c.bf16 %v1906, %v1905
        %v1914 = vpack.c.bf16 %v1908, %v1907
        %v1915 = vpack.c.bf16 %v1910, %v1909
        %v1916 = vpack.c.bf16 %v1912, %v1911
        %v1917 = vld [vmem:[%s5] sm:$0xf]
        %v1918 = vld [vmem:[%s5 + $0x4] sm:$0xf]
        %v1919 = vld [vmem:[%s5 + $0x8] sm:$0xf]
        %v1920 = vld [vmem:[%s5 + $0xc] sm:$0xf]
        %v1921 = vld [vmem:[%s5 + $0x10] sm:$0xf]
        %v1922 = vld [vmem:[%s5 + $0x14] sm:$0xf]
        %v1923 = vld [vmem:[%s5 + $0x18] sm:$0xf]
        %v1924 = vld [vmem:[%s5 + $0x1c] sm:$0xf]
        %v1925 = vld [vmem:[%s5 + $0x20] sm:$0xf]
        %v1926 = vld [vmem:[%s5 + $0x24] sm:$0xf]
        %v1927 = vld [vmem:[%s5 + $0x28] sm:$0xf]
        %v1928 = vld [vmem:[%s5 + $0x2c] sm:$0xf]
        %v1929 = vld [vmem:[%s5 + $0x30] sm:$0xf]
        %v1930 = vld [vmem:[%s5 + $0x34] sm:$0xf]
        %v1931 = vld [vmem:[%s5 + $0x38] sm:$0xf]
        %v1932 = vld [vmem:[%s5 + $0x3c] sm:$0xf]
        %v1933 = vsel %vm443, %v1888, 0.0
        %v1934 = vsel %vm444, %v1881, 0.0
        %v1935 = vsel %vm445, %v1882, 0.0
        %v1936 = vsel %vm446, %v1883, 0.0
        %v1937 = vsel %vm447, %v1884, 0.0
        %v1938 = vsel %vm448, %v1885, 0.0
        %v1939 = vsel %vm449, %v1886, 0.0
        %v1940 = vsel %vm450, %v1887, 0.0
        %v1941 = vpack.c.bf16 %v1934, %v1933
        %v1942 = vpack.c.bf16 %v1936, %v1935
        %v1943 = vpack.c.bf16 %v1938, %v1937
        %v1944 = vpack.c.bf16 %v1940, %v1939
        %s1945 = scalar_lea.vmem %s5, 64
        %v1946 = vld [vmem:[%s1945] sm:$0xf]
        %v1947 = vld [vmem:[%s1945 + $0x4] sm:$0xf]
        %v1948 = vld [vmem:[%s1945 + $0x8] sm:$0xf]
        %v1949 = vld [vmem:[%s1945 + $0xc] sm:$0xf]
        %v1950 = vld [vmem:[%s1945 + $0x10] sm:$0xf]
        %v1951 = vld [vmem:[%s1945 + $0x14] sm:$0xf]
        %v1952 = vld [vmem:[%s1945 + $0x18] sm:$0xf]
        %v1953 = vld [vmem:[%s1945 + $0x1c] sm:$0xf]
        %v1954 = vld [vmem:[%s1945 + $0x20] sm:$0xf]
        %v1955 = vld [vmem:[%s1945 + $0x24] sm:$0xf]
        %v1956 = vld [vmem:[%s1945 + $0x28] sm:$0xf]
        %v1957 = vld [vmem:[%s1945 + $0x2c] sm:$0xf]
        %v1958 = vld [vmem:[%s1945 + $0x30] sm:$0xf]
        %v1959 = vld [vmem:[%s1945 + $0x34] sm:$0xf]
        %v1960 = vld [vmem:[%s1945 + $0x38] sm:$0xf]
        %v1961 = vld [vmem:[%s1945 + $0x3c] sm:$0xf]
        %v1978 = vunpack.c.l.b16 %v1946
        %v1979 = vunpack.c.l.b16 %v1947
        %v1980 = vunpack.c.l.b16 %v1948
        %v1981 = vunpack.c.l.b16 %v1949
        %v1982 = vunpack.c.l.b16 %v1950
        %v1983 = vunpack.c.l.b16 %v1951
        %v1984 = vunpack.c.l.b16 %v1952
        %v1985 = vunpack.c.l.b16 %v1953
        %v1986 = vunpack.c.l.b16 %v1954
        %v1987 = vunpack.c.l.b16 %v1955
        %v1988 = vunpack.c.l.b16 %v1956
        %v1989 = vunpack.c.l.b16 %v1957
        %v1990 = vunpack.c.l.b16 %v1958
        %v1991 = vunpack.c.l.b16 %v1959
        %v1992 = vunpack.c.l.b16 %v1960
        %v1993 = vunpack.c.l.b16 %v1961
        %v1994 = vpack.c.b16 %v1979, %v1978
        %v1995 = vpack.c.b16 %v1981, %v1980
        %v1996 = vpack.c.b16 %v1983, %v1982
        %v1997 = vpack.c.b16 %v1985, %v1984
        %v1998 = vpack.c.b16 %v1987, %v1986
        %v1999 = vpack.c.b16 %v1989, %v1988
        %v2000 = vpack.c.b16 %v1991, %v1990
        %v2001 = vpack.c.b16 %v1993, %v1992
        %2010 = vmatprep.subr.bf16.mxu0 0
        %2011 = vmatpush1.bf16.msra.mxu0 %v1994
        %2012 = vmatprep.subr.bf16.mxu0 0
        %2013 = vmatpush1.bf16.msra.mxu0 %v1995
        %2014 = vmatprep.subr.bf16.mxu0 0
        %2015 = vmatpush1.bf16.msra.mxu0 %v1996
        %2016 = vmatprep.subr.bf16.mxu0 0
        %2017 = vmatpush1.bf16.msra.mxu0 %v1997
        %2018 = vmatprep.subr.bf16.mxu0 0
        %2019 = vmatpush1.bf16.msra.mxu0 %v1998
        %2020 = vmatprep.subr.bf16.mxu0 0
        %2021 = vmatpush1.bf16.msra.mxu0 %v1999
        %2022 = vmatprep.subr.bf16.mxu0 0
        %2023 = vmatpush1.bf16.msra.mxu0 %v2000
        %2024 = vmatprep.subr.bf16.mxu0 0
        %2025 = vmatpush1.bf16.msra.mxu0 %v2001
        %2026 = vmatprep.subr.bf16.mxu0 0
        %2027 = vmatpush1.bf16.msra.mxu0 0
        %2028 = vmatprep.subr.bf16.mxu0 0
        %2029 = vmatpush1.bf16.msra.mxu0 0
        %2030 = vmatprep.subr.bf16.mxu0 0
        %2031 = vmatpush1.bf16.msra.mxu0 0
        %2032 = vmatprep.subr.bf16.mxu0 0
        %2033 = vmatpush1.bf16.msra.mxu0 0
        %2034 = vmatprep.subr.bf16.mxu0 0
        %2035 = vmatpush1.bf16.msra.mxu0 0
        %2036 = vmatprep.subr.bf16.mxu0 0
        %2037 = vmatpush1.bf16.msra.mxu0 0
        %2038 = vmatprep.subr.bf16.mxu0 0
        %2039 = vmatpush1.bf16.msra.mxu0 0
        %2040 = vmatprep.subr.bf16.mxu0 0
        %2041 = vmatpush1.bf16.msra.mxu0 0
        %2042 = vmatprep.mubr.bf16.mxu0 0
        %2043 = vmatmul.mubr.bf16.gmra.mrb[0].mxu0 %v1941
        %v2044 = vpop.f32.mrb[0].mxu0
        %v2045 = vadd.f32 0.0, %v2044
        %v2046 = vpop.f32.mrb[0].mxu0
        %v2047 = vpop.f32.mrb[0].mxu0
        %v2048 = vadd.f32 0.0, %v2047
        %v2049 = vpop.f32.mrb[0].mxu0
        %2050 = vmatprep.mubr.bf16.mxu0 0
        %2051 = vmatmul.mubr.bf16.gmra.mrb[0].mxu0 %v1942
        %v2052 = vpop.f32.mrb[0].mxu0
        %v2053 = vadd.f32 0.0, %v2052
        %v2054 = vpop.f32.mrb[0].mxu0
        %v2055 = vpop.f32.mrb[0].mxu0
        %v2056 = vadd.f32 0.0, %v2055
        %v2057 = vpop.f32.mrb[0].mxu0
        %2058 = vmatprep.mubr.bf16.mxu0 0
        %2059 = vmatmul.mubr.bf16.gmra.mrb[0].mxu0 %v1943
        %v2060 = vpop.f32.mrb[0].mxu0
        %v2061 = vadd.f32 0.0, %v2060
        %v2062 = vpop.f32.mrb[0].mxu0
        %v2063 = vpop.f32.mrb[0].mxu0
        %v2064 = vadd.f32 0.0, %v2063
        %v2065 = vpop.f32.mrb[0].mxu0
        %2066 = vmatprep.mubr.bf16.mxu0 0
        %2067 = vmatmul.mubr.bf16.gmra.mrb[0].mxu0 %v1944
        %v2068 = vpop.f32.mrb[0].mxu0
        %v2069 = vadd.f32 0.0, %v2068
        %v2070 = vpop.f32.mrb[0].mxu0
        %v2071 = vpop.f32.mrb[0].mxu0
        %v2072 = vadd.f32 0.0, %v2071
        %v2073 = vpop.f32.mrb[0].mxu0
        %2074 = vdwg.mxu0
        %v2091 = vunpack.c.l.b16 %v1917
        %v2092 = vunpack.c.l.b16 %v1918
        %v2093 = vunpack.c.l.b16 %v1919
        %v2094 = vunpack.c.l.b16 %v1920
        %v2095 = vunpack.c.l.b16 %v1921
        %v2096 = vunpack.c.l.b16 %v1922
        %v2097 = vunpack.c.l.b16 %v1923
        %v2098 = vunpack.c.l.b16 %v1924
        %v2099 = vunpack.c.l.b16 %v1925
        %v2100 = vunpack.c.l.b16 %v1926
        %v2101 = vunpack.c.l.b16 %v1927
        %v2102 = vunpack.c.l.b16 %v1928
        %v2103 = vunpack.c.l.b16 %v1929
        %v2104 = vunpack.c.l.b16 %v1930
        %v2105 = vunpack.c.l.b16 %v1931
        %v2106 = vunpack.c.l.b16 %v1932
        %v2107 = vpack.c.b16 %v2092, %v2091
        %v2108 = vpack.c.b16 %v2094, %v2093
        %v2109 = vpack.c.b16 %v2096, %v2095
        %v2110 = vpack.c.b16 %v2098, %v2097
        %v2111 = vpack.c.b16 %v2100, %v2099
        %v2112 = vpack.c.b16 %v2102, %v2101
        %v2113 = vpack.c.b16 %v2104, %v2103
        %v2114 = vpack.c.b16 %v2106, %v2105
        %2123 = vmatprep.subr.bf16.mxu0 0
        %2124 = vmatpush1.bf16.msra.mxu0 %v2107
        %2125 = vmatprep.subr.bf16.mxu0 0
        %2126 = vmatpush1.bf16.msra.mxu0 %v2108
        %2127 = vmatprep.subr.bf16.mxu0 0
        %2128 = vmatpush1.bf16.msra.mxu0 %v2109
        %2129 = vmatprep.subr.bf16.mxu0 0
        %2130 = vmatpush1.bf16.msra.mxu0 %v2110
        %2131 = vmatprep.subr.bf16.mxu0 0
        %2132 = vmatpush1.bf16.msra.mxu0 %v2111
        %2133 = vmatprep.subr.bf16.mxu0 0
        %2134 = vmatpush1.bf16.msra.mxu0 %v2112
        %2135 = vmatprep.subr.bf16.mxu0 0
        %2136 = vmatpush1.bf16.msra.mxu0 %v2113
        %2137 = vmatprep.subr.bf16.mxu0 0
        %2138 = vmatpush1.bf16.msra.mxu0 %v2114
        %2139 = vmatprep.subr.bf16.mxu0 0
        %2140 = vmatpush1.bf16.msra.mxu0 0
        %2141 = vmatprep.subr.bf16.mxu0 0
        %2142 = vmatpush1.bf16.msra.mxu0 0
        %2143 = vmatprep.subr.bf16.mxu0 0
        %2144 = vmatpush1.bf16.msra.mxu0 0
        %2145 = vmatprep.subr.bf16.mxu0 0
        %2146 = vmatpush1.bf16.msra.mxu0 0
        %2147 = vmatprep.subr.bf16.mxu0 0
        %2148 = vmatpush1.bf16.msra.mxu0 0
        %2149 = vmatprep.subr.bf16.mxu0 0
        %2150 = vmatpush1.bf16.msra.mxu0 0
        %2151 = vmatprep.subr.bf16.mxu0 0
        %2152 = vmatpush1.bf16.msra.mxu0 0
        %2153 = vmatprep.subr.bf16.mxu0 0
        %2154 = vmatpush1.bf16.msra.mxu0 0
        %2155 = vmatprep.mubr.bf16.mxu0 0
        %2156 = vmatmul.mubr.bf16.gmra.mrb[0].mxu0 %v1913
        %v2157 = vpop.f32.mrb[0].mxu0
        %v2158 = vadd.f32 %v2045, %v2157
        %v2159 = vpop.f32.mrb[0].mxu0
        %v2160 = vpop.f32.mrb[0].mxu0
        %v2161 = vadd.f32 %v2048, %v2160
        %v2162 = vpop.f32.mrb[0].mxu0
        %2163 = vmatprep.mubr.bf16.mxu0 0
        %2164 = vmatmul.mubr.bf16.gmra.mrb[0].mxu0 %v1914
        %v2165 = vpop.f32.mrb[0].mxu0
        %v2166 = vadd.f32 %v2053, %v2165
        %v2167 = vpop.f32.mrb[0].mxu0
        %v2168 = vpop.f32.mrb[0].mxu0
        %v2169 = vadd.f32 %v2056, %v2168
        %v2170 = vpop.f32.mrb[0].mxu0
        %2171 = vmatprep.mubr.bf16.mxu0 0
        %2172 = vmatmul.mubr.bf16.gmra.mrb[0].mxu0 %v1915
        %v2173 = vpop.f32.mrb[0].mxu0
        %v2174 = vadd.f32 %v2061, %v2173
        %v2175 = vpop.f32.mrb[0].mxu0
        %v2176 = vpop.f32.mrb[0].mxu0
        %v2177 = vadd.f32 %v2064, %v2176
        %v2178 = vpop.f32.mrb[0].mxu0
        %2179 = vmatprep.mubr.bf16.mxu0 0
        %2180 = vmatmul.mubr.bf16.gmra.mrb[0].mxu0 %v1916
        %v2181 = vpop.f32.mrb[0].mxu0
        %v2182 = vadd.f32 %v2069, %v2181
        %v2183 = vpop.f32.mrb[0].mxu0
        %v2184 = vpop.f32.mrb[0].mxu0
        %v2185 = vadd.f32 %v2072, %v2184
        %v2186 = vpop.f32.mrb[0].mxu0
        %2187 = vdwg.mxu0
        %v2188 = vrot.slane %v1881, 1
        %v2189 = vrot.slane %v1882, 1
        %v2190 = vrot.slane %v1883, 1
        %v2191 = vrot.slane %v1884, 1
        %v2192 = vrot.slane %v1885, 1
        %v2193 = vrot.slane %v1886, 1
        %v2194 = vrot.slane %v1887, 1
        %v2195 = vrot.slane %v1888, 1
        %v2196 = vsel %vm791, %v2194, %v2195
        %v2197 = vsel %vm791, %v2193, %v2194
        %v2198 = vsel %vm791, %v2192, %v2193
        %v2199 = vsel %vm791, %v2191, %v2192
        %v2200 = vsel %vm791, %v2190, %v2191
        %v2201 = vsel %vm791, %v2189, %v2190
        %v2202 = vsel %vm791, %v2188, %v2189
        %v2203 = vsel %vm791, %v2195, %v2188
        %v2204 = vsel %vm800, %v2203, 0.0
        %v2205 = vsel %vm801, %v2202, 0.0
        %v2206 = vsel %vm802, %v2201, 0.0
        %v2207 = vsel %vm803, %v2200, 0.0
        %v2208 = vsel %vm804, %v2199, 0.0
        %v2209 = vsel %vm805, %v2198, 0.0
        %v2210 = vsel %vm806, %v2197, 0.0
        %v2211 = vsel %vm807, %v2196, 0.0
        %v2212 = vpack.c.bf16 %v2205, %v2204
        %v2213 = vpack.c.bf16 %v2207, %v2206
        %v2214 = vpack.c.bf16 %v2209, %v2208
        %v2215 = vpack.c.bf16 %v2211, %v2210
        %s2216 = scalar_lea.vmem %s5, 128
        %v2217 = vld [vmem:[%s2216] sm:$0xf]
        %v2218 = vld [vmem:[%s2216 + $0x4] sm:$0xf]
        %v2219 = vld [vmem:[%s2216 + $0x8] sm:$0xf]
        %v2220 = vld [vmem:[%s2216 + $0xc] sm:$0xf]
        %v2221 = vld [vmem:[%s2216 + $0x10] sm:$0xf]
        %v2222 = vld [vmem:[%s2216 + $0x14] sm:$0xf]
        %v2223 = vld [vmem:[%s2216 + $0x18] sm:$0xf]
        %v2224 = vld [vmem:[%s2216 + $0x1c] sm:$0xf]
        %v2225 = vld [vmem:[%s2216 + $0x20] sm:$0xf]
        %v2226 = vld [vmem:[%s2216 + $0x24] sm:$0xf]
        %v2227 = vld [vmem:[%s2216 + $0x28] sm:$0xf]
        %v2228 = vld [vmem:[%s2216 + $0x2c] sm:$0xf]
        %v2229 = vld [vmem:[%s2216 + $0x30] sm:$0xf]
        %v2230 = vld [vmem:[%s2216 + $0x34] sm:$0xf]
        %v2231 = vld [vmem:[%s2216 + $0x38] sm:$0xf]
        %v2232 = vld [vmem:[%s2216 + $0x3c] sm:$0xf]
        %v2249 = vunpack.c.l.b16 %v2217
        %v2250 = vunpack.c.l.b16 %v2218
        %v2251 = vunpack.c.l.b16 %v2219
        %v2252 = vunpack.c.l.b16 %v2220
        %v2253 = vunpack.c.l.b16 %v2221
        %v2254 = vunpack.c.l.b16 %v2222
        %v2255 = vunpack.c.l.b16 %v2223
        %v2256 = vunpack.c.l.b16 %v2224
        %v2257 = vunpack.c.l.b16 %v2225
        %v2258 = vunpack.c.l.b16 %v2226
        %v2259 = vunpack.c.l.b16 %v2227
        %v2260 = vunpack.c.l.b16 %v2228
        %v2261 = vunpack.c.l.b16 %v2229
        %v2262 = vunpack.c.l.b16 %v2230
        %v2263 = vunpack.c.l.b16 %v2231
        %v2264 = vunpack.c.l.b16 %v2232
        %v2265 = vpack.c.b16 %v2250, %v2249
        %v2266 = vpack.c.b16 %v2252, %v2251
        %v2267 = vpack.c.b16 %v2254, %v2253
        %v2268 = vpack.c.b16 %v2256, %v2255
        %v2269 = vpack.c.b16 %v2258, %v2257
        %v2270 = vpack.c.b16 %v2260, %v2259
        %v2271 = vpack.c.b16 %v2262, %v2261
        %v2272 = vpack.c.b16 %v2264, %v2263
        %2281 = vmatprep.subr.bf16.mxu0 0
        %2282 = vmatpush1.bf16.msra.mxu0 %v2265
        %2283 = vmatprep.subr.bf16.mxu0 0
        %2284 = vmatpush1.bf16.msra.mxu0 %v2266
        %2285 = vmatprep.subr.bf16.mxu0 0
        %2286 = vmatpush1.bf16.msra.mxu0 %v2267
        %2287 = vmatprep.subr.bf16.mxu0 0
        %2288 = vmatpush1.bf16.msra.mxu0 %v2268
        %2289 = vmatprep.subr.bf16.mxu0 0
        %2290 = vmatpush1.bf16.msra.mxu0 %v2269
        %2291 = vmatprep.subr.bf16.mxu0 0
        %2292 = vmatpush1.bf16.msra.mxu0 %v2270
        %2293 = vmatprep.subr.bf16.mxu0 0
        %2294 = vmatpush1.bf16.msra.mxu0 %v2271
        %2295 = vmatprep.subr.bf16.mxu0 0
        %2296 = vmatpush1.bf16.msra.mxu0 %v2272
        %2297 = vmatprep.subr.bf16.mxu0 0
        %2298 = vmatpush1.bf16.msra.mxu0 0
        %2299 = vmatprep.subr.bf16.mxu0 0
        %2300 = vmatpush1.bf16.msra.mxu0 0
        %2301 = vmatprep.subr.bf16.mxu0 0
        %2302 = vmatpush1.bf16.msra.mxu0 0
        %2303 = vmatprep.subr.bf16.mxu0 0
        %2304 = vmatpush1.bf16.msra.mxu0 0
        %2305 = vmatprep.subr.bf16.mxu0 0
        %2306 = vmatpush1.bf16.msra.mxu0 0
        %2307 = vmatprep.subr.bf16.mxu0 0
        %2308 = vmatpush1.bf16.msra.mxu0 0
        %2309 = vmatprep.subr.bf16.mxu0 0
        %2310 = vmatpush1.bf16.msra.mxu0 0
        %2311 = vmatprep.subr.bf16.mxu0 0
        %2312 = vmatpush1.bf16.msra.mxu0 0
        %2313 = vmatprep.mubr.bf16.mxu0 0
        %2314 = vmatmul.mubr.bf16.gmra.mrb[0].mxu0 %v2212
        %v2315 = vpop.f32.mrb[0].mxu0
        %v2316 = vadd.f32 0.0, %v2315
        %v2317 = vpop.f32.mrb[0].mxu0
        %v2318 = vpop.f32.mrb[0].mxu0
        %v2319 = vadd.f32 0.0, %v2318
        %v2320 = vpop.f32.mrb[0].mxu0
        %2321 = vmatprep.mubr.bf16.mxu0 0
        %2322 = vmatmul.mubr.bf16.gmra.mrb[0].mxu0 %v2213
        %v2323 = vpop.f32.mrb[0].mxu0
        %v2324 = vadd.f32 0.0, %v2323
        %v2325 = vpop.f32.mrb[0].mxu0
        %v2326 = vpop.f32.mrb[0].mxu0
        %v2327 = vadd.f32 0.0, %v2326
        %v2328 = vpop.f32.mrb[0].mxu0
        %2329 = vmatprep.mubr.bf16.mxu0 0
        %2330 = vmatmul.mubr.bf16.gmra.mrb[0].mxu0 %v2214
        %v2331 = vpop.f32.mrb[0].mxu0
        %v2332 = vadd.f32 0.0, %v2331
        %v2333 = vpop.f32.mrb[0].mxu0
        %v2334 = vpop.f32.mrb[0].mxu0
        %v2335 = vadd.f32 0.0, %v2334
        %v2336 = vpop.f32.mrb[0].mxu0
        %2337 = vmatprep.mubr.bf16.mxu0 0
        %2338 = vmatmul.mubr.bf16.gmra.mrb[0].mxu0 %v2215
        %v2339 = vpop.f32.mrb[0].mxu0
        %v2340 = vadd.f32 0.0, %v2339
        %v2341 = vpop.f32.mrb[0].mxu0
        %v2342 = vpop.f32.mrb[0].mxu0
        %v2343 = vadd.f32 0.0, %v2342
        %v2344 = vpop.f32.mrb[0].mxu0
        %2345 = vdwg.mxu0
        %v2346 = vadd.f32 %v2158, %v2316
        %v2347 = vadd.f32 %v2161, %v2319
        %v2348 = vadd.f32 %v2166, %v2324
        %v2349 = vadd.f32 %v2169, %v2327
        %v2350 = vadd.f32 %v2174, %v2332
        %v2351 = vadd.f32 %v2177, %v2335
        %v2352 = vadd.f32 %v2182, %v2340
        %v2353 = vadd.f32 %v2185, %v2343
        %v2354 = vsel %vm459, %v1904, 0.0
        %v2355 = vsel %vm460, %v1903, 0.0
        %v2356 = vsel %vm461, %v1902, 0.0
        %v2357 = vsel %vm462, %v1901, 0.0
        %v2358 = vsel %vm463, %v1900, 0.0
        %v2359 = vsel %vm464, %v1899, 0.0
        %v2360 = vsel %vm465, %v1898, 0.0
        %v2361 = vsel %vm466, %v1897, 0.0
        %v2362 = vpack.c.bf16 %v2355, %v2354
        %v2363 = vpack.c.bf16 %v2357, %v2356
        %v2364 = vpack.c.bf16 %v2359, %v2358
        %v2365 = vpack.c.bf16 %v2361, %v2360
        %s2366 = scalar_lea.vmem %s5, 192
        %v2367 = vld [vmem:[%s2366] sm:$0xf]
        %v2368 = vld [vmem:[%s2366 + $0x4] sm:$0xf]
        %v2369 = vld [vmem:[%s2366 + $0x8] sm:$0xf]
        %v2370 = vld [vmem:[%s2366 + $0xc] sm:$0xf]
        %v2371 = vld [vmem:[%s2366 + $0x10] sm:$0xf]
        %v2372 = vld [vmem:[%s2366 + $0x14] sm:$0xf]
        %v2373 = vld [vmem:[%s2366 + $0x18] sm:$0xf]
        %v2374 = vld [vmem:[%s2366 + $0x1c] sm:$0xf]
        %v2375 = vld [vmem:[%s2366 + $0x20] sm:$0xf]
        %v2376 = vld [vmem:[%s2366 + $0x24] sm:$0xf]
        %v2377 = vld [vmem:[%s2366 + $0x28] sm:$0xf]
        %v2378 = vld [vmem:[%s2366 + $0x2c] sm:$0xf]
        %v2379 = vld [vmem:[%s2366 + $0x30] sm:$0xf]
        %v2380 = vld [vmem:[%s2366 + $0x34] sm:$0xf]
        %v2381 = vld [vmem:[%s2366 + $0x38] sm:$0xf]
        %v2382 = vld [vmem:[%s2366 + $0x3c] sm:$0xf]
        %v2399 = vunpack.c.l.b16 %v2367
        %v2400 = vunpack.c.l.b16 %v2368
        %v2401 = vunpack.c.l.b16 %v2369
        %v2402 = vunpack.c.l.b16 %v2370
        %v2403 = vunpack.c.l.b16 %v2371
        %v2404 = vunpack.c.l.b16 %v2372
        %v2405 = vunpack.c.l.b16 %v2373
        %v2406 = vunpack.c.l.b16 %v2374
        %v2407 = vunpack.c.l.b16 %v2375
        %v2408 = vunpack.c.l.b16 %v2376
        %v2409 = vunpack.c.l.b16 %v2377
        %v2410 = vunpack.c.l.b16 %v2378
        %v2411 = vunpack.c.l.b16 %v2379
        %v2412 = vunpack.c.l.b16 %v2380
        %v2413 = vunpack.c.l.b16 %v2381
        %v2414 = vunpack.c.l.b16 %v2382
        %v2415 = vpack.c.b16 %v2400, %v2399
        %v2416 = vpack.c.b16 %v2402, %v2401
        %v2417 = vpack.c.b16 %v2404, %v2403
        %v2418 = vpack.c.b16 %v2406, %v2405
        %v2419 = vpack.c.b16 %v2408, %v2407
        %v2420 = vpack.c.b16 %v2410, %v2409
        %v2421 = vpack.c.b16 %v2412, %v2411
        %v2422 = vpack.c.b16 %v2414, %v2413
        %2431 = vmatprep.subr.bf16.mxu0 0
        %2432 = vmatpush1.bf16.msra.mxu0 %v2415
        %2433 = vmatprep.subr.bf16.mxu0 0
        %2434 = vmatpush1.bf16.msra.mxu0 %v2416
        %2435 = vmatprep.subr.bf16.mxu0 0
        %2436 = vmatpush1.bf16.msra.mxu0 %v2417
        %2437 = vmatprep.subr.bf16.mxu0 0
        %2438 = vmatpush1.bf16.msra.mxu0 %v2418
        %2439 = vmatprep.subr.bf16.mxu0 0
        %2440 = vmatpush1.bf16.msra.mxu0 %v2419
        %2441 = vmatprep.subr.bf16.mxu0 0
        %2442 = vmatpush1.bf16.msra.mxu0 %v2420
        %2443 = vmatprep.subr.bf16.mxu0 0
        %2444 = vmatpush1.bf16.msra.mxu0 %v2421
        %2445 = vmatprep.subr.bf16.mxu0 0
        %2446 = vmatpush1.bf16.msra.mxu0 %v2422
        %2447 = vmatprep.subr.bf16.mxu0 0
        %2448 = vmatpush1.bf16.msra.mxu0 0
        %2449 = vmatprep.subr.bf16.mxu0 0
        %2450 = vmatpush1.bf16.msra.mxu0 0
        %2451 = vmatprep.subr.bf16.mxu0 0
        %2452 = vmatpush1.bf16.msra.mxu0 0
        %2453 = vmatprep.subr.bf16.mxu0 0
        %2454 = vmatpush1.bf16.msra.mxu0 0
        %2455 = vmatprep.subr.bf16.mxu0 0
        %2456 = vmatpush1.bf16.msra.mxu0 0
        %2457 = vmatprep.subr.bf16.mxu0 0
        %2458 = vmatpush1.bf16.msra.mxu0 0
        %2459 = vmatprep.subr.bf16.mxu0 0
        %2460 = vmatpush1.bf16.msra.mxu0 0
        %2461 = vmatprep.subr.bf16.mxu0 0
        %2462 = vmatpush1.bf16.msra.mxu0 0
        %2463 = vmatprep.mubr.bf16.mxu0 0
        %2464 = vmatmul.mubr.bf16.gmra.mrb[0].mxu0 %v2362
        %v2465 = vpop.f32.mrb[0].mxu0
        %v2466 = vadd.f32 0.0, %v2465
        %v2467 = vpop.f32.mrb[0].mxu0
        %v2468 = vpop.f32.mrb[0].mxu0
        %v2469 = vadd.f32 0.0, %v2468
        %v2470 = vpop.f32.mrb[0].mxu0
        %2471 = vmatprep.mubr.bf16.mxu0 0
        %2472 = vmatmul.mubr.bf16.gmra.mrb[0].mxu0 %v2363
        %v2473 = vpop.f32.mrb[0].mxu0
        %v2474 = vadd.f32 0.0, %v2473
        %v2475 = vpop.f32.mrb[0].mxu0
        %v2476 = vpop.f32.mrb[0].mxu0
        %v2477 = vadd.f32 0.0, %v2476
        %v2478 = vpop.f32.mrb[0].mxu0
        %2479 = vmatprep.mubr.bf16.mxu0 0
        %2480 = vmatmul.mubr.bf16.gmra.mrb[0].mxu0 %v2364
        %v2481 = vpop.f32.mrb[0].mxu0
        %v2482 = vadd.f32 0.0, %v2481
        %v2483 = vpop.f32.mrb[0].mxu0
        %v2484 = vpop.f32.mrb[0].mxu0
        %v2485 = vadd.f32 0.0, %v2484
        %v2486 = vpop.f32.mrb[0].mxu0
        %2487 = vmatprep.mubr.bf16.mxu0 0
        %2488 = vmatmul.mubr.bf16.gmra.mrb[0].mxu0 %v2365
        %v2489 = vpop.f32.mrb[0].mxu0
        %v2490 = vadd.f32 0.0, %v2489
        %v2491 = vpop.f32.mrb[0].mxu0
        %v2492 = vpop.f32.mrb[0].mxu0
        %v2493 = vadd.f32 0.0, %v2492
        %v2494 = vpop.f32.mrb[0].mxu0
        %2495 = vdwg.mxu0
        %v2496 = vadd.f32 %v2346, %v2466
        %v2497 = vadd.f32 %v2347, %v2469
        %v2498 = vadd.f32 %v2348, %v2474
        %v2499 = vadd.f32 %v2349, %v2477
        %v2500 = vadd.f32 %v2350, %v2482
        %v2501 = vadd.f32 %v2351, %v2485
        %v2502 = vadd.f32 %v2352, %v2490
        %v2503 = vadd.f32 %v2353, %v2493
        %v2504 = vpack.c.bf16 %v1882, %v1881
        %v2505 = vpack.c.bf16 %v1884, %v1883
        %v2506 = vpack.c.bf16 %v1886, %v1885
        %v2507 = vpack.c.bf16 %v1888, %v1887
        %s2508 = scalar_lea.vmem %s5, 256
        %v2509 = vld [vmem:[%s2508] sm:$0xf]
        %v2510 = vld [vmem:[%s2508 + $0x4] sm:$0xf]
        %v2511 = vld [vmem:[%s2508 + $0x8] sm:$0xf]
        %v2512 = vld [vmem:[%s2508 + $0xc] sm:$0xf]
        %v2513 = vld [vmem:[%s2508 + $0x10] sm:$0xf]
        %v2514 = vld [vmem:[%s2508 + $0x14] sm:$0xf]
        %v2515 = vld [vmem:[%s2508 + $0x18] sm:$0xf]
        %v2516 = vld [vmem:[%s2508 + $0x1c] sm:$0xf]
        %v2517 = vld [vmem:[%s2508 + $0x20] sm:$0xf]
        %v2518 = vld [vmem:[%s2508 + $0x24] sm:$0xf]
        %v2519 = vld [vmem:[%s2508 + $0x28] sm:$0xf]
        %v2520 = vld [vmem:[%s2508 + $0x2c] sm:$0xf]
        %v2521 = vld [vmem:[%s2508 + $0x30] sm:$0xf]
        %v2522 = vld [vmem:[%s2508 + $0x34] sm:$0xf]
        %v2523 = vld [vmem:[%s2508 + $0x38] sm:$0xf]
        %v2524 = vld [vmem:[%s2508 + $0x3c] sm:$0xf]
        %v2541 = vunpack.c.l.b16 %v2509
        %v2542 = vunpack.c.l.b16 %v2510
        %v2543 = vunpack.c.l.b16 %v2511
        %v2544 = vunpack.c.l.b16 %v2512
        %v2545 = vunpack.c.l.b16 %v2513
        %v2546 = vunpack.c.l.b16 %v2514
        %v2547 = vunpack.c.l.b16 %v2515
        %v2548 = vunpack.c.l.b16 %v2516
        %v2549 = vunpack.c.l.b16 %v2517
        %v2550 = vunpack.c.l.b16 %v2518
        %v2551 = vunpack.c.l.b16 %v2519
        %v2552 = vunpack.c.l.b16 %v2520
        %v2553 = vunpack.c.l.b16 %v2521
        %v2554 = vunpack.c.l.b16 %v2522
        %v2555 = vunpack.c.l.b16 %v2523
        %v2556 = vunpack.c.l.b16 %v2524
        %v2557 = vpack.c.b16 %v2542, %v2541
        %v2558 = vpack.c.b16 %v2544, %v2543
        %v2559 = vpack.c.b16 %v2546, %v2545
        %v2560 = vpack.c.b16 %v2548, %v2547
        %v2561 = vpack.c.b16 %v2550, %v2549
        %v2562 = vpack.c.b16 %v2552, %v2551
        %v2563 = vpack.c.b16 %v2554, %v2553
        %v2564 = vpack.c.b16 %v2556, %v2555
        %2573 = vmatprep.subr.bf16.mxu0 0
        %2574 = vmatpush1.bf16.msra.mxu0 %v2557
        %2575 = vmatprep.subr.bf16.mxu0 0
        %2576 = vmatpush1.bf16.msra.mxu0 %v2558
        %2577 = vmatprep.subr.bf16.mxu0 0
        %2578 = vmatpush1.bf16.msra.mxu0 %v2559
        %2579 = vmatprep.subr.bf16.mxu0 0
        %2580 = vmatpush1.bf16.msra.mxu0 %v2560
        %2581 = vmatprep.subr.bf16.mxu0 0
        %2582 = vmatpush1.bf16.msra.mxu0 %v2561
        %2583 = vmatprep.subr.bf16.mxu0 0
        %2584 = vmatpush1.bf16.msra.mxu0 %v2562
        %2585 = vmatprep.subr.bf16.mxu0 0
        %2586 = vmatpush1.bf16.msra.mxu0 %v2563
        %2587 = vmatprep.subr.bf16.mxu0 0
        %2588 = vmatpush1.bf16.msra.mxu0 %v2564
        %2589 = vmatprep.subr.bf16.mxu0 0
        %2590 = vmatpush1.bf16.msra.mxu0 0
        %2591 = vmatprep.subr.bf16.mxu0 0
        %2592 = vmatpush1.bf16.msra.mxu0 0
        %2593 = vmatprep.subr.bf16.mxu0 0
        %2594 = vmatpush1.bf16.msra.mxu0 0
        %2595 = vmatprep.subr.bf16.mxu0 0
        %2596 = vmatpush1.bf16.msra.mxu0 0
        %2597 = vmatprep.subr.bf16.mxu0 0
        %2598 = vmatpush1.bf16.msra.mxu0 0
        %2599 = vmatprep.subr.bf16.mxu0 0
        %2600 = vmatpush1.bf16.msra.mxu0 0
        %2601 = vmatprep.subr.bf16.mxu0 0
        %2602 = vmatpush1.bf16.msra.mxu0 0
        %2603 = vmatprep.subr.bf16.mxu0 0
        %2604 = vmatpush1.bf16.msra.mxu0 0
        %2605 = vmatprep.mubr.bf16.mxu0 0
        %2606 = vmatmul.mubr.bf16.gmra.mrb[0].mxu0 %v2504
        %v2607 = vpop.f32.mrb[0].mxu0
        %v2608 = vadd.f32 0.0, %v2607
        %v2609 = vpop.f32.mrb[0].mxu0
        %v2610 = vpop.f32.mrb[0].mxu0
        %v2611 = vadd.f32 0.0, %v2610
        %v2612 = vpop.f32.mrb[0].mxu0
        %2613 = vmatprep.mubr.bf16.mxu0 0
        %2614 = vmatmul.mubr.bf16.gmra.mrb[0].mxu0 %v2505
        %v2615 = vpop.f32.mrb[0].mxu0
        %v2616 = vadd.f32 0.0, %v2615
        %v2617 = vpop.f32.mrb[0].mxu0
        %v2618 = vpop.f32.mrb[0].mxu0
        %v2619 = vadd.f32 0.0, %v2618
        %v2620 = vpop.f32.mrb[0].mxu0
        %2621 = vmatprep.mubr.bf16.mxu0 0
        %2622 = vmatmul.mubr.bf16.gmra.mrb[0].mxu0 %v2506
        %v2623 = vpop.f32.mrb[0].mxu0
        %v2624 = vadd.f32 0.0, %v2623
        %v2625 = vpop.f32.mrb[0].mxu0
        %v2626 = vpop.f32.mrb[0].mxu0
        %v2627 = vadd.f32 0.0, %v2626
        %v2628 = vpop.f32.mrb[0].mxu0
        %2629 = vmatprep.mubr.bf16.mxu0 0
        %2630 = vmatmul.mubr.bf16.gmra.mrb[0].mxu0 %v2507
        %v2631 = vpop.f32.mrb[0].mxu0
        %v2632 = vadd.f32 0.0, %v2631
        %v2633 = vpop.f32.mrb[0].mxu0
        %v2634 = vpop.f32.mrb[0].mxu0
        %v2635 = vadd.f32 0.0, %v2634
        %v2636 = vpop.f32.mrb[0].mxu0
        %2637 = vdwg.mxu0
        %v2638 = vadd.f32 %v2496, %v2608
        %v2639 = vadd.f32 %v2497, %v2611
        %v2640 = vadd.f32 %v2498, %v2616
        %v2641 = vadd.f32 %v2499, %v2619
        %v2642 = vadd.f32 %v2500, %v2624
        %v2643 = vadd.f32 %v2501, %v2627
        %v2644 = vadd.f32 %v2502, %v2632
        %v2645 = vadd.f32 %v2503, %v2635
        %v2646 = vsel %vm467, %v2202, 0.0
        %v2647 = vsel %vm468, %v2201, 0.0
        %v2648 = vsel %vm469, %v2200, 0.0
        %v2649 = vsel %vm470, %v2199, 0.0
        %v2650 = vsel %vm471, %v2198, 0.0
        %v2651 = vsel %vm472, %v2197, 0.0
        %v2652 = vsel %vm473, %v2196, 0.0
        %v2653 = vsel %vm474, %v2203, 0.0
        %v2654 = vpack.c.bf16 %v2647, %v2646
        %v2655 = vpack.c.bf16 %v2649, %v2648
        %v2656 = vpack.c.bf16 %v2651, %v2650
        %v2657 = vpack.c.bf16 %v2653, %v2652
        %s2658 = scalar_lea.vmem %s5, 320
        %v2659 = vld [vmem:[%s2658] sm:$0xf]
        %v2660 = vld [vmem:[%s2658 + $0x4] sm:$0xf]
        %v2661 = vld [vmem:[%s2658 + $0x8] sm:$0xf]
        %v2662 = vld [vmem:[%s2658 + $0xc] sm:$0xf]
        %v2663 = vld [vmem:[%s2658 + $0x10] sm:$0xf]
        %v2664 = vld [vmem:[%s2658 + $0x14] sm:$0xf]
        %v2665 = vld [vmem:[%s2658 + $0x18] sm:$0xf]
        %v2666 = vld [vmem:[%s2658 + $0x1c] sm:$0xf]
        %v2667 = vld [vmem:[%s2658 + $0x20] sm:$0xf]
        %v2668 = vld [vmem:[%s2658 + $0x24] sm:$0xf]
        %v2669 = vld [vmem:[%s2658 + $0x28] sm:$0xf]
        %v2670 = vld [vmem:[%s2658 + $0x2c] sm:$0xf]
        %v2671 = vld [vmem:[%s2658 + $0x30] sm:$0xf]
        %v2672 = vld [vmem:[%s2658 + $0x34] sm:$0xf]
        %v2673 = vld [vmem:[%s2658 + $0x38] sm:$0xf]
        %v2674 = vld [vmem:[%s2658 + $0x3c] sm:$0xf]
        %v2691 = vunpack.c.l.b16 %v2659
        %v2692 = vunpack.c.l.b16 %v2660
        %v2693 = vunpack.c.l.b16 %v2661
        %v2694 = vunpack.c.l.b16 %v2662
        %v2695 = vunpack.c.l.b16 %v2663
        %v2696 = vunpack.c.l.b16 %v2664
        %v2697 = vunpack.c.l.b16 %v2665
        %v2698 = vunpack.c.l.b16 %v2666
        %v2699 = vunpack.c.l.b16 %v2667
        %v2700 = vunpack.c.l.b16 %v2668
        %v2701 = vunpack.c.l.b16 %v2669
        %v2702 = vunpack.c.l.b16 %v2670
        %v2703 = vunpack.c.l.b16 %v2671
        %v2704 = vunpack.c.l.b16 %v2672
        %v2705 = vunpack.c.l.b16 %v2673
        %v2706 = vunpack.c.l.b16 %v2674
        %v2707 = vpack.c.b16 %v2692, %v2691
        %v2708 = vpack.c.b16 %v2694, %v2693
        %v2709 = vpack.c.b16 %v2696, %v2695
        %v2710 = vpack.c.b16 %v2698, %v2697
        %v2711 = vpack.c.b16 %v2700, %v2699
        %v2712 = vpack.c.b16 %v2702, %v2701
        %v2713 = vpack.c.b16 %v2704, %v2703
        %v2714 = vpack.c.b16 %v2706, %v2705
        %2723 = vmatprep.subr.bf16.mxu0 0
        %2724 = vmatpush1.bf16.msra.mxu0 %v2707
        %2725 = vmatprep.subr.bf16.mxu0 0
        %2726 = vmatpush1.bf16.msra.mxu0 %v2708
        %2727 = vmatprep.subr.bf16.mxu0 0
        %2728 = vmatpush1.bf16.msra.mxu0 %v2709
        %2729 = vmatprep.subr.bf16.mxu0 0
        %2730 = vmatpush1.bf16.msra.mxu0 %v2710
        %2731 = vmatprep.subr.bf16.mxu0 0
        %2732 = vmatpush1.bf16.msra.mxu0 %v2711
        %2733 = vmatprep.subr.bf16.mxu0 0
        %2734 = vmatpush1.bf16.msra.mxu0 %v2712
        %2735 = vmatprep.subr.bf16.mxu0 0
        %2736 = vmatpush1.bf16.msra.mxu0 %v2713
        %2737 = vmatprep.subr.bf16.mxu0 0
        %2738 = vmatpush1.bf16.msra.mxu0 %v2714
        %2739 = vmatprep.subr.bf16.mxu0 0
        %2740 = vmatpush1.bf16.msra.mxu0 0
        %2741 = vmatprep.subr.bf16.mxu0 0
        %2742 = vmatpush1.bf16.msra.mxu0 0
        %2743 = vmatprep.subr.bf16.mxu0 0
        %2744 = vmatpush1.bf16.msra.mxu0 0
        %2745 = vmatprep.subr.bf16.mxu0 0
        %2746 = vmatpush1.bf16.msra.mxu0 0
        %2747 = vmatprep.subr.bf16.mxu0 0
        %2748 = vmatpush1.bf16.msra.mxu0 0
        %2749 = vmatprep.subr.bf16.mxu0 0
        %2750 = vmatpush1.bf16.msra.mxu0 0
        %2751 = vmatprep.subr.bf16.mxu0 0
        %2752 = vmatpush1.bf16.msra.mxu0 0
        %2753 = vmatprep.subr.bf16.mxu0 0
        %2754 = vmatpush1.bf16.msra.mxu0 0
        %2755 = vmatprep.mubr.bf16.mxu0 0
        %2756 = vmatmul.mubr.bf16.gmra.mrb[0].mxu0 %v2654
        %v2757 = vpop.f32.mrb[0].mxu0
        %v2758 = vadd.f32 0.0, %v2757
        %v2759 = vpop.f32.mrb[0].mxu0
        %v2760 = vpop.f32.mrb[0].mxu0
        %v2761 = vadd.f32 0.0, %v2760
        %v2762 = vpop.f32.mrb[0].mxu0
        %2763 = vmatprep.mubr.bf16.mxu0 0
        %2764 = vmatmul.mubr.bf16.gmra.mrb[0].mxu0 %v2655
        %v2765 = vpop.f32.mrb[0].mxu0
        %v2766 = vadd.f32 0.0, %v2765
        %v2767 = vpop.f32.mrb[0].mxu0
        %v2768 = vpop.f32.mrb[0].mxu0
        %v2769 = vadd.f32 0.0, %v2768
        %v2770 = vpop.f32.mrb[0].mxu0
        %2771 = vmatprep.mubr.bf16.mxu0 0
        %2772 = vmatmul.mubr.bf16.gmra.mrb[0].mxu0 %v2656
        %v2773 = vpop.f32.mrb[0].mxu0
        %v2774 = vadd.f32 0.0, %v2773
        %v2775 = vpop.f32.mrb[0].mxu0
        %v2776 = vpop.f32.mrb[0].mxu0
        %v2777 = vadd.f32 0.0, %v2776
        %v2778 = vpop.f32.mrb[0].mxu0
        %2779 = vmatprep.mubr.bf16.mxu0 0
        %2780 = vmatmul.mubr.bf16.gmra.mrb[0].mxu0 %v2657
        %v2781 = vpop.f32.mrb[0].mxu0
        %v2782 = vadd.f32 0.0, %v2781
        %v2783 = vpop.f32.mrb[0].mxu0
        %v2784 = vpop.f32.mrb[0].mxu0
        %v2785 = vadd.f32 0.0, %v2784
        %v2786 = vpop.f32.mrb[0].mxu0
        %2787 = vdwg.mxu0
        %v2788 = vadd.f32 %v2638, %v2758
        %v2789 = vadd.f32 %v2639, %v2761
        %v2790 = vadd.f32 %v2640, %v2766
        %v2791 = vadd.f32 %v2641, %v2769
        %v2792 = vadd.f32 %v2642, %v2774
        %v2793 = vadd.f32 %v2643, %v2777
        %v2794 = vadd.f32 %v2644, %v2782
        %v2795 = vadd.f32 %v2645, %v2785
        %v2796 = vsel %vm1400, %v1903, 0.0
        %v2797 = vsel %vm1401, %v1902, 0.0
        %v2798 = vsel %vm1402, %v1901, 0.0
        %v2799 = vsel %vm1403, %v1900, 0.0
        %v2800 = vsel %vm1404, %v1899, 0.0
        %v2801 = vsel %vm1405, %v1898, 0.0
        %v2802 = vsel %vm1406, %v1897, 0.0
        %v2803 = vsel %vm1407, %v1904, 0.0
        %v2804 = vpack.c.bf16 %v2797, %v2796
        %v2805 = vpack.c.bf16 %v2799, %v2798
        %v2806 = vpack.c.bf16 %v2801, %v2800
        %v2807 = vpack.c.bf16 %v2803, %v2802
        %s2808 = scalar_lea.vmem %s5, 384
        %v2809 = vld [vmem:[%s2808] sm:$0xf]
        %v2810 = vld [vmem:[%s2808 + $0x4] sm:$0xf]
        %v2811 = vld [vmem:[%s2808 + $0x8] sm:$0xf]
        %v2812 = vld [vmem:[%s2808 + $0xc] sm:$0xf]
        %v2813 = vld [vmem:[%s2808 + $0x10] sm:$0xf]
        %v2814 = vld [vmem:[%s2808 + $0x14] sm:$0xf]
        %v2815 = vld [vmem:[%s2808 + $0x18] sm:$0xf]
        %v2816 = vld [vmem:[%s2808 + $0x1c] sm:$0xf]
        %v2817 = vld [vmem:[%s2808 + $0x20] sm:$0xf]
        %v2818 = vld [vmem:[%s2808 + $0x24] sm:$0xf]
        %v2819 = vld [vmem:[%s2808 + $0x28] sm:$0xf]
        %v2820 = vld [vmem:[%s2808 + $0x2c] sm:$0xf]
        %v2821 = vld [vmem:[%s2808 + $0x30] sm:$0xf]
        %v2822 = vld [vmem:[%s2808 + $0x34] sm:$0xf]
        %v2823 = vld [vmem:[%s2808 + $0x38] sm:$0xf]
        %v2824 = vld [vmem:[%s2808 + $0x3c] sm:$0xf]
        %v2841 = vunpack.c.l.b16 %v2809
        %v2842 = vunpack.c.l.b16 %v2810
        %v2843 = vunpack.c.l.b16 %v2811
        %v2844 = vunpack.c.l.b16 %v2812
        %v2845 = vunpack.c.l.b16 %v2813
        %v2846 = vunpack.c.l.b16 %v2814
        %v2847 = vunpack.c.l.b16 %v2815
        %v2848 = vunpack.c.l.b16 %v2816
        %v2849 = vunpack.c.l.b16 %v2817
        %v2850 = vunpack.c.l.b16 %v2818
        %v2851 = vunpack.c.l.b16 %v2819
        %v2852 = vunpack.c.l.b16 %v2820
        %v2853 = vunpack.c.l.b16 %v2821
        %v2854 = vunpack.c.l.b16 %v2822
        %v2855 = vunpack.c.l.b16 %v2823
        %v2856 = vunpack.c.l.b16 %v2824
        %v2857 = vpack.c.b16 %v2842, %v2841
        %v2858 = vpack.c.b16 %v2844, %v2843
        %v2859 = vpack.c.b16 %v2846, %v2845
        %v2860 = vpack.c.b16 %v2848, %v2847
        %v2861 = vpack.c.b16 %v2850, %v2849
        %v2862 = vpack.c.b16 %v2852, %v2851
        %v2863 = vpack.c.b16 %v2854, %v2853
        %v2864 = vpack.c.b16 %v2856, %v2855
        %2873 = vmatprep.subr.bf16.mxu0 0
        %2874 = vmatpush1.bf16.msra.mxu0 %v2857
        %2875 = vmatprep.subr.bf16.mxu0 0
        %2876 = vmatpush1.bf16.msra.mxu0 %v2858
        %2877 = vmatprep.subr.bf16.mxu0 0
        %2878 = vmatpush1.bf16.msra.mxu0 %v2859
        %2879 = vmatprep.subr.bf16.mxu0 0
        %2880 = vmatpush1.bf16.msra.mxu0 %v2860
        %2881 = vmatprep.subr.bf16.mxu0 0
        %2882 = vmatpush1.bf16.msra.mxu0 %v2861
        %2883 = vmatprep.subr.bf16.mxu0 0
        %2884 = vmatpush1.bf16.msra.mxu0 %v2862
        %2885 = vmatprep.subr.bf16.mxu0 0
        %2886 = vmatpush1.bf16.msra.mxu0 %v2863
        %2887 = vmatprep.subr.bf16.mxu0 0
        %2888 = vmatpush1.bf16.msra.mxu0 %v2864
        %2889 = vmatprep.subr.bf16.mxu0 0
        %2890 = vmatpush1.bf16.msra.mxu0 0
        %2891 = vmatprep.subr.bf16.mxu0 0
        %2892 = vmatpush1.bf16.msra.mxu0 0
        %2893 = vmatprep.subr.bf16.mxu0 0
        %2894 = vmatpush1.bf16.msra.mxu0 0
        %2895 = vmatprep.subr.bf16.mxu0 0
        %2896 = vmatpush1.bf16.msra.mxu0 0
        %2897 = vmatprep.subr.bf16.mxu0 0
        %2898 = vmatpush1.bf16.msra.mxu0 0
        %2899 = vmatprep.subr.bf16.mxu0 0
        %2900 = vmatpush1.bf16.msra.mxu0 0
        %2901 = vmatprep.subr.bf16.mxu0 0
        %2902 = vmatpush1.bf16.msra.mxu0 0
        %2903 = vmatprep.subr.bf16.mxu0 0
        %2904 = vmatpush1.bf16.msra.mxu0 0
        %2905 = vmatprep.mubr.bf16.mxu0 0
        %2906 = vmatmul.mubr.bf16.gmra.mrb[0].mxu0 %v2804
        %v2907 = vpop.f32.mrb[0].mxu0
        %v2908 = vadd.f32 0.0, %v2907
        %v2909 = vpop.f32.mrb[0].mxu0
        %v2910 = vpop.f32.mrb[0].mxu0
        %v2911 = vadd.f32 0.0, %v2910
        %v2912 = vpop.f32.mrb[0].mxu0
        %2913 = vmatprep.mubr.bf16.mxu0 0
        %2914 = vmatmul.mubr.bf16.gmra.mrb[0].mxu0 %v2805
        %v2915 = vpop.f32.mrb[0].mxu0
        %v2916 = vadd.f32 0.0, %v2915
        %v2917 = vpop.f32.mrb[0].mxu0
        %v2918 = vpop.f32.mrb[0].mxu0
        %v2919 = vadd.f32 0.0, %v2918
        %v2920 = vpop.f32.mrb[0].mxu0
        %2921 = vmatprep.mubr.bf16.mxu0 0
        %2922 = vmatmul.mubr.bf16.gmra.mrb[0].mxu0 %v2806
        %v2923 = vpop.f32.mrb[0].mxu0
        %v2924 = vadd.f32 0.0, %v2923
        %v2925 = vpop.f32.mrb[0].mxu0
        %v2926 = vpop.f32.mrb[0].mxu0
        %v2927 = vadd.f32 0.0, %v2926
        %v2928 = vpop.f32.mrb[0].mxu0
        %2929 = vmatprep.mubr.bf16.mxu0 0
        %2930 = vmatmul.mubr.bf16.gmra.mrb[0].mxu0 %v2807
        %v2931 = vpop.f32.mrb[0].mxu0
        %v2932 = vadd.f32 0.0, %v2931
        %v2933 = vpop.f32.mrb[0].mxu0
        %v2934 = vpop.f32.mrb[0].mxu0
        %v2935 = vadd.f32 0.0, %v2934
        %v2936 = vpop.f32.mrb[0].mxu0
        %2937 = vdwg.mxu0
        %v2938 = vadd.f32 %v2788, %v2908
        %v2939 = vadd.f32 %v2789, %v2911
        %v2940 = vadd.f32 %v2790, %v2916
        %v2941 = vadd.f32 %v2791, %v2919
        %v2942 = vadd.f32 %v2792, %v2924
        %v2943 = vadd.f32 %v2793, %v2927
        %v2944 = vadd.f32 %v2794, %v2932
        %v2945 = vadd.f32 %v2795, %v2935
        %v2946 = vsel %vm451, %v1882, 0.0
        %v2947 = vsel %vm452, %v1883, 0.0
        %v2948 = vsel %vm453, %v1884, 0.0
        %v2949 = vsel %vm454, %v1885, 0.0
        %v2950 = vsel %vm455, %v1886, 0.0
        %v2951 = vsel %vm456, %v1887, 0.0
        %v2952 = vsel %vm457, %v1888, 0.0
        %v2953 = vsel %vm458, %v1881, 0.0
        %v2954 = vpack.c.bf16 %v2947, %v2946
        %v2955 = vpack.c.bf16 %v2949, %v2948
        %v2956 = vpack.c.bf16 %v2951, %v2950
        %v2957 = vpack.c.bf16 %v2953, %v2952
        %s2958 = scalar_lea.vmem %s5, 448
        %v2959 = vld [vmem:[%s2958] sm:$0xf]
        %v2960 = vld [vmem:[%s2958 + $0x4] sm:$0xf]
        %v2961 = vld [vmem:[%s2958 + $0x8] sm:$0xf]
        %v2962 = vld [vmem:[%s2958 + $0xc] sm:$0xf]
        %v2963 = vld [vmem:[%s2958 + $0x10] sm:$0xf]
        %v2964 = vld [vmem:[%s2958 + $0x14] sm:$0xf]
        %v2965 = vld [vmem:[%s2958 + $0x18] sm:$0xf]
        %v2966 = vld [vmem:[%s2958 + $0x1c] sm:$0xf]
        %v2967 = vld [vmem:[%s2958 + $0x20] sm:$0xf]
        %v2968 = vld [vmem:[%s2958 + $0x24] sm:$0xf]
        %v2969 = vld [vmem:[%s2958 + $0x28] sm:$0xf]
        %v2970 = vld [vmem:[%s2958 + $0x2c] sm:$0xf]
        %v2971 = vld [vmem:[%s2958 + $0x30] sm:$0xf]
        %v2972 = vld [vmem:[%s2958 + $0x34] sm:$0xf]
        %v2973 = vld [vmem:[%s2958 + $0x38] sm:$0xf]
        %v2974 = vld [vmem:[%s2958 + $0x3c] sm:$0xf]
        %v2991 = vunpack.c.l.b16 %v2959
        %v2992 = vunpack.c.l.b16 %v2960
        %v2993 = vunpack.c.l.b16 %v2961
        %v2994 = vunpack.c.l.b16 %v2962
        %v2995 = vunpack.c.l.b16 %v2963
        %v2996 = vunpack.c.l.b16 %v2964
        %v2997 = vunpack.c.l.b16 %v2965
        %v2998 = vunpack.c.l.b16 %v2966
        %v2999 = vunpack.c.l.b16 %v2967
        %v3000 = vunpack.c.l.b16 %v2968
        %v3001 = vunpack.c.l.b16 %v2969
        %v3002 = vunpack.c.l.b16 %v2970
        %v3003 = vunpack.c.l.b16 %v2971
        %v3004 = vunpack.c.l.b16 %v2972
        %v3005 = vunpack.c.l.b16 %v2973
        %v3006 = vunpack.c.l.b16 %v2974
        %v3007 = vpack.c.b16 %v2992, %v2991
        %v3008 = vpack.c.b16 %v2994, %v2993
        %v3009 = vpack.c.b16 %v2996, %v2995
        %v3010 = vpack.c.b16 %v2998, %v2997
        %v3011 = vpack.c.b16 %v3000, %v2999
        %v3012 = vpack.c.b16 %v3002, %v3001
        %v3013 = vpack.c.b16 %v3004, %v3003
        %v3014 = vpack.c.b16 %v3006, %v3005
        %3023 = vmatprep.subr.bf16.mxu0 0
        %3024 = vmatpush1.bf16.msra.mxu0 %v3007
        %3025 = vmatprep.subr.bf16.mxu0 0
        %3026 = vmatpush1.bf16.msra.mxu0 %v3008
        %3027 = vmatprep.subr.bf16.mxu0 0
        %3028 = vmatpush1.bf16.msra.mxu0 %v3009
        %3029 = vmatprep.subr.bf16.mxu0 0
        %3030 = vmatpush1.bf16.msra.mxu0 %v3010
        %3031 = vmatprep.subr.bf16.mxu0 0
        %3032 = vmatpush1.bf16.msra.mxu0 %v3011
        %3033 = vmatprep.subr.bf16.mxu0 0
        %3034 = vmatpush1.bf16.msra.mxu0 %v3012
        %3035 = vmatprep.subr.bf16.mxu0 0
        %3036 = vmatpush1.bf16.msra.mxu0 %v3013
        %3037 = vmatprep.subr.bf16.mxu0 0
        %3038 = vmatpush1.bf16.msra.mxu0 %v3014
        %3039 = vmatprep.subr.bf16.mxu0 0
        %3040 = vmatpush1.bf16.msra.mxu0 0
        %3041 = vmatprep.subr.bf16.mxu0 0
        %3042 = vmatpush1.bf16.msra.mxu0 0
        %3043 = vmatprep.subr.bf16.mxu0 0
        %3044 = vmatpush1.bf16.msra.mxu0 0
        %3045 = vmatprep.subr.bf16.mxu0 0
        %3046 = vmatpush1.bf16.msra.mxu0 0
        %3047 = vmatprep.subr.bf16.mxu0 0
        %3048 = vmatpush1.bf16.msra.mxu0 0
        %3049 = vmatprep.subr.bf16.mxu0 0
        %3050 = vmatpush1.bf16.msra.mxu0 0
        %3051 = vmatprep.subr.bf16.mxu0 0
        %3052 = vmatpush1.bf16.msra.mxu0 0
        %3053 = vmatprep.subr.bf16.mxu0 0
        %3054 = vmatpush1.bf16.msra.mxu0 0
        %3055 = vmatprep.mubr.bf16.mxu0 0
        %3056 = vmatmul.mubr.bf16.gmra.mrb[0].mxu0 %v2954
        %v3057 = vpop.f32.mrb[0].mxu0
        %v3058 = vadd.f32 0.0, %v3057
        %v3059 = vpop.f32.mrb[0].mxu0
        %v3060 = vpop.f32.mrb[0].mxu0
        %v3061 = vadd.f32 0.0, %v3060
        %v3062 = vpop.f32.mrb[0].mxu0
        %3063 = vmatprep.mubr.bf16.mxu0 0
        %3064 = vmatmul.mubr.bf16.gmra.mrb[0].mxu0 %v2955
        %v3065 = vpop.f32.mrb[0].mxu0
        %v3066 = vadd.f32 0.0, %v3065
        %v3067 = vpop.f32.mrb[0].mxu0
        %v3068 = vpop.f32.mrb[0].mxu0
        %v3069 = vadd.f32 0.0, %v3068
        %v3070 = vpop.f32.mrb[0].mxu0
        %3071 = vmatprep.mubr.bf16.mxu0 0
        %3072 = vmatmul.mubr.bf16.gmra.mrb[0].mxu0 %v2956
        %v3073 = vpop.f32.mrb[0].mxu0
        %v3074 = vadd.f32 0.0, %v3073
        %v3075 = vpop.f32.mrb[0].mxu0
        %v3076 = vpop.f32.mrb[0].mxu0
        %v3077 = vadd.f32 0.0, %v3076
        %v3078 = vpop.f32.mrb[0].mxu0
        %3079 = vmatprep.mubr.bf16.mxu0 0
        %3080 = vmatmul.mubr.bf16.gmra.mrb[0].mxu0 %v2957
        %v3081 = vpop.f32.mrb[0].mxu0
        %v3082 = vadd.f32 0.0, %v3081
        %v3083 = vpop.f32.mrb[0].mxu0
        %v3084 = vpop.f32.mrb[0].mxu0
        %v3085 = vadd.f32 0.0, %v3084
        %v3086 = vpop.f32.mrb[0].mxu0
        %3087 = vdwg.mxu0
        %v3088 = vadd.f32 %v2938, %v3058
        %v3089 = vadd.f32 %v2939, %v3061
        %v3090 = vadd.f32 %v2940, %v3066
        %v3091 = vadd.f32 %v2941, %v3069
        %v3092 = vadd.f32 %v2942, %v3074
        %v3093 = vadd.f32 %v2943, %v3077
        %v3094 = vadd.f32 %v2944, %v3082
        %v3095 = vadd.f32 %v2945, %v3085
        %v3096 = vsel %vm1708, %v2201, 0.0
        %v3097 = vsel %vm1709, %v2200, 0.0
        %v3098 = vsel %vm1710, %v2199, 0.0
        %v3099 = vsel %vm1711, %v2198, 0.0
        %v3100 = vsel %vm1712, %v2197, 0.0
        %v3101 = vsel %vm1713, %v2196, 0.0
        %v3102 = vsel %vm1714, %v2203, 0.0
        %v3103 = vsel %vm1715, %v2202, 0.0
        %v3104 = vpack.c.bf16 %v3097, %v3096
        %v3105 = vpack.c.bf16 %v3099, %v3098
        %v3106 = vpack.c.bf16 %v3101, %v3100
        %v3107 = vpack.c.bf16 %v3103, %v3102
        %s3108 = scalar_lea.vmem %s5, 512
        %v3109 = vld [vmem:[%s3108] sm:$0xf]
        %v3110 = vld [vmem:[%s3108 + $0x4] sm:$0xf]
        %v3111 = vld [vmem:[%s3108 + $0x8] sm:$0xf]
        %v3112 = vld [vmem:[%s3108 + $0xc] sm:$0xf]
        %v3113 = vld [vmem:[%s3108 + $0x10] sm:$0xf]
        %v3114 = vld [vmem:[%s3108 + $0x14] sm:$0xf]
        %v3115 = vld [vmem:[%s3108 + $0x18] sm:$0xf]
        %v3116 = vld [vmem:[%s3108 + $0x1c] sm:$0xf]
        %v3117 = vld [vmem:[%s3108 + $0x20] sm:$0xf]
        %v3118 = vld [vmem:[%s3108 + $0x24] sm:$0xf]
        %v3119 = vld [vmem:[%s3108 + $0x28] sm:$0xf]
        %v3120 = vld [vmem:[%s3108 + $0x2c] sm:$0xf]
        %v3121 = vld [vmem:[%s3108 + $0x30] sm:$0xf]
        %v3122 = vld [vmem:[%s3108 + $0x34] sm:$0xf]
        %v3123 = vld [vmem:[%s3108 + $0x38] sm:$0xf]
        %v3124 = vld [vmem:[%s3108 + $0x3c] sm:$0xf]
        %v3141 = vunpack.c.l.b16 %v3109
        %v3142 = vunpack.c.l.b16 %v3110
        %v3143 = vunpack.c.l.b16 %v3111
        %v3144 = vunpack.c.l.b16 %v3112
        %v3145 = vunpack.c.l.b16 %v3113
        %v3146 = vunpack.c.l.b16 %v3114
        %v3147 = vunpack.c.l.b16 %v3115
        %v3148 = vunpack.c.l.b16 %v3116
        %v3149 = vunpack.c.l.b16 %v3117
        %v3150 = vunpack.c.l.b16 %v3118
        %v3151 = vunpack.c.l.b16 %v3119
        %v3152 = vunpack.c.l.b16 %v3120
        %v3153 = vunpack.c.l.b16 %v3121
        %v3154 = vunpack.c.l.b16 %v3122
        %v3155 = vunpack.c.l.b16 %v3123
        %v3156 = vunpack.c.l.b16 %v3124
        %v3157 = vpack.c.b16 %v3142, %v3141
        %v3158 = vpack.c.b16 %v3144, %v3143
        %v3159 = vpack.c.b16 %v3146, %v3145
        %v3160 = vpack.c.b16 %v3148, %v3147
        %v3161 = vpack.c.b16 %v3150, %v3149
        %v3162 = vpack.c.b16 %v3152, %v3151
        %v3163 = vpack.c.b16 %v3154, %v3153
        %v3164 = vpack.c.b16 %v3156, %v3155
        %3173 = vmatprep.subr.bf16.mxu0 0
        %3174 = vmatpush1.bf16.msra.mxu0 %v3157
        %3175 = vmatprep.subr.bf16.mxu0 0
        %3176 = vmatpush1.bf16.msra.mxu0 %v3158
        %3177 = vmatprep.subr.bf16.mxu0 0
        %3178 = vmatpush1.bf16.msra.mxu0 %v3159
        %3179 = vmatprep.subr.bf16.mxu0 0
        %3180 = vmatpush1.bf16.msra.mxu0 %v3160
        %3181 = vmatprep.subr.bf16.mxu0 0
        %3182 = vmatpush1.bf16.msra.mxu0 %v3161
        %3183 = vmatprep.subr.bf16.mxu0 0
        %3184 = vmatpush1.bf16.msra.mxu0 %v3162
        %3185 = vmatprep.subr.bf16.mxu0 0
        %3186 = vmatpush1.bf16.msra.mxu0 %v3163
        %3187 = vmatprep.subr.bf16.mxu0 0
        %3188 = vmatpush1.bf16.msra.mxu0 %v3164
        %3189 = vmatprep.subr.bf16.mxu0 0
        %3190 = vmatpush1.bf16.msra.mxu0 0
        %3191 = vmatprep.subr.bf16.mxu0 0
        %3192 = vmatpush1.bf16.msra.mxu0 0
        %3193 = vmatprep.subr.bf16.mxu0 0
        %3194 = vmatpush1.bf16.msra.mxu0 0
        %3195 = vmatprep.subr.bf16.mxu0 0
        %3196 = vmatpush1.bf16.msra.mxu0 0
        %3197 = vmatprep.subr.bf16.mxu0 0
        %3198 = vmatpush1.bf16.msra.mxu0 0
        %3199 = vmatprep.subr.bf16.mxu0 0
        %3200 = vmatpush1.bf16.msra.mxu0 0
        %3201 = vmatprep.subr.bf16.mxu0 0
        %3202 = vmatpush1.bf16.msra.mxu0 0
        %3203 = vmatprep.subr.bf16.mxu0 0
        %3204 = vmatpush1.bf16.msra.mxu0 0
        %3205 = vmatprep.mubr.bf16.mxu0 0
        %3206 = vmatmul.mubr.bf16.gmra.mrb[0].mxu0 %v3104
        %v3207 = vpop.f32.mrb[0].mxu0
        %v3208 = vadd.f32 0.0, %v3207
        %v3209 = vpop.f32.mrb[0].mxu0
        %v3210 = vpop.f32.mrb[0].mxu0
        %v3211 = vadd.f32 0.0, %v3210
        %v3212 = vpop.f32.mrb[0].mxu0
        %3213 = vmatprep.mubr.bf16.mxu0 0
        %3214 = vmatmul.mubr.bf16.gmra.mrb[0].mxu0 %v3105
        %v3215 = vpop.f32.mrb[0].mxu0
        %v3216 = vadd.f32 0.0, %v3215
        %v3217 = vpop.f32.mrb[0].mxu0
        %v3218 = vpop.f32.mrb[0].mxu0
        %v3219 = vadd.f32 0.0, %v3218
        %v3220 = vpop.f32.mrb[0].mxu0
        %3221 = vmatprep.mubr.bf16.mxu0 0
        %3222 = vmatmul.mubr.bf16.gmra.mrb[0].mxu0 %v3106
        %v3223 = vpop.f32.mrb[0].mxu0
        %v3224 = vadd.f32 0.0, %v3223
        %v3225 = vpop.f32.mrb[0].mxu0
        %v3226 = vpop.f32.mrb[0].mxu0
        %v3227 = vadd.f32 0.0, %v3226
        %v3228 = vpop.f32.mrb[0].mxu0
        %3229 = vmatprep.mubr.bf16.mxu0 0
        %3230 = vmatmul.mubr.bf16.gmra.mrb[0].mxu0 %v3107
        %v3231 = vpop.f32.mrb[0].mxu0
        %v3232 = vadd.f32 0.0, %v3231
        %v3233 = vpop.f32.mrb[0].mxu0
        %v3234 = vpop.f32.mrb[0].mxu0
        %v3235 = vadd.f32 0.0, %v3234
        %v3236 = vpop.f32.mrb[0].mxu0
        %3237 = vdwg.mxu0
        %v3238 = vadd.f32 %v3088, %v3208
        %v3239 = vadd.f32 %v3089, %v3211
        %v3240 = vadd.f32 %v3090, %v3216
        %v3241 = vadd.f32 %v3091, %v3219
        %v3242 = vadd.f32 %v3092, %v3224
        %v3243 = vadd.f32 %v3093, %v3227
        %v3244 = vadd.f32 %v3094, %v3232
        %v3245 = vadd.f32 %v3095, %v3235
        %v3246 = vld [vmem:[%s6] sm:$0x1]
        %v3248 = vlaneseq
        %v3249 = vshrl.u32 %v3248, 7
        %v3250 = vsub.s32 0, %v3249
        %v3251 = vrot.slane %v3246, %v3250
        %v3253 = vadd.f32 %v3238, %v3251
        %v3254 = vadd.f32 %v3239, %v3251
        %v3255 = vadd.f32 %v3240, %v3251
        %v3256 = vadd.f32 %v3241, %v3251
        %v3257 = vadd.f32 %v3242, %v3251
        %v3258 = vadd.f32 %v3243, %v3251
        %v3259 = vadd.f32 %v3244, %v3251
        %v3260 = vadd.f32 %v3245, %v3251
        %v3261 = vmax.f32 %v3253, 0.0
        %v3262 = vmax.f32 %v3254, 0.0
        %v3263 = vmax.f32 %v3255, 0.0
        %v3264 = vmax.f32 %v3256, 0.0
        %v3265 = vmax.f32 %v3257, 0.0
        %v3266 = vmax.f32 %v3258, 0.0
        %v3267 = vmax.f32 %v3259, 0.0
        %v3268 = vmax.f32 %v3260, 0.0
        %3269 = vst [vmem:[%s272] sm:$0xff] %v3261
        %3270 = vst [vmem:[%s272 + $0x8] sm:$0xff] %v3262
        %3271 = vst [vmem:[%s272 + $0x10] sm:$0xff] %v3263
        %3272 = vst [vmem:[%s272 + $0x18] sm:$0xff] %v3264
        %3273 = vst [vmem:[%s272 + $0x20] sm:$0xff] %v3265
        %3274 = vst [vmem:[%s272 + $0x28] sm:$0xff] %v3266
        %3275 = vst [vmem:[%s272 + $0x30] sm:$0xff] %v3267
        %3276 = vst [vmem:[%s272 + $0x38] sm:$0xff] %v3268
        %s3277 = sand.u32 %s181, 1
        %s3278 = scalar_lea.sflag [#allocation3], %s3277
        %s3279 = sand.u32 %s181, 1
        %s3280 = smul.addr %s3279, 64
        %s3281 = scalar_lea.vmem [#allocation2], %s3280
        // Predicated region
        $region49: #{cnn_forward.1} parent=47 // pred_check
          %p3282 = pneg %p191
        $region50: #{cnn_forward.1} parent=47 // pred_check_branch
          %3284 = sbr.rel (%p3282) target = $region52
        $region51: #{cnn_forward.1} parent=47 // pred_region
          %s3285 = smul.u32 8, %s21
          %s3287 = ssub.s32 1024, 1024
          %3288 = vsyncadd %s3278, %s3287
          %s3289 = smul.addr %s3285, 128
          %s3290 = scalar_lea.hbm %s7, %s3289
          %s3291 = sshll.u32 %s3281, 4
          %s3292 = int_to_ptr.vmem [resolvable:$true] %s3291
          %3297 = dma.vmem_to_hbm [thread:$0]  %s3292, 1024, %s3290, %s3278, 128, 128, 8
        $region52: #{cnn_forward.1} parent=47 // pred_fallthru
          _
      $region48: #{cnn_forward.1} parent=5 // pred_fallthru
        _
      %p3298 = scmp.le.s32.totalorder 2, %s16
      // Predicated region
      $region53: #{cnn_forward.1} parent=5 // pred_check
        %p3299 = pneg %p3298
      $region54: #{cnn_forward.1} parent=5 // pred_check_branch
        %3301 = sbr.rel (%p3299) target = $region56
      $region55: #{cnn_forward.1} parent=5 // pred_region
        %s3302 = ssub.s32 %s16, 2
        // Predicated region
        $region57: #{cnn_forward.1} parent=55 // pred_check
          %p3303 = pneg %p197
        $region58: #{cnn_forward.1} parent=55 // pred_check_branch
          %3305 = sbr.rel (%p3303) target = $region60
        $region59: #{cnn_forward.1} parent=55 // pred_region
          %s3306 = sand.u32 %s182, 1
          %s3307 = scalar_lea.sflag [#allocation3], %s3306
          %s3308 = sand.u32 %s182, 1
          %s3309 = smul.addr %s3308, 64
          %s3310 = scalar_lea.vmem [#allocation2], %s3309
          %3311 = dma.done %s3307, 1024
        $region60: #{cnn_forward.1} parent=55 // pred_fallthru
          _
      $region56: #{cnn_forward.1} parent=5 // pred_fallthru
        _
    $region6: #{cnn_forward.1} parent=1 // loop_footer
      %s20 = sadd.s32 1, %s16
    $region7: #{cnn_forward.1} parent=1 // loop_footer_branch
      %15 = sbr.rel target = $region3
    $region8: #{cnn_forward.1} parent=1 // loop_exit
      _
    %3312 = vsyncpa [#allocation3], 1
    %s3313 = scalar_lea.sflag [#allocation3], 1
    %3314 = vsyncpa %s3313, 1

</llo_original>
